<compile_context>
chip_gen: v6e
topology: v6e:2x2x1
jax: 0.10.0
libtpu: 0.0.40
codegen_flags: <defaults>
</compile_context>

<pallas_src>
import functools

import jax
import jax.numpy as jnp
from jax.experimental import pallas as pl
from jax.experimental.pallas import tpu as pltpu


# ---------------------------------------------------------------------------
# Pallas kernels
# ---------------------------------------------------------------------------

def _linear_kernel(x_ref, w_ref, b_ref, o_ref, *, relu):
    """One (TM, K) row-tile of  y = act(x @ W + b).  f32 accumulate."""
    y = jnp.dot(x_ref[...], w_ref[...], preferred_element_type=jnp.float32)
    y = y + b_ref[...]
    if relu:
        y = jnp.maximum(y, 0.0)
    o_ref[...] = y.astype(o_ref.dtype)


def _conv_pool_relu_kernel(a_ref, b_ref, c_ref, d_ref, w_ref, bias_ref, o_ref):
    """Fused Conv2d + AvgPool2d(2,2) + ReLU.

    The four 2x2-window phases arrive as separate (TM, K) im2col slabs; four
    matmuls against the same resident weight tile are summed in f32, averaged,
    biased and ReLU'd.  avg(conv)+bias == avg(conv+bias), so this matches the
    PyTorch Conv -> AvgPool -> ReLU ordering exactly."""
    w = w_ref[...]
    acc = jnp.dot(a_ref[...], w, preferred_element_type=jnp.float32)
    acc = acc + jnp.dot(b_ref[...], w, preferred_element_type=jnp.float32)
    acc = acc + jnp.dot(c_ref[...], w, preferred_element_type=jnp.float32)
    acc = acc + jnp.dot(d_ref[...], w, preferred_element_type=jnp.float32)
    y = acc * 0.25 + bias_ref[...]
    o_ref[...] = jnp.maximum(y, 0.0).astype(o_ref.dtype)


def _head_kernel(lm_ref, fle_ref, fre_ref,
                 w1_ref, b1_ref, w2_ref, b2_ref, w3_ref, b3_ref,
                 wle_ref, wre_ref, wlm_ref, bf_ref, o_ref):
    """Fused landmark MLP (Linear+ReLU, Linear+ReLU, Linear) + fc2 (Linear+ReLU).

    fc2's concat([fleye, freye, fl]) @ Wf is computed as a split-weight sum of
    three matmuls, so no concat / HBM round trip is needed."""
    h = jnp.dot(lm_ref[...], w1_ref[...], preferred_element_type=jnp.float32)
    h = jnp.maximum(h + b1_ref[...], 0.0)
    h = jnp.dot(h, w2_ref[...], preferred_element_type=jnp.float32)
    h = jnp.maximum(h + b2_ref[...], 0.0)
    fl = jnp.dot(h, w3_ref[...], preferred_element_type=jnp.float32) + b3_ref[...]

    y = jnp.dot(fle_ref[...], wle_ref[...], preferred_element_type=jnp.float32)
    y = y + jnp.dot(fre_ref[...], wre_ref[...], preferred_element_type=jnp.float32)
    y = y + jnp.dot(fl, wlm_ref[...], preferred_element_type=jnp.float32)
    y = y + bf_ref[...]
    o_ref[...] = jnp.maximum(y, 0.0).astype(o_ref.dtype)


# ---------------------------------------------------------------------------
# Wrappers (layout plumbing only; all arithmetic happens in the kernels)
# ---------------------------------------------------------------------------

def _round_up(x, m):
    return (x + m - 1) // m * m


def _row_tile(m):
    """<=2 grid steps: big tiles amortize the ~0.35us per-step overhead on the
    serial v5e/v6e grid, and a 2-step 'parallel' axis feeds both v7x cores on
    the only large matmul (conv1)."""
    nblk = 2 if m >= 1024 else 1
    tm = _round_up(-(-m // nblk), 8)
    return tm, tm * nblk


def _im2col_nhwc(x, kh, kw, stride, pad):
    """Patch matrix in NHWC; K ordered (kh, kw, ci) to match the weight
    transform w.transpose(2, 3, 1, 0).reshape(K, Cout)."""
    B, H, W, C = x.shape
    OH = (H + 2 * pad - kh) // stride + 1
    OW = (W + 2 * pad - kw) // stride + 1
    xp = jnp.pad(x, ((0, 0), (pad, pad), (pad, pad), (0, 0)))
    taps = [xp[:, i:i + stride * (OH - 1) + 1:stride,
                  j:j + stride * (OW - 1) + 1:stride, :]
            for i in range(kh) for j in range(kw)]
    cols = jnp.stack(taps, axis=3)                      # (B, OH, OW, kh*kw, C)
    return cols.reshape(B, OH, OW, kh * kw * C), OH, OW


def linear_pallas(x, w_t, b, *, relu, out_dtype=jnp.float32):
    """y = act(x @ w_t + b).  Row axis tiled (grid, 'parallel'); weights/bias
    stay VMEM-resident via constant index_map."""
    M, K = x.shape
    N = w_t.shape[1]
    TM, Mp = _row_tile(M)
    if Mp != M:
        x = jnp.pad(x, ((0, Mp - M), (0, 0)))            # zero rows, sliced off
    grid = (Mp // TM,)

    out = pl.pallas_call(
        functools.partial(_linear_kernel, relu=relu),
        out_shape=jax.ShapeDtypeStruct((Mp, N), out_dtype),
        grid_spec=pltpu.PrefetchScalarGridSpec(
            num_scalar_prefetch=0,
            grid=grid,
            in_specs=[
                pl.BlockSpec((TM, K), lambda i: (i, 0)),   # streamed row tiles
                pl.BlockSpec((K, N), lambda i: (0, 0)),    # resident weights
                pl.BlockSpec((1, N), lambda i: (0, 0)),    # resident bias
            ],
            out_specs=pl.BlockSpec((TM, N), lambda i: (i, 0)),
        ),
        compiler_params=pltpu.CompilerParams(
            dimension_semantics=("parallel",)),
        cost_estimate=pl.CostEstimate(
            flops=2 * Mp * K * N, transcendentals=0,
            bytes_accessed=x.dtype.itemsize * Mp * K
                           + w_t.dtype.itemsize * K * N + 4 * Mp * N),
    )(x, w_t, b.reshape(1, N))
    return out[:M]


def conv_pool_relu_pallas(x_nhwc, w, b, *, stride, pad):
    """Conv2d (OIHW weights) + AvgPool2d(2,2) + ReLU, fused.  NHWC in/out."""
    B = x_nhwc.shape[0]
    Cout, Cin, KH, KW = w.shape
    cols, OH, OW = _im2col_nhwc(x_nhwc, KH, KW, stride, pad)
    POH, POW = OH // 2, OW // 2
    K = KH * KW * Cin
    M = B * POH * POW

    # bf16 MXU inputs (halves streamed DMA); accumulate/epilogue stay f32.
    phases = [cols[:, di:2 * POH:2, dj:2 * POW:2, :]
              .reshape(M, K).astype(jnp.bfloat16)
              for di in (0, 1) for dj in (0, 1)]
    w_t = w.transpose(2, 3, 1, 0).reshape(K, Cout).astype(jnp.bfloat16)
    b2 = b.reshape(1, Cout).astype(jnp.float32)

    TM, Mp = _row_tile(M)
    if Mp != M:
        phases = [jnp.pad(p, ((0, Mp - M), (0, 0))) for p in phases]
    grid = (Mp // TM,)

    out = pl.pallas_call(
        _conv_pool_relu_kernel,
        out_shape=jax.ShapeDtypeStruct((Mp, Cout), jnp.float32),
        grid_spec=pltpu.PrefetchScalarGridSpec(
            num_scalar_prefetch=0,
            grid=grid,
            in_specs=[pl.BlockSpec((TM, K), lambda i: (i, 0))] * 4
                     + [pl.BlockSpec((K, Cout), lambda i: (0, 0)),
                        pl.BlockSpec((1, Cout), lambda i: (0, 0))],
            out_specs=pl.BlockSpec((TM, Cout), lambda i: (i, 0)),
        ),
        compiler_params=pltpu.CompilerParams(
            dimension_semantics=("parallel",)),
        cost_estimate=pl.CostEstimate(
            flops=8 * Mp * K * Cout, transcendentals=0,
            bytes_accessed=2 * (4 * Mp * K + K * Cout) + 4 * Mp * Cout),
    )(*phases, w_t, b2)
    return out[:M].reshape(B, POH, POW, Cout)


def conv2d_pallas(x_nhwc, w, b, *, stride, pad, relu=False):
    """Plain Conv2d (no pool) via NHWC im2col + row-tiled MXU matmul."""
    B = x_nhwc.shape[0]
    Cout, Cin, KH, KW = w.shape
    cols, OH, OW = _im2col_nhwc(x_nhwc, KH, KW, stride, pad)
    K = KH * KW * Cin
    cols = cols.reshape(B * OH * OW, K).astype(jnp.bfloat16)
    w_t = w.transpose(2, 3, 1, 0).reshape(K, Cout).astype(jnp.bfloat16)
    y = linear_pallas(cols, w_t, b.astype(jnp.float32), relu=relu)
    return y.reshape(B, OH, OW, Cout)


def head_pallas(landmark, fleye, freye, params):
    """Fused landmark MLP + fc2 (single pallas_call, all params resident)."""
    N = landmark.shape[0]
    Np = _round_up(N, 8)

    def padrows(a):
        return jnp.pad(a, ((0, Np - N), (0, 0))) if Np != N else a

    lm = padrows(landmark.astype(jnp.float32))
    fle = padrows(fleye.astype(jnp.float32))
    fre = padrows(freye.astype(jnp.float32))

    w1, b1 = params["lm1_w"].T, params["lm1_b"].reshape(1, -1)
    w2, b2 = params["lm2_w"].T, params["lm2_b"].reshape(1, -1)
    w3, b3 = params["lm3_w"].T, params["lm3_b"].reshape(1, -1)
    wf, bf = params["fc2_w"].T, params["fc2_b"].reshape(1, -1)
    nle, nre = fleye.shape[1], freye.shape[1]
    wle, wre, wlm = wf[:nle], wf[nle:nle + nre], wf[nle + nre:]
    nout = wf.shape[1]

    args = (lm, fle, fre, w1, b1, w2, b2, w3, b3, wle, wre, wlm, bf)
    in_specs = [pl.BlockSpec(a.shape, lambda i: (0, 0)) for a in args]

    out = pl.pallas_call(
        _head_kernel,
        out_shape=jax.ShapeDtypeStruct((Np, nout), jnp.float32),
        grid_spec=pltpu.PrefetchScalarGridSpec(
            num_scalar_prefetch=0,
            grid=(1,),
            in_specs=in_specs,
            out_specs=pl.BlockSpec((Np, nout), lambda i: (0, 0)),
        ),
        compiler_params=pltpu.CompilerParams(
            dimension_semantics=("arbitrary",)),
    )(*args)
    return out[:N]


def sage_backbone_forward(params, left_eye, right_eye, landmark):
    """Pallas implementation of SAGE_Backbone.forward (NCHW f32 inputs)."""
    # torch.flip(left_eye, [3]); both eyes run through the shared conv stack
    # as one batch of 2N images.  Single NCHW->NHWC layout change up front.
    eyes = jnp.concatenate([jnp.flip(left_eye, axis=3), right_eye], axis=0)
    x = eyes.transpose(0, 2, 3, 1)                       # NHWC

    x = conv_pool_relu_pallas(x, params["conv1_w"], params["conv1_b"],
                              stride=2, pad=3)
    x = conv_pool_relu_pallas(x, params["conv2_w"], params["conv2_b"],
                              stride=2, pad=2)
    x = conv2d_pallas(x, params["conv3_w"], params["conv3_b"],
                      stride=2, pad=1, relu=False)       # NHWC (2N, 2, 2, 32)

    n = left_eye.shape[0]
    # torch.flatten on NCHW -> reorder the tiny (2N, 2, 2, 32) feature tensor.
    feat = x.transpose(0, 3, 1, 2).reshape(x.shape[0], -1)
    fleye, freye = feat[:n], feat[n:]

    return head_pallas(landmark, fleye, freye, params)


# ---------------------------------------------------------------------------
# Pure-JAX reference (independent of the kernel path)
# ---------------------------------------------------------------------------

def _ref_forward(params, left_eye, right_eye, landmark):
    HI = jax.lax.Precision.HIGHEST

    def conv(x, w, b, stride, pad):
        y = jax.lax.conv_general_dilated(
            x, w, window_strides=(stride, stride),
            padding=((pad, pad), (pad, pad)),
            dimension_numbers=("NCHW", "OIHW", "NCHW"),
            precision=HI)
        return y + b.reshape(1, -1, 1, 1)

    def pool_relu(x):
        B, C, H, W = x.shape
        p = x.reshape(B, C, H // 2, 2, W // 2, 2).mean(axis=(3, 5))
        return jnp.maximum(p, 0.0)

    def lin(x, w, b, relu):
        y = jnp.matmul(x, w.T, precision=HI) + b
        return jnp.maximum(y, 0.0) if relu else y

    def conv_stack(x):
        x = conv(x, params["conv1_w"], params["conv1_b"], 2, 3)
        x = pool_relu(x)
        x = conv(x, params["conv2_w"], params["conv2_b"], 2, 2)
        x = pool_relu(x)
        x = conv(x, params["conv3_w"], params["conv3_b"], 2, 1)
        return x.reshape(x.shape[0], -1)

    fleye = conv_stack(jnp.flip(left_eye, axis=3))
    freye = conv_stack(right_eye)
    fl = lin(landmark, params["lm1_w"], params["lm1_b"], True)
    fl = lin(fl, params["lm2_w"], params["lm2_b"], True)
    fl = lin(fl, params["lm3_w"], params["lm3_b"], False)
    f = jnp.concatenate([fleye, freye, fl], axis=1)
    return lin(f, params["fc2_w"], params["fc2_b"], True)


if __name__ == "__main__":
    key = jax.random.PRNGKey(0)
    keys = jax.random.split(key, 20)

    N = 2        # batch
    IMG = 64     # 64x64 eye crops -> conv stack ends at 32ch x 2 x 2 (fc2 expects 272)

    def u(k, shape, fan_in):
        lim = 1.0 / jnp.sqrt(jnp.float32(fan_in))
        return jax.random.uniform(k, shape, jnp.float32, -lim, lim)

    params = {
        "conv1_w": u(keys[0], (32, 3, 7, 7), 3 * 7 * 7),
        "conv1_b": u(keys[1], (32,), 3 * 7 * 7),
        "conv2_w": u(keys[2], (32, 32, 5, 5), 32 * 5 * 5),
        "conv2_b": u(keys[3], (32,), 32 * 5 * 5),
        "conv3_w": u(keys[4], (32, 32, 3, 3), 32 * 3 * 3),
        "conv3_b": u(keys[5], (32,), 32 * 3 * 3),
        "lm1_w": u(keys[6], (100, 8), 8),
        "lm1_b": u(keys[7], (100,), 8),
        "lm2_w": u(keys[8], (16, 100), 100),
        "lm2_b": u(keys[9], (16,), 100),
        "lm3_w": u(keys[10], (16, 16), 16),
        "lm3_b": u(keys[11], (16,), 16),
        "fc2_w": u(keys[12], (16, 272), 272),
        "fc2_b": u(keys[13], (16,), 272),
    }

    left_eye = jax.random.normal(keys[14], (N, 3, IMG, IMG), jnp.float32)
    right_eye = jax.random.normal(keys[15], (N, 3, IMG, IMG), jnp.float32)
    landmark = jax.random.normal(keys[16], (N, 8), jnp.float32)

    out = sage_backbone_forward(params, left_eye, right_eye, landmark)
    out = jax.block_until_ready(out)

    ref = _ref_forward(params, left_eye, right_eye, landmark)
    assert out.shape == (N, 16), out.shape
    err = float(jnp.max(jnp.abs(out - ref)))
    assert err < 2e-2, f"mismatch vs reference, max abs err = {err}"

    print("KERNEL_OK")
</pallas_src>

<mosaic_0001>
module attributes {stable_mosaic.version = 11 : i64} {
  func.func @_conv_pool_relu_kernel(%arg0: i32, %arg1: memref<512x147xbf16, #tpu.memory_space<vmem>>, %arg2: memref<512x147xbf16, #tpu.memory_space<vmem>>, %arg3: memref<512x147xbf16, #tpu.memory_space<vmem>>, %arg4: memref<512x147xbf16, #tpu.memory_space<vmem>>, %arg5: memref<147x32xbf16, #tpu.memory_space<vmem>>, %arg6: memref<1x32xf32, #tpu.memory_space<vmem>>, %arg7: memref<512x32xf32, #tpu.memory_space<vmem>>) attributes {dimension_semantics = [#tpu.dimension_semantics<parallel>], iteration_bounds = array<i64: 2>, scalar_prefetch = 0 : i64, scratch_operands = 0 : i64, tpu.core_type = #tpu.core_type<tc>, window_params = [{transform_indices = @transform_0, window_bounds = array<i64: 512, 147>}, {transform_indices = @transform_1, window_bounds = array<i64: 512, 147>}, {transform_indices = @transform_2, window_bounds = array<i64: 512, 147>}, {transform_indices = @transform_3, window_bounds = array<i64: 512, 147>}, {pipeline_mode = #tpu.pipeline_mode<synchronous>, transform_indices = @transform_4, window_bounds = array<i64: 147, 32>}, {pipeline_mode = #tpu.pipeline_mode<synchronous>, transform_indices = @transform_5, window_bounds = array<i64: 1, 32>}, {transform_indices = @transform_6, window_bounds = array<i64: 512, 32>}]} {
    %c0 = arith.constant 0 : index
    %c0_0 = arith.constant 0 : index
    %0 = vector.load %arg5[%c0, %c0_0] : memref<147x32xbf16, #tpu.memory_space<vmem>>, vector<147x32xbf16>
    %c0_1 = arith.constant 0 : index
    %c0_2 = arith.constant 0 : index
    %1 = vector.load %arg1[%c0_1, %c0_2] : memref<512x147xbf16, #tpu.memory_space<vmem>>, vector<512x147xbf16>
    %cst = arith.constant dense<0.000000e+00> : vector<512x32xf32>
    %2 = tpu.matmul %1, %0, %cst {dimension_numbers = #tpu.dot_dimension_numbers<[1], [0], [0], [1], [0, 0, 1, 1], [], []>} : vector<512x147xbf16>, vector<147x32xbf16>, vector<512x32xf32> -> vector<512x32xf32>
    %c0_3 = arith.constant 0 : index
    %c0_4 = arith.constant 0 : index
    %3 = vector.load %arg2[%c0_3, %c0_4] : memref<512x147xbf16, #tpu.memory_space<vmem>>, vector<512x147xbf16>
    %cst_5 = arith.constant dense<0.000000e+00> : vector<512x32xf32>
    %4 = tpu.matmul %3, %0, %cst_5 {dimension_numbers = #tpu.dot_dimension_numbers<[1], [0], [0], [1], [0, 0, 1, 1], [], []>} : vector<512x147xbf16>, vector<147x32xbf16>, vector<512x32xf32> -> vector<512x32xf32>
    %5 = arith.addf %2, %4 : vector<512x32xf32>
    %c0_6 = arith.constant 0 : index
    %c0_7 = arith.constant 0 : index
    %6 = vector.load %arg3[%c0_6, %c0_7] : memref<512x147xbf16, #tpu.memory_space<vmem>>, vector<512x147xbf16>
    %cst_8 = arith.constant dense<0.000000e+00> : vector<512x32xf32>
    %7 = tpu.matmul %6, %0, %cst_8 {dimension_numbers = #tpu.dot_dimension_numbers<[1], [0], [0], [1], [0, 0, 1, 1], [], []>} : vector<512x147xbf16>, vector<147x32xbf16>, vector<512x32xf32> -> vector<512x32xf32>
    %8 = arith.addf %5, %7 : vector<512x32xf32>
    %c0_9 = arith.constant 0 : index
    %c0_10 = arith.constant 0 : index
    %9 = vector.load %arg4[%c0_9, %c0_10] : memref<512x147xbf16, #tpu.memory_space<vmem>>, vector<512x147xbf16>
    %cst_11 = arith.constant dense<0.000000e+00> : vector<512x32xf32>
    %10 = tpu.matmul %9, %0, %cst_11 {dimension_numbers = #tpu.dot_dimension_numbers<[1], [0], [0], [1], [0, 0, 1, 1], [], []>} : vector<512x147xbf16>, vector<147x32xbf16>, vector<512x32xf32> -> vector<512x32xf32>
    %11 = arith.addf %8, %10 : vector<512x32xf32>
    %cst_12 = arith.constant 2.500000e-01 : f32
    %12 = vector.broadcast %cst_12 : f32 to vector<512x32xf32>
    %13 = arith.mulf %11, %12 : vector<512x32xf32>
    %c0_13 = arith.constant 0 : index
    %c0_14 = arith.constant 0 : index
    %14 = vector.load %arg6[%c0_13, %c0_14] : memref<1x32xf32, #tpu.memory_space<vmem>>, vector<1x32xf32>
    %15 = vector.broadcast %14 : vector<1x32xf32> to vector<512x32xf32>
    %16 = arith.addf %13, %15 : vector<512x32xf32>
    %cst_15 = arith.constant 0.000000e+00 : f32
    %17 = vector.broadcast %cst_15 : f32 to vector<512x32xf32>
    %18 = arith.maximumf %16, %17 : vector<512x32xf32>
    %c0_16 = arith.constant 0 : index
    %c0_17 = arith.constant 0 : index
    %19 = vector.load %arg7[%c0_16, %c0_17] : memref<512x32xf32, #tpu.memory_space<vmem>>, vector<512x32xf32>
    tpu.vector_store %arg7[%c0_16, %c0_17], %18 {strides = array<i32>} : memref<512x32xf32, #tpu.memory_space<vmem>>, vector<512x32xf32>,
    return
  }
  func.func @transform_0(%arg0: i32) -> (i32, i32) {
    %c0_i32 = arith.constant 0 : i32
    %c0_i32_0 = arith.constant 0 : i32
    return %arg0, %c0_i32 : i32, i32
  }
  func.func @transform_1(%arg0: i32) -> (i32, i32) {
    %c0_i32 = arith.constant 0 : i32
    %c0_i32_0 = arith.constant 0 : i32
    return %arg0, %c0_i32 : i32, i32
  }
  func.func @transform_2(%arg0: i32) -> (i32, i32) {
    %c0_i32 = arith.constant 0 : i32
    %c0_i32_0 = arith.constant 0 : i32
    return %arg0, %c0_i32 : i32, i32
  }
  func.func @transform_3(%arg0: i32) -> (i32, i32) {
    %c0_i32 = arith.constant 0 : i32
    %c0_i32_0 = arith.constant 0 : i32
    return %arg0, %c0_i32 : i32, i32
  }
  func.func @transform_4(%arg0: i32) -> (i32, i32) {
    %c0_i32 = arith.constant 0 : i32
    %c0_i32_0 = arith.constant 0 : i32
    %c0_i32_1 = arith.constant 0 : i32
    return %c0_i32, %c0_i32_0 : i32, i32
  }
  func.func @transform_5(%arg0: i32) -> (i32, i32) {
    %c0_i32 = arith.constant 0 : i32
    %c0_i32_0 = arith.constant 0 : i32
    %c0_i32_1 = arith.constant 0 : i32
    return %c0_i32, %c0_i32_0 : i32, i32
  }
  func.func @transform_6(%arg0: i32) -> (i32, i32) {
    %c0_i32 = arith.constant 0 : i32
    %c0_i32_0 = arith.constant 0 : i32
    return %arg0, %c0_i32 : i32, i32
  }
}

</mosaic_0001>

<llo_original>
// kernel: tpu_custom_call.1
$region0: #{tpu_custom_call.1}
  #allocation0 [shape = 'u32[]', space=smem, size = 0x4, offset = 0x4, fixed_abs, tag = 'smem constant byte address 0x4 - core index']
  #allocation1 [shape = 'u32[144,128]{1,0:T(1,128)}', space=vmem, size = 0x12000, scoped, tag = 'internal scratch']
  %s0 = inlined_call_operand.vmem [shape: bf16[1024,147], index: 0, kind: input, shape index: {}]
  %s1 = inlined_call_operand.vmem [shape: bf16[1024,147], index: 1, kind: input, shape index: {}]
  %s2 = inlined_call_operand.vmem [shape: bf16[1024,147], index: 2, kind: input, shape index: {}]
  %s3 = inlined_call_operand.vmem [shape: bf16[1024,147], index: 3, kind: input, shape index: {}]
  %s4 = inlined_call_operand.vmem [shape: bf16[147,32], index: 4, kind: input, shape index: {}]
  %s5 = inlined_call_operand.vmem [shape: f32[1,32], index: 5, kind: input, shape index: {}]
  %s6 = inlined_call_operand.vmem [shape: f32[1024,32], index: 6, kind: output, shape index: {}]
  %s7 = sld [smem:[#allocation0]]
  $region57: #{tpu_custom_call.1} parent=0
    _
  %s9 = ssub.s32 1, %s7
  %s10 = scalar_select 0, %s9, %s7
  loop: start=0, step=1, limit=4
  $region2: #{tpu_custom_call.1} parent=0 // loop_pre_header
    _
  $region3: #{tpu_custom_call.1} parent=0 // loop_header
    %s12 = sphi 0, %s16
    %p13 = scmp.ge.s32.totalorder %s12, 4
    %s22 = sphi 0, %s24
    %s25 = sphi 0, %s22
    %s26 = sphi 0, %s25
    %s42 = sphi 0, %s26
    %s48 = sphi 0, %s50
    %s51 = sphi 0, %s48
    %s52 = sphi 0, %s51
    %s68 = sphi 0, %s52
    %s74 = sphi 0, %s76
    %s77 = sphi 0, %s74
    %s78 = sphi 0, %s77
    %s94 = sphi 0, %s78
    %s100 = sphi 0, %s102
    %s103 = sphi 0, %s100
    %s104 = sphi 0, %s103
    %s120 = sphi 0, %s104
    %s124 = sphi 0, %s124
    %s126 = sphi 0, %s124
    %s127 = sphi 0, %s126
    %s141 = sphi 0, %s127
    %s145 = sphi 0, %s145
    %s147 = sphi 0, %s145
    %s148 = sphi 0, %s147
    %s162 = sphi 0, %s148
    %s168 = sphi 0, %s170
    %s171 = sphi 0, %s168
    %s172 = sphi 0, %s171
    %s188 = sphi 0, %s172
  $region4: #{tpu_custom_call.1} parent=0 // loop_header_branch
    %15 = sbr.rel (%p13) target = $region8
  $region5: #{tpu_custom_call.1} parent=0 // loop_body
    %s17 = ssub.s32 %s12, 1
    %s18 = ssub.s32 %s12, 2
    %s19 = sadd.s32 %s12, 1
    %s20 = ssub.s32 %s12, %s19
    %p21 = scmp.eq.s32.totalorder %s20, 0
    %s23 = sadd.s32 %s22, 1
    %s24 = scalar_select %p21, %s22, %s23
    %p27 = pneg %p21
    %p28 = scmp.eq.s32.totalorder %s12, 1
    %p29 = por %p27, %p28
    %p30 = scmp.ne.s32.totalorder %s22, %s25
    %p31 = scmp.eq.s32.totalorder %s12, 0
    %p32 = por %p30, %p31
    %p33 = scmp.ne.s32.totalorder %s22, %s25
    %p34 = scmp.eq.s32.totalorder %s17, 1
    %p35 = por %p33, %p34
    %p36 = scmp.ne.s32.totalorder %s25, %s26
    %p37 = scmp.eq.s32.totalorder %s17, 0
    %p38 = por %p36, %p37
    %p39 = scmp.ne.s32.totalorder %s25, %s26
    %p40 = scmp.eq.s32.totalorder %s18, 1
    %p41 = por %p39, %p40
    %p43 = scmp.ne.s32.totalorder %s26, %s42
    %p44 = scmp.eq.s32.totalorder %s18, 0
    %p45 = por %p43, %p44
    %s46 = ssub.s32 %s12, %s19
    %p47 = scmp.eq.s32.totalorder %s46, 0
    %s49 = sadd.s32 %s48, 1
    %s50 = scalar_select %p47, %s48, %s49
    %p53 = pneg %p47
    %p54 = scmp.eq.s32.totalorder %s12, 1
    %p55 = por %p53, %p54
    %p56 = scmp.ne.s32.totalorder %s48, %s51
    %p57 = scmp.eq.s32.totalorder %s12, 0
    %p58 = por %p56, %p57
    %p59 = scmp.ne.s32.totalorder %s48, %s51
    %p60 = scmp.eq.s32.totalorder %s17, 1
    %p61 = por %p59, %p60
    %p62 = scmp.ne.s32.totalorder %s51, %s52
    %p63 = scmp.eq.s32.totalorder %s17, 0
    %p64 = por %p62, %p63
    %p65 = scmp.ne.s32.totalorder %s51, %s52
    %p66 = scmp.eq.s32.totalorder %s18, 1
    %p67 = por %p65, %p66
    %p69 = scmp.ne.s32.totalorder %s52, %s68
    %p70 = scmp.eq.s32.totalorder %s18, 0
    %p71 = por %p69, %p70
    %s72 = ssub.s32 %s12, %s19
    %p73 = scmp.eq.s32.totalorder %s72, 0
    %s75 = sadd.s32 %s74, 1
    %s76 = scalar_select %p73, %s74, %s75
    %p79 = pneg %p73
    %p80 = scmp.eq.s32.totalorder %s12, 1
    %p81 = por %p79, %p80
    %p82 = scmp.ne.s32.totalorder %s74, %s77
    %p83 = scmp.eq.s32.totalorder %s12, 0
    %p84 = por %p82, %p83
    %p85 = scmp.ne.s32.totalorder %s74, %s77
    %p86 = scmp.eq.s32.totalorder %s17, 1
    %p87 = por %p85, %p86
    %p88 = scmp.ne.s32.totalorder %s77, %s78
    %p89 = scmp.eq.s32.totalorder %s17, 0
    %p90 = por %p88, %p89
    %p91 = scmp.ne.s32.totalorder %s77, %s78
    %p92 = scmp.eq.s32.totalorder %s18, 1
    %p93 = por %p91, %p92
    %p95 = scmp.ne.s32.totalorder %s78, %s94
    %p96 = scmp.eq.s32.totalorder %s18, 0
    %p97 = por %p95, %p96
    %s98 = ssub.s32 %s12, %s19
    %p99 = scmp.eq.s32.totalorder %s98, 0
    %s101 = sadd.s32 %s100, 1
    %s102 = scalar_select %p99, %s100, %s101
    %p105 = pneg %p99
    %p106 = scmp.eq.s32.totalorder %s12, 1
    %p107 = por %p105, %p106
    %p108 = scmp.ne.s32.totalorder %s100, %s103
    %p109 = scmp.eq.s32.totalorder %s12, 0
    %p110 = por %p108, %p109
    %p111 = scmp.ne.s32.totalorder %s100, %s103
    %p112 = scmp.eq.s32.totalorder %s17, 1
    %p113 = por %p111, %p112
    %p114 = scmp.ne.s32.totalorder %s103, %s104
    %p115 = scmp.eq.s32.totalorder %s17, 0
    %p116 = por %p114, %p115
    %p117 = scmp.ne.s32.totalorder %s103, %s104
    %p118 = scmp.eq.s32.totalorder %s18, 1
    %p119 = por %p117, %p118
    %p121 = scmp.ne.s32.totalorder %s104, %s120
    %p122 = scmp.eq.s32.totalorder %s18, 0
    %p123 = por %p121, %p122
    %s125 = sadd.s32 %s124, 1
    %p128 = scmp.eq.s32.totalorder %s12, 1
    %p129 = scmp.ne.s32.totalorder %s124, %s126
    %p130 = scmp.eq.s32.totalorder %s12, 0
    %p131 = por %p129, %p130
    %p132 = scmp.ne.s32.totalorder %s124, %s126
    %p133 = scmp.eq.s32.totalorder %s17, 1
    %p134 = por %p132, %p133
    %p135 = scmp.ne.s32.totalorder %s126, %s127
    %p136 = scmp.eq.s32.totalorder %s17, 0
    %p137 = por %p135, %p136
    %p138 = scmp.ne.s32.totalorder %s126, %s127
    %p139 = scmp.eq.s32.totalorder %s18, 1
    %p140 = por %p138, %p139
    %p142 = scmp.ne.s32.totalorder %s127, %s141
    %p143 = scmp.eq.s32.totalorder %s18, 0
    %p144 = por %p142, %p143
    %s146 = sadd.s32 %s145, 1
    %p149 = scmp.eq.s32.totalorder %s12, 1
    %p150 = scmp.ne.s32.totalorder %s145, %s147
    %p151 = scmp.eq.s32.totalorder %s12, 0
    %p152 = por %p150, %p151
    %p153 = scmp.ne.s32.totalorder %s145, %s147
    %p154 = scmp.eq.s32.totalorder %s17, 1
    %p155 = por %p153, %p154
    %p156 = scmp.ne.s32.totalorder %s147, %s148
    %p157 = scmp.eq.s32.totalorder %s17, 0
    %p158 = por %p156, %p157
    %p159 = scmp.ne.s32.totalorder %s147, %s148
    %p160 = scmp.eq.s32.totalorder %s18, 1
    %p161 = por %p159, %p160
    %p163 = scmp.ne.s32.totalorder %s148, %s162
    %p164 = scmp.eq.s32.totalorder %s18, 0
    %p165 = por %p163, %p164
    %s166 = ssub.s32 %s12, %s19
    %p167 = scmp.eq.s32.totalorder %s166, 0
    %s169 = sadd.s32 %s168, 1
    %s170 = scalar_select %p167, %s168, %s169
    %p173 = pneg %p167
    %p174 = scmp.eq.s32.totalorder %s12, 1
    %p175 = por %p173, %p174
    %p176 = scmp.ne.s32.totalorder %s168, %s171
    %p177 = scmp.eq.s32.totalorder %s12, 0
    %p178 = por %p176, %p177
    %p179 = scmp.ne.s32.totalorder %s168, %s171
    %p180 = scmp.eq.s32.totalorder %s17, 1
    %p181 = por %p179, %p180
    %p182 = scmp.ne.s32.totalorder %s171, %s172
    %p183 = scmp.eq.s32.totalorder %s17, 0
    %p184 = por %p182, %p183
    %p185 = scmp.ne.s32.totalorder %s171, %s172
    %p186 = scmp.eq.s32.totalorder %s18, 1
    %p187 = por %p185, %p186
    %p189 = scmp.ne.s32.totalorder %s172, %s188
    %p190 = scmp.eq.s32.totalorder %s18, 0
    %p191 = por %p189, %p190
    %p192 = scmp.le.s32.totalorder 1, %s12
    %p193 = scmp.lt.s32.totalorder %s12, 3
    %p194 = pnand %p192, %p193
    %p195 = pneg %p194
    // Predicated region
    $region9: #{tpu_custom_call.1} parent=5 // pred_check
      _
    $region10: #{tpu_custom_call.1} parent=5 // pred_check_branch
      %197 = sbr.rel (%p194) target = $region12
    $region11: #{tpu_custom_call.1} parent=5 // pred_region
      %s198 = ssub.s32 %s12, 1
      // Predicated region
      $region13: #{tpu_custom_call.1} parent=11 // pred_check
        %p199 = pneg %p137
      $region14: #{tpu_custom_call.1} parent=11 // pred_check_branch
        %201 = sbr.rel (%p199) target = $region16
      $region15: #{tpu_custom_call.1} parent=11 // pred_region
        _
      $region16: #{tpu_custom_call.1} parent=11 // pred_fallthru
        _
      // Predicated region
      $region17: #{tpu_custom_call.1} parent=11 // pred_check
        %p202 = pneg %p158
      $region18: #{tpu_custom_call.1} parent=11 // pred_check_branch
        %204 = sbr.rel (%p202) target = $region20
      $region19: #{tpu_custom_call.1} parent=11 // pred_region
        _
      $region20: #{tpu_custom_call.1} parent=11 // pred_fallthru
        _
    $region12: #{tpu_custom_call.1} parent=5 // pred_fallthru
      _
    %p205 = scmp.lt.s32.totalorder %s12, 2
    // Predicated region
    $region21: #{tpu_custom_call.1} parent=5 // pred_check
      %p206 = pneg %p205
    $region22: #{tpu_custom_call.1} parent=5 // pred_check_branch
      %208 = sbr.rel (%p206) target = $region24
    $region23: #{tpu_custom_call.1} parent=5 // pred_region
      // Predicated region
      $region25: #{tpu_custom_call.1} parent=23 // pred_check
        %p209 = pneg %p32
      $region26: #{tpu_custom_call.1} parent=23 // pred_check_branch
        %211 = sbr.rel (%p209) target = $region28
      $region27: #{tpu_custom_call.1} parent=23 // pred_region
        %s212 = smul.u32 64, %s12
        %p213 = scmp.lt.s32.totalorder %s212, 127
        %s214 = scalar_select %p213, %s212, 127
        %s215 = smul.addr %s214, 2
        %s216 = smul.addr %s215, 4
        %s217 = scalar_lea.vmem %s0, %s216
        %s218 = smul.u32 64, %s12
      $region28: #{tpu_custom_call.1} parent=23 // pred_fallthru
        _
      // Predicated region
      $region29: #{tpu_custom_call.1} parent=23 // pred_check
        %p219 = pneg %p58
      $region30: #{tpu_custom_call.1} parent=23 // pred_check_branch
        %221 = sbr.rel (%p219) target = $region32
      $region31: #{tpu_custom_call.1} parent=23 // pred_region
        %s222 = smul.u32 64, %s12
        %p223 = scmp.lt.s32.totalorder %s222, 127
        %s224 = scalar_select %p223, %s222, 127
        %s225 = smul.addr %s224, 2
        %s226 = smul.addr %s225, 4
        %s227 = scalar_lea.vmem %s1, %s226
        %s228 = smul.u32 64, %s12
      $region32: #{tpu_custom_call.1} parent=23 // pred_fallthru
        _
      // Predicated region
      $region33: #{tpu_custom_call.1} parent=23 // pred_check
        %p229 = pneg %p84
      $region34: #{tpu_custom_call.1} parent=23 // pred_check_branch
        %231 = sbr.rel (%p229) target = $region36
      $region35: #{tpu_custom_call.1} parent=23 // pred_region
        %s232 = smul.u32 64, %s12
        %p233 = scmp.lt.s32.totalorder %s232, 127
        %s234 = scalar_select %p233, %s232, 127
        %s235 = smul.addr %s234, 2
        %s236 = smul.addr %s235, 4
        %s237 = scalar_lea.vmem %s2, %s236
        %s238 = smul.u32 64, %s12
      $region36: #{tpu_custom_call.1} parent=23 // pred_fallthru
        _
      // Predicated region
      $region37: #{tpu_custom_call.1} parent=23 // pred_check
        %p239 = pneg %p110
      $region38: #{tpu_custom_call.1} parent=23 // pred_check_branch
        %241 = sbr.rel (%p239) target = $region40
      $region39: #{tpu_custom_call.1} parent=23 // pred_region
        %s242 = smul.u32 64, %s12
        %p243 = scmp.lt.s32.totalorder %s242, 127
        %s244 = scalar_select %p243, %s242, 127
        %s245 = smul.addr %s244, 2
        %s246 = smul.addr %s245, 4
        %s247 = scalar_lea.vmem %s3, %s246
        %s248 = smul.u32 64, %s12
      $region40: #{tpu_custom_call.1} parent=23 // pred_fallthru
        _
    $region24: #{tpu_custom_call.1} parent=5 // pred_fallthru
      _
    %p249 = scmp.le.s32.totalorder 1, %s12
    %p250 = scmp.lt.s32.totalorder %s12, 3
    %p251 = pnand %p249, %p250
    %p252 = pneg %p251
    // Predicated region
    $region41: #{tpu_custom_call.1} parent=5 // pred_check
      _
    $region42: #{tpu_custom_call.1} parent=5 // pred_check_branch
      %254 = sbr.rel (%p251) target = $region44
    $region43: #{tpu_custom_call.1} parent=5 // pred_region
      %s255 = ssub.s32 %s12, 1
      %s256 = smul.u32 64, %s17
      %p257 = scmp.lt.s32.totalorder %s256, 127
      %s258 = scalar_select %p257, %s256, 127
      %s259 = smul.addr %s258, 2
      %s260 = smul.addr %s259, 4
      %s261 = scalar_lea.vmem %s0, %s260
      %p262 = pneg %p38
      %p263 = pneg %p35
      %s264 = smul.u32 64, %s17
      %p265 = scmp.lt.s32.totalorder %s264, 127
      %s266 = scalar_select %p265, %s264, 127
      %s267 = smul.addr %s266, 2
      %s268 = smul.addr %s267, 4
      %s269 = scalar_lea.vmem %s1, %s268
      %p270 = pneg %p64
      %p271 = pneg %p61
      %s272 = smul.u32 64, %s17
      %p273 = scmp.lt.s32.totalorder %s272, 127
      %s274 = scalar_select %p273, %s272, 127
      %s275 = smul.addr %s274, 2
      %s276 = smul.addr %s275, 4
      %s277 = scalar_lea.vmem %s2, %s276
      %p278 = pneg %p90
      %p279 = pneg %p87
      %s280 = smul.u32 64, %s17
      %p281 = scmp.lt.s32.totalorder %s280, 127
      %s282 = scalar_select %p281, %s280, 127
      %s283 = smul.addr %s282, 2
      %s284 = smul.addr %s283, 4
      %s285 = scalar_lea.vmem %s3, %s284
      %p286 = pneg %p116
      %p287 = pneg %p113
      %p288 = pneg %p137
      %p289 = pneg %p134
      %p290 = pneg %p158
      %p291 = pneg %p155
      %p292 = pneg %p184
      %p293 = pneg %p181
      %s294 = smul.u32 64, %s17
      %p295 = scmp.lt.s32.totalorder %s294, 127
      %s296 = scalar_select %p295, %s294, 127
      %s297 = smul.addr %s296, 8
      %s298 = scalar_lea.vmem %s6, %s297
      %s299 = smul.u32 64, %s17
      %p300 = scmp.lt.s32.totalorder %s299, 127
      %s301 = scalar_select %p300, %s299, 127
      %s302 = smul.addr %s301, 2
      %s303 = smul.addr %s302, 4
      %s304 = scalar_lea.vmem %s0, %s303
      %s305 = smul.u32 64, %s17
      %s306 = smul.u32 64, %s17
      %p307 = scmp.lt.s32.totalorder %s306, 127
      %s308 = scalar_select %p307, %s306, 127
      %s309 = smul.addr %s308, 2
      %s310 = smul.addr %s309, 4
      %s311 = scalar_lea.vmem %s1, %s310
      %s312 = smul.u32 64, %s17
      %s313 = smul.u32 64, %s17
      %p314 = scmp.lt.s32.totalorder %s313, 127
      %s315 = scalar_select %p314, %s313, 127
      %s316 = smul.addr %s315, 2
      %s317 = smul.addr %s316, 4
      %s318 = scalar_lea.vmem %s2, %s317
      %s319 = smul.u32 64, %s17
      %s320 = smul.u32 64, %s17
      %p321 = scmp.lt.s32.totalorder %s320, 127
      %s322 = scalar_select %p321, %s320, 127
      %s323 = smul.addr %s322, 2
      %s324 = smul.addr %s323, 4
      %s325 = scalar_lea.vmem %s3, %s324
      %s326 = smul.u32 64, %s17
      %s327 = smul.u32 64, %s17
      %p328 = scmp.lt.s32.totalorder %s327, 127
      %s329 = scalar_select %p328, %s327, 127
      %s330 = smul.addr %s329, 8
      %s331 = scalar_lea.vmem %s6, %s330
      %s332 = smul.u32 64, %s17
      %v334 = vld [vmem:[%s4] sm:$0xf]
      %v335 = vld [vmem:[%s4 + $0x4] sm:$0xf]
      %v336 = vld [vmem:[%s4 + $0x8] sm:$0xf]
      %v337 = vld [vmem:[%s4 + $0xc] sm:$0xf]
      %v338 = vld [vmem:[%s4 + $0x10] sm:$0xf]
      %v339 = vld [vmem:[%s4 + $0x14] sm:$0xf]
      %v340 = vld [vmem:[%s4 + $0x18] sm:$0xf]
      %v341 = vld [vmem:[%s4 + $0x1c] sm:$0xf]
      %v342 = vld [vmem:[%s4 + $0x20] sm:$0xf]
      %v343 = vld [vmem:[%s4 + $0x24] sm:$0xf]
      %v344 = vld [vmem:[%s4 + $0x28] sm:$0xf]
      %v345 = vld [vmem:[%s4 + $0x2c] sm:$0xf]
      %v346 = vld [vmem:[%s4 + $0x30] sm:$0xf]
      %v347 = vld [vmem:[%s4 + $0x34] sm:$0xf]
      %v348 = vld [vmem:[%s4 + $0x38] sm:$0xf]
      %v349 = vld [vmem:[%s4 + $0x3c] sm:$0xf]
      %v350 = vld [vmem:[%s4 + $0x40] sm:$0xf]
      %v351 = vld [vmem:[%s4 + $0x44] sm:$0xf]
      %v352 = vld [vmem:[%s4 + $0x48] sm:$0x3]
      %v353 = vld [vmem:[%s304] sm:$0xff]
      %v354 = vld [vmem:[%s304 + $0x8] sm:$0xff]
      %v355 = vld [vmem:[%s304 + $0x10] sm:$0xff]
      %v356 = vld [vmem:[%s304 + $0x18] sm:$0xff]
      %v357 = vld [vmem:[%s304 + $0x20] sm:$0xff]
      %v358 = vld [vmem:[%s304 + $0x28] sm:$0xff]
      %v359 = vld [vmem:[%s304 + $0x30] sm:$0xff]
      %v360 = vld [vmem:[%s304 + $0x38] sm:$0xff]
      %v361 = vld [vmem:[%s304 + $0x40] sm:$0xff]
      %v362 = vld [vmem:[%s304 + $0x48] sm:$0xff]
      %v363 = vld [vmem:[%s304 + $0x50] sm:$0xff]
      %v364 = vld [vmem:[%s304 + $0x58] sm:$0xff]
      %v365 = vld [vmem:[%s304 + $0x60] sm:$0xff]
      %v366 = vld [vmem:[%s304 + $0x68] sm:$0xff]
      %v367 = vld [vmem:[%s304 + $0x70] sm:$0xff]
      %v368 = vld [vmem:[%s304 + $0x78] sm:$0xff]
      %v369 = vld [vmem:[%s304 + $0x80] sm:$0xff]
      %v370 = vld [vmem:[%s304 + $0x88] sm:$0xff]
      %v371 = vld [vmem:[%s304 + $0x90] sm:$0xff]
      %v372 = vld [vmem:[%s304 + $0x98] sm:$0xff]
      %v373 = vld [vmem:[%s304 + $0xa0] sm:$0xff]
      %v374 = vld [vmem:[%s304 + $0xa8] sm:$0xff]
      %v375 = vld [vmem:[%s304 + $0xb0] sm:$0xff]
      %v376 = vld [vmem:[%s304 + $0xb8] sm:$0xff]
      %v377 = vld [vmem:[%s304 + $0xc0] sm:$0xff]
      %v378 = vld [vmem:[%s304 + $0xc8] sm:$0xff]
      %v379 = vld [vmem:[%s304 + $0xd0] sm:$0xff]
      %v380 = vld [vmem:[%s304 + $0xd8] sm:$0xff]
      %v381 = vld [vmem:[%s304 + $0xe0] sm:$0xff]
      %v382 = vld [vmem:[%s304 + $0xe8] sm:$0xff]
      %v383 = vld [vmem:[%s304 + $0xf0] sm:$0xff]
      %v384 = vld [vmem:[%s304 + $0xf8] sm:$0xff]
      %v385 = vld [vmem:[%s304 + $0x100] sm:$0xff]
      %v386 = vld [vmem:[%s304 + $0x108] sm:$0xff]
      %v387 = vld [vmem:[%s304 + $0x110] sm:$0xff]
      %v388 = vld [vmem:[%s304 + $0x118] sm:$0xff]
      %v389 = vld [vmem:[%s304 + $0x120] sm:$0xff]
      %v390 = vld [vmem:[%s304 + $0x128] sm:$0xff]
      %v391 = vld [vmem:[%s304 + $0x130] sm:$0xff]
      %v392 = vld [vmem:[%s304 + $0x138] sm:$0xff]
      %v393 = vld [vmem:[%s304 + $0x140] sm:$0xff]
      %v394 = vld [vmem:[%s304 + $0x148] sm:$0xff]
      %v395 = vld [vmem:[%s304 + $0x150] sm:$0xff]
      %v396 = vld [vmem:[%s304 + $0x158] sm:$0xff]
      %v397 = vld [vmem:[%s304 + $0x160] sm:$0xff]
      %v398 = vld [vmem:[%s304 + $0x168] sm:$0xff]
      %v399 = vld [vmem:[%s304 + $0x170] sm:$0xff]
      %v400 = vld [vmem:[%s304 + $0x178] sm:$0xff]
      %v401 = vld [vmem:[%s304 + $0x180] sm:$0xff]
      %v402 = vld [vmem:[%s304 + $0x188] sm:$0xff]
      %v403 = vld [vmem:[%s304 + $0x190] sm:$0xff]
      %v404 = vld [vmem:[%s304 + $0x198] sm:$0xff]
      %v405 = vld [vmem:[%s304 + $0x1a0] sm:$0xff]
      %v406 = vld [vmem:[%s304 + $0x1a8] sm:$0xff]
      %v407 = vld [vmem:[%s304 + $0x1b0] sm:$0xff]
      %v408 = vld [vmem:[%s304 + $0x1b8] sm:$0xff]
      %v409 = vld [vmem:[%s304 + $0x1c0] sm:$0xff]
      %v410 = vld [vmem:[%s304 + $0x1c8] sm:$0xff]
      %v411 = vld [vmem:[%s304 + $0x1d0] sm:$0xff]
      %v412 = vld [vmem:[%s304 + $0x1d8] sm:$0xff]
      %v413 = vld [vmem:[%s304 + $0x1e0] sm:$0xff]
      %v414 = vld [vmem:[%s304 + $0x1e8] sm:$0xff]
      %v415 = vld [vmem:[%s304 + $0x1f0] sm:$0xff]
      %v416 = vld [vmem:[%s304 + $0x1f8] sm:$0xff]
      %v417 = vld [vmem:[%s311] sm:$0xff]
      %v418 = vld [vmem:[%s311 + $0x8] sm:$0xff]
      %v419 = vld [vmem:[%s311 + $0x10] sm:$0xff]
      %v420 = vld [vmem:[%s311 + $0x18] sm:$0xff]
      %v421 = vld [vmem:[%s311 + $0x20] sm:$0xff]
      %v422 = vld [vmem:[%s311 + $0x28] sm:$0xff]
      %v423 = vld [vmem:[%s311 + $0x30] sm:$0xff]
      %v424 = vld [vmem:[%s311 + $0x38] sm:$0xff]
      %v425 = vld [vmem:[%s311 + $0x40] sm:$0xff]
      %v426 = vld [vmem:[%s311 + $0x48] sm:$0xff]
      %v427 = vld [vmem:[%s311 + $0x50] sm:$0xff]
      %v428 = vld [vmem:[%s311 + $0x58] sm:$0xff]
      %v429 = vld [vmem:[%s311 + $0x60] sm:$0xff]
      %v430 = vld [vmem:[%s311 + $0x68] sm:$0xff]
      %v431 = vld [vmem:[%s311 + $0x70] sm:$0xff]
      %v432 = vld [vmem:[%s311 + $0x78] sm:$0xff]
      %v433 = vld [vmem:[%s311 + $0x80] sm:$0xff]
      %v434 = vld [vmem:[%s311 + $0x88] sm:$0xff]
      %v435 = vld [vmem:[%s311 + $0x90] sm:$0xff]
      %v436 = vld [vmem:[%s311 + $0x98] sm:$0xff]
      %v437 = vld [vmem:[%s311 + $0xa0] sm:$0xff]
      %v438 = vld [vmem:[%s311 + $0xa8] sm:$0xff]
      %v439 = vld [vmem:[%s311 + $0xb0] sm:$0xff]
      %v440 = vld [vmem:[%s311 + $0xb8] sm:$0xff]
      %v441 = vld [vmem:[%s311 + $0xc0] sm:$0xff]
      %v442 = vld [vmem:[%s311 + $0xc8] sm:$0xff]
      %v443 = vld [vmem:[%s311 + $0xd0] sm:$0xff]
      %v444 = vld [vmem:[%s311 + $0xd8] sm:$0xff]
      %v445 = vld [vmem:[%s311 + $0xe0] sm:$0xff]
      %v446 = vld [vmem:[%s311 + $0xe8] sm:$0xff]
      %v447 = vld [vmem:[%s311 + $0xf0] sm:$0xff]
      %v448 = vld [vmem:[%s311 + $0xf8] sm:$0xff]
      %v449 = vld [vmem:[%s311 + $0x100] sm:$0xff]
      %v450 = vld [vmem:[%s311 + $0x108] sm:$0xff]
      %v451 = vld [vmem:[%s311 + $0x110] sm:$0xff]
      %v452 = vld [vmem:[%s311 + $0x118] sm:$0xff]
      %v453 = vld [vmem:[%s311 + $0x120] sm:$0xff]
      %v454 = vld [vmem:[%s311 + $0x128] sm:$0xff]
      %v455 = vld [vmem:[%s311 + $0x130] sm:$0xff]
      %v456 = vld [vmem:[%s311 + $0x138] sm:$0xff]
      %v457 = vld [vmem:[%s311 + $0x140] sm:$0xff]
      %v458 = vld [vmem:[%s311 + $0x148] sm:$0xff]
      %v459 = vld [vmem:[%s311 + $0x150] sm:$0xff]
      %v460 = vld [vmem:[%s311 + $0x158] sm:$0xff]
      %v461 = vld [vmem:[%s311 + $0x160] sm:$0xff]
      %v462 = vld [vmem:[%s311 + $0x168] sm:$0xff]
      %v463 = vld [vmem:[%s311 + $0x170] sm:$0xff]
      %v464 = vld [vmem:[%s311 + $0x178] sm:$0xff]
      %v465 = vld [vmem:[%s311 + $0x180] sm:$0xff]
      %v466 = vld [vmem:[%s311 + $0x188] sm:$0xff]
      %v467 = vld [vmem:[%s311 + $0x190] sm:$0xff]
      %v468 = vld [vmem:[%s311 + $0x198] sm:$0xff]
      %v469 = vld [vmem:[%s311 + $0x1a0] sm:$0xff]
      %v470 = vld [vmem:[%s311 + $0x1a8] sm:$0xff]
      %v471 = vld [vmem:[%s311 + $0x1b0] sm:$0xff]
      %v472 = vld [vmem:[%s311 + $0x1b8] sm:$0xff]
      %v473 = vld [vmem:[%s311 + $0x1c0] sm:$0xff]
      %v474 = vld [vmem:[%s311 + $0x1c8] sm:$0xff]
      %v475 = vld [vmem:[%s311 + $0x1d0] sm:$0xff]
      %v476 = vld [vmem:[%s311 + $0x1d8] sm:$0xff]
      %v477 = vld [vmem:[%s311 + $0x1e0] sm:$0xff]
      %v478 = vld [vmem:[%s311 + $0x1e8] sm:$0xff]
      %v479 = vld [vmem:[%s311 + $0x1f0] sm:$0xff]
      %v480 = vld [vmem:[%s311 + $0x1f8] sm:$0xff]
      %v545 = vunpack.c.l.b16 %v417
      %v546 = vunpack.c.h.b16 %v417
      %v547 = vunpack.c.l.b16 %v418
      %v548 = vunpack.c.h.b16 %v418
      %v549 = vunpack.c.l.b16 %v419
      %v550 = vunpack.c.h.b16 %v419
      %v551 = vunpack.c.l.b16 %v420
      %v552 = vunpack.c.h.b16 %v420
      %v553 = vunpack.c.l.b16 %v421
      %v554 = vunpack.c.h.b16 %v421
      %v555 = vunpack.c.l.b16 %v422
      %v556 = vunpack.c.h.b16 %v422
      %v557 = vunpack.c.l.b16 %v423
      %v558 = vunpack.c.h.b16 %v423
      %v559 = vunpack.c.l.b16 %v424
      %v560 = vunpack.c.h.b16 %v424
      %v561 = vunpack.c.l.b16 %v425
      %v562 = vunpack.c.h.b16 %v425
      %v563 = vunpack.c.l.b16 %v426
      %v564 = vunpack.c.h.b16 %v426
      %v565 = vunpack.c.l.b16 %v427
      %v566 = vunpack.c.h.b16 %v427
      %v567 = vunpack.c.l.b16 %v428
      %v568 = vunpack.c.h.b16 %v428
      %v569 = vunpack.c.l.b16 %v429
      %v570 = vunpack.c.h.b16 %v429
      %v571 = vunpack.c.l.b16 %v430
      %v572 = vunpack.c.h.b16 %v430
      %v573 = vunpack.c.l.b16 %v431
      %v574 = vunpack.c.h.b16 %v431
      %v575 = vunpack.c.l.b16 %v432
      %v576 = vunpack.c.h.b16 %v432
      %v577 = vunpack.c.l.b16 %v433
      %v578 = vunpack.c.h.b16 %v433
      %v579 = vunpack.c.l.b16 %v434
      %v580 = vunpack.c.h.b16 %v434
      %v581 = vunpack.c.l.b16 %v435
      %v582 = vunpack.c.h.b16 %v435
      %v583 = vunpack.c.l.b16 %v436
      %v584 = vunpack.c.h.b16 %v436
      %v585 = vunpack.c.l.b16 %v437
      %v586 = vunpack.c.h.b16 %v437
      %v587 = vunpack.c.l.b16 %v438
      %v588 = vunpack.c.h.b16 %v438
      %v589 = vunpack.c.l.b16 %v439
      %v590 = vunpack.c.h.b16 %v439
      %v591 = vunpack.c.l.b16 %v440
      %v592 = vunpack.c.h.b16 %v440
      %v593 = vunpack.c.l.b16 %v441
      %v594 = vunpack.c.h.b16 %v441
      %v595 = vunpack.c.l.b16 %v442
      %v596 = vunpack.c.h.b16 %v442
      %v597 = vunpack.c.l.b16 %v443
      %v598 = vunpack.c.h.b16 %v443
      %v599 = vunpack.c.l.b16 %v444
      %v600 = vunpack.c.h.b16 %v444
      %v601 = vunpack.c.l.b16 %v445
      %v602 = vunpack.c.h.b16 %v445
      %v603 = vunpack.c.l.b16 %v446
      %v604 = vunpack.c.h.b16 %v446
      %v605 = vunpack.c.l.b16 %v447
      %v606 = vunpack.c.h.b16 %v447
      %v607 = vunpack.c.l.b16 %v448
      %v608 = vunpack.c.h.b16 %v448
      %v609 = vunpack.c.l.b16 %v449
      %v610 = vunpack.c.h.b16 %v449
      %v611 = vunpack.c.l.b16 %v450
      %v612 = vunpack.c.h.b16 %v450
      %v613 = vunpack.c.l.b16 %v451
      %v614 = vunpack.c.h.b16 %v451
      %v615 = vunpack.c.l.b16 %v452
      %v616 = vunpack.c.h.b16 %v452
      %v617 = vunpack.c.l.b16 %v453
      %v618 = vunpack.c.h.b16 %v453
      %v619 = vunpack.c.l.b16 %v454
      %v620 = vunpack.c.h.b16 %v454
      %v621 = vunpack.c.l.b16 %v455
      %v622 = vunpack.c.h.b16 %v455
      %v623 = vunpack.c.l.b16 %v456
      %v624 = vunpack.c.h.b16 %v456
      %v625 = vunpack.c.l.b16 %v457
      %v626 = vunpack.c.h.b16 %v457
      %v627 = vunpack.c.l.b16 %v458
      %v628 = vunpack.c.h.b16 %v458
      %v629 = vunpack.c.l.b16 %v459
      %v630 = vunpack.c.h.b16 %v459
      %v631 = vunpack.c.l.b16 %v460
      %v632 = vunpack.c.h.b16 %v460
      %v633 = vunpack.c.l.b16 %v461
      %v634 = vunpack.c.h.b16 %v461
      %v635 = vunpack.c.l.b16 %v462
      %v636 = vunpack.c.h.b16 %v462
      %v637 = vunpack.c.l.b16 %v463
      %v638 = vunpack.c.h.b16 %v463
      %v639 = vunpack.c.l.b16 %v464
      %v640 = vunpack.c.h.b16 %v464
      %v641 = vunpack.c.l.b16 %v465
      %v642 = vunpack.c.h.b16 %v465
      %v643 = vunpack.c.l.b16 %v466
      %v644 = vunpack.c.h.b16 %v466
      %v645 = vunpack.c.l.b16 %v467
      %v646 = vunpack.c.h.b16 %v467
      %v647 = vunpack.c.l.b16 %v468
      %v648 = vunpack.c.h.b16 %v468
      %v649 = vunpack.c.l.b16 %v469
      %v650 = vunpack.c.h.b16 %v469
      %v651 = vunpack.c.l.b16 %v470
      %v652 = vunpack.c.h.b16 %v470
      %v653 = vunpack.c.l.b16 %v471
      %v654 = vunpack.c.h.b16 %v471
      %v655 = vunpack.c.l.b16 %v472
      %v656 = vunpack.c.h.b16 %v472
      %v657 = vunpack.c.l.b16 %v473
      %v658 = vunpack.c.h.b16 %v473
      %v659 = vunpack.c.l.b16 %v474
      %v660 = vunpack.c.h.b16 %v474
      %v661 = vunpack.c.l.b16 %v475
      %v662 = vunpack.c.h.b16 %v475
      %v663 = vunpack.c.l.b16 %v476
      %v664 = vunpack.c.h.b16 %v476
      %v665 = vunpack.c.l.b16 %v477
      %v666 = vunpack.c.h.b16 %v477
      %v667 = vunpack.c.l.b16 %v478
      %v668 = vunpack.c.h.b16 %v478
      %v669 = vunpack.c.l.b16 %v479
      %v670 = vunpack.c.h.b16 %v479
      %v671 = vunpack.c.l.b16 %v480
      %v672 = vunpack.c.h.b16 %v480
      %v673 = vpack.c.b16 %v547, %v545
      %v674 = vpack.c.b16 %v548, %v546
      %v675 = vpack.c.b16 %v551, %v549
      %v676 = vpack.c.b16 %v552, %v550
      %v677 = vpack.c.b16 %v555, %v553
      %v678 = vpack.c.b16 %v556, %v554
      %v679 = vpack.c.b16 %v559, %v557
      %v680 = vpack.c.b16 %v560, %v558
      %v681 = vpack.c.b16 %v563, %v561
      %v682 = vpack.c.b16 %v564, %v562
      %v683 = vpack.c.b16 %v567, %v565
      %v684 = vpack.c.b16 %v568, %v566
      %v685 = vpack.c.b16 %v571, %v569
      %v686 = vpack.c.b16 %v572, %v570
      %v687 = vpack.c.b16 %v575, %v573
      %v688 = vpack.c.b16 %v576, %v574
      %v689 = vpack.c.b16 %v579, %v577
      %v690 = vpack.c.b16 %v580, %v578
      %v691 = vpack.c.b16 %v583, %v581
      %v692 = vpack.c.b16 %v584, %v582
      %v693 = vpack.c.b16 %v587, %v585
      %v694 = vpack.c.b16 %v588, %v586
      %v695 = vpack.c.b16 %v591, %v589
      %v696 = vpack.c.b16 %v592, %v590
      %v697 = vpack.c.b16 %v595, %v593
      %v698 = vpack.c.b16 %v596, %v594
      %v699 = vpack.c.b16 %v599, %v597
      %v700 = vpack.c.b16 %v600, %v598
      %v701 = vpack.c.b16 %v603, %v601
      %v702 = vpack.c.b16 %v604, %v602
      %v703 = vpack.c.b16 %v607, %v605
      %v704 = vpack.c.b16 %v608, %v606
      %v705 = vpack.c.b16 %v611, %v609
      %v706 = vpack.c.b16 %v612, %v610
      %v707 = vpack.c.b16 %v615, %v613
      %v708 = vpack.c.b16 %v616, %v614
      %v709 = vpack.c.b16 %v619, %v617
      %v710 = vpack.c.b16 %v620, %v618
      %v711 = vpack.c.b16 %v623, %v621
      %v712 = vpack.c.b16 %v624, %v622
      %v713 = vpack.c.b16 %v627, %v625
      %v714 = vpack.c.b16 %v628, %v626
      %v715 = vpack.c.b16 %v631, %v629
      %v716 = vpack.c.b16 %v632, %v630
      %v717 = vpack.c.b16 %v635, %v633
      %v718 = vpack.c.b16 %v636, %v634
      %v719 = vpack.c.b16 %v639, %v637
      %v720 = vpack.c.b16 %v640, %v638
      %v721 = vpack.c.b16 %v643, %v641
      %v722 = vpack.c.b16 %v644, %v642
      %v723 = vpack.c.b16 %v647, %v645
      %v724 = vpack.c.b16 %v648, %v646
      %v725 = vpack.c.b16 %v651, %v649
      %v726 = vpack.c.b16 %v652, %v650
      %v727 = vpack.c.b16 %v655, %v653
      %v728 = vpack.c.b16 %v656, %v654
      %v729 = vpack.c.b16 %v659, %v657
      %v730 = vpack.c.b16 %v660, %v658
      %v731 = vpack.c.b16 %v663, %v661
      %v732 = vpack.c.b16 %v664, %v662
      %v733 = vpack.c.b16 %v667, %v665
      %v734 = vpack.c.b16 %v668, %v666
      %v735 = vpack.c.b16 %v671, %v669
      %v736 = vpack.c.b16 %v672, %v670
      %v788 = vunpack.c.l.b16 %v334
      %v789 = vunpack.c.l.b16 %v335
      %v790 = vunpack.c.l.b16 %v336
      %v791 = vunpack.c.l.b16 %v337
      %v792 = vunpack.c.l.b16 %v338
      %v793 = vunpack.c.l.b16 %v339
      %v794 = vunpack.c.l.b16 %v340
      %v795 = vunpack.c.l.b16 %v341
      %v796 = vunpack.c.l.b16 %v342
      %v797 = vunpack.c.l.b16 %v343
      %v798 = vunpack.c.l.b16 %v344
      %v799 = vunpack.c.l.b16 %v345
      %v800 = vunpack.c.l.b16 %v346
      %v801 = vunpack.c.l.b16 %v347
      %v802 = vunpack.c.l.b16 %v348
      %v803 = vunpack.c.l.b16 %v349
      %v804 = vunpack.c.l.b16 %v350
      %v805 = vunpack.c.l.b16 %v351
      %v806 = vunpack.c.l.b16 %v352
      %v807 = vpack.c.b16 %v789, %v788
      %v808 = vpack.c.b16 %v791, %v790
      %v809 = vpack.c.b16 %v793, %v792
      %v810 = vpack.c.b16 %v795, %v794
      %v811 = vpack.c.b16 %v797, %v796
      %v812 = vpack.c.b16 %v799, %v798
      %v813 = vpack.c.b16 %v801, %v800
      %v814 = vpack.c.b16 %v803, %v802
      %v815 = vpack.c.b16 %v805, %v804
      %v816 = vpack.c.b16 %v806, %v806
      %vm826 = vcmask 154624
      %v828 = vsel %vm826, %v674, 0
      %v831 = vsel %vm826, %v676, 0
      %v834 = vsel %vm826, %v678, 0
      %v837 = vsel %vm826, %v680, 0
      %v840 = vsel %vm826, %v682, 0
      %v843 = vsel %vm826, %v684, 0
      %v846 = vsel %vm826, %v686, 0
      %v849 = vsel %vm826, %v688, 0
      %v852 = vsel %vm826, %v690, 0
      %v855 = vsel %vm826, %v692, 0
      %v858 = vsel %vm826, %v694, 0
      %v861 = vsel %vm826, %v696, 0
      %v864 = vsel %vm826, %v698, 0
      %v867 = vsel %vm826, %v700, 0
      %v870 = vsel %vm826, %v702, 0
      %v873 = vsel %vm826, %v704, 0
      %v876 = vsel %vm826, %v706, 0
      %v879 = vsel %vm826, %v708, 0
      %v882 = vsel %vm826, %v710, 0
      %v885 = vsel %vm826, %v712, 0
      %v888 = vsel %vm826, %v714, 0
      %v891 = vsel %vm826, %v716, 0
      %v894 = vsel %vm826, %v718, 0
      %v897 = vsel %vm826, %v720, 0
      %v900 = vsel %vm826, %v722, 0
      %v903 = vsel %vm826, %v724, 0
      %v906 = vsel %vm826, %v726, 0
      %v909 = vsel %vm826, %v728, 0
      %v912 = vsel %vm826, %v730, 0
      %v915 = vsel %vm826, %v732, 0
      %v918 = vsel %vm826, %v734, 0
      %v921 = vsel %vm826, %v736, 0
      %vm923 = vcmask 1040384
      %vm924 = vcmask 1041408
      %v925 = vsel %vm923, 4294967295, 65535
      %v926 = vsel %vm924, %v925, 0
      %v928 = vand.u32 %v816, %v926
      %930 = vmatprep.subr.bf16.mxu0 0
      %931 = vmatpush1.bf16.msra.mxu0 %v814
      %932 = vmatprep.subr.bf16.mxu0 0
      %933 = vmatpush1.bf16.msra.mxu0 %v813
      %934 = vmatprep.subr.bf16.mxu0 0
      %935 = vmatpush1.bf16.msra.mxu0 %v812
      %936 = vmatprep.subr.bf16.mxu0 0
      %937 = vmatpush1.bf16.msra.mxu0 %v811
      %938 = vmatprep.subr.bf16.mxu0 0
      %939 = vmatpush1.bf16.msra.mxu0 %v810
      %940 = vmatprep.subr.bf16.mxu0 0
      %941 = vmatpush1.bf16.msra.mxu0 %v809
      %942 = vmatprep.subr.bf16.mxu0 0
      %943 = vmatpush1.bf16.msra.mxu0 %v808
      %944 = vmatprep.subr.bf16.mxu0 0
      %945 = vmatpush1.bf16.msra.mxu0 %v807
      %946 = vmatprep.subr.bf16.mxu0 0
      %947 = vmatpush2.bf16.msra.mxu0 0
      %948 = vmatprep.subr.bf16.mxu0 0
      %949 = vmatpush2.bf16.msra.mxu0 0
      %950 = vmatprep.subr.bf16.mxu0 0
      %951 = vmatpush2.bf16.msra.mxu0 0
      %952 = vmatprep.subr.bf16.mxu0 0
      %953 = vmatpush2.bf16.msra.mxu0 0
      %954 = vmatprep.subr.bf16.mxu0 0
      %955 = vmatpush2.bf16.msra.mxu0 0
      %956 = vmatprep.subr.bf16.mxu0 0
      %957 = vmatpush2.bf16.msra.mxu0 0
      %958 = vmatprep.subr.bf16.mxu0 0
      %959 = vmatpush2.bf16.msra.mxu0 %v928
      %960 = vmatprep.subr.bf16.mxu0 0
      %961 = vmatpush2.bf16.msra.mxu0 %v815
      %962 = vmatprep.mubr.bf16.mxu0 %v828
      %963 = vmatmul.mubr.bf16.gmra.mxu0 %v673
      %v964 = vpop.f32.mrf.mxu0
      %v965 = vadd.f32 0.0, %v964
      %v966 = vpop.f32.mrf.mxu0
      %v967 = vpop.f32.mrf.mxu0
      %v968 = vadd.f32 0.0, %v967
      %v969 = vpop.f32.mrf.mxu0
      %970 = vmatprep.mubr.bf16.mxu0 %v831
      %971 = vmatmul.mubr.bf16.gmra.mxu0 %v675
      %v972 = vpop.f32.mrf.mxu0
      %v973 = vadd.f32 0.0, %v972
      %v974 = vpop.f32.mrf.mxu0
      %v975 = vpop.f32.mrf.mxu0
      %v976 = vadd.f32 0.0, %v975
      %v977 = vpop.f32.mrf.mxu0
      %978 = vmatprep.mubr.bf16.mxu0 %v834
      %979 = vmatmul.mubr.bf16.gmra.mxu0 %v677
      %v980 = vpop.f32.mrf.mxu0
      %v981 = vadd.f32 0.0, %v980
      %v982 = vpop.f32.mrf.mxu0
      %v983 = vpop.f32.mrf.mxu0
      %v984 = vadd.f32 0.0, %v983
      %v985 = vpop.f32.mrf.mxu0
      %986 = vmatprep.mubr.bf16.mxu0 %v837
      %987 = vmatmul.mubr.bf16.gmra.mxu0 %v679
      %v988 = vpop.f32.mrf.mxu0
      %v989 = vadd.f32 0.0, %v988
      %v990 = vpop.f32.mrf.mxu0
      %v991 = vpop.f32.mrf.mxu0
      %v992 = vadd.f32 0.0, %v991
      %v993 = vpop.f32.mrf.mxu0
      %994 = vmatprep.mubr.bf16.mxu0 %v840
      %995 = vmatmul.mubr.bf16.gmra.mxu0 %v681
      %v996 = vpop.f32.mrf.mxu0
      %v997 = vadd.f32 0.0, %v996
      %v998 = vpop.f32.mrf.mxu0
      %v999 = vpop.f32.mrf.mxu0
      %v1000 = vadd.f32 0.0, %v999
      %v1001 = vpop.f32.mrf.mxu0
      %1002 = vmatprep.mubr.bf16.mxu0 %v843
      %1003 = vmatmul.mubr.bf16.gmra.mxu0 %v683
      %v1004 = vpop.f32.mrf.mxu0
      %v1005 = vadd.f32 0.0, %v1004
      %v1006 = vpop.f32.mrf.mxu0
      %v1007 = vpop.f32.mrf.mxu0
      %v1008 = vadd.f32 0.0, %v1007
      %v1009 = vpop.f32.mrf.mxu0
      %1010 = vmatprep.mubr.bf16.mxu0 %v846
      %1011 = vmatmul.mubr.bf16.gmra.mxu0 %v685
      %v1012 = vpop.f32.mrf.mxu0
      %v1013 = vadd.f32 0.0, %v1012
      %v1014 = vpop.f32.mrf.mxu0
      %v1015 = vpop.f32.mrf.mxu0
      %v1016 = vadd.f32 0.0, %v1015
      %v1017 = vpop.f32.mrf.mxu0
      %1018 = vmatprep.mubr.bf16.mxu0 %v849
      %1019 = vmatmul.mubr.bf16.gmra.mxu0 %v687
      %v1020 = vpop.f32.mrf.mxu0
      %v1021 = vadd.f32 0.0, %v1020
      %v1022 = vpop.f32.mrf.mxu0
      %v1023 = vpop.f32.mrf.mxu0
      %v1024 = vadd.f32 0.0, %v1023
      %v1025 = vpop.f32.mrf.mxu0
      %1026 = vmatprep.mubr.bf16.mxu0 %v852
      %1027 = vmatmul.mubr.bf16.gmra.mxu0 %v689
      %v1028 = vpop.f32.mrf.mxu0
      %v1029 = vadd.f32 0.0, %v1028
      %v1030 = vpop.f32.mrf.mxu0
      %v1031 = vpop.f32.mrf.mxu0
      %v1032 = vadd.f32 0.0, %v1031
      %v1033 = vpop.f32.mrf.mxu0
      %1034 = vmatprep.mubr.bf16.mxu0 %v855
      %1035 = vmatmul.mubr.bf16.gmra.mxu0 %v691
      %v1036 = vpop.f32.mrf.mxu0
      %v1037 = vadd.f32 0.0, %v1036
      %v1038 = vpop.f32.mrf.mxu0
      %v1039 = vpop.f32.mrf.mxu0
      %v1040 = vadd.f32 0.0, %v1039
      %v1041 = vpop.f32.mrf.mxu0
      %1042 = vmatprep.mubr.bf16.mxu0 %v858
      %1043 = vmatmul.mubr.bf16.gmra.mxu0 %v693
      %v1044 = vpop.f32.mrf.mxu0
      %v1045 = vadd.f32 0.0, %v1044
      %v1046 = vpop.f32.mrf.mxu0
      %v1047 = vpop.f32.mrf.mxu0
      %v1048 = vadd.f32 0.0, %v1047
      %v1049 = vpop.f32.mrf.mxu0
      %1050 = vmatprep.mubr.bf16.mxu0 %v861
      %1051 = vmatmul.mubr.bf16.gmra.mxu0 %v695
      %v1052 = vpop.f32.mrf.mxu0
      %v1053 = vadd.f32 0.0, %v1052
      %v1054 = vpop.f32.mrf.mxu0
      %v1055 = vpop.f32.mrf.mxu0
      %v1056 = vadd.f32 0.0, %v1055
      %v1057 = vpop.f32.mrf.mxu0
      %1058 = vmatprep.mubr.bf16.mxu0 %v864
      %1059 = vmatmul.mubr.bf16.gmra.mxu0 %v697
      %v1060 = vpop.f32.mrf.mxu0
      %v1061 = vadd.f32 0.0, %v1060
      %v1062 = vpop.f32.mrf.mxu0
      %v1063 = vpop.f32.mrf.mxu0
      %v1064 = vadd.f32 0.0, %v1063
      %v1065 = vpop.f32.mrf.mxu0
      %1066 = vmatprep.mubr.bf16.mxu0 %v867
      %1067 = vmatmul.mubr.bf16.gmra.mxu0 %v699
      %v1068 = vpop.f32.mrf.mxu0
      %v1069 = vadd.f32 0.0, %v1068
      %v1070 = vpop.f32.mrf.mxu0
      %v1071 = vpop.f32.mrf.mxu0
      %v1072 = vadd.f32 0.0, %v1071
      %v1073 = vpop.f32.mrf.mxu0
      %1074 = vmatprep.mubr.bf16.mxu0 %v870
      %1075 = vmatmul.mubr.bf16.gmra.mxu0 %v701
      %v1076 = vpop.f32.mrf.mxu0
      %v1077 = vadd.f32 0.0, %v1076
      %v1078 = vpop.f32.mrf.mxu0
      %v1079 = vpop.f32.mrf.mxu0
      %v1080 = vadd.f32 0.0, %v1079
      %v1081 = vpop.f32.mrf.mxu0
      %1082 = vmatprep.mubr.bf16.mxu0 %v873
      %1083 = vmatmul.mubr.bf16.gmra.mxu0 %v703
      %v1084 = vpop.f32.mrf.mxu0
      %v1085 = vadd.f32 0.0, %v1084
      %v1086 = vpop.f32.mrf.mxu0
      %v1087 = vpop.f32.mrf.mxu0
      %v1088 = vadd.f32 0.0, %v1087
      %v1089 = vpop.f32.mrf.mxu0
      %1090 = vmatprep.mubr.bf16.mxu0 %v876
      %1091 = vmatmul.mubr.bf16.gmra.mxu0 %v705
      %v1092 = vpop.f32.mrf.mxu0
      %v1093 = vadd.f32 0.0, %v1092
      %v1094 = vpop.f32.mrf.mxu0
      %v1095 = vpop.f32.mrf.mxu0
      %v1096 = vadd.f32 0.0, %v1095
      %v1097 = vpop.f32.mrf.mxu0
      %1098 = vmatprep.mubr.bf16.mxu0 %v879
      %1099 = vmatmul.mubr.bf16.gmra.mxu0 %v707
      %v1100 = vpop.f32.mrf.mxu0
      %v1101 = vadd.f32 0.0, %v1100
      %v1102 = vpop.f32.mrf.mxu0
      %v1103 = vpop.f32.mrf.mxu0
      %v1104 = vadd.f32 0.0, %v1103
      %v1105 = vpop.f32.mrf.mxu0
      %1106 = vmatprep.mubr.bf16.mxu0 %v882
      %1107 = vmatmul.mubr.bf16.gmra.mxu0 %v709
      %v1108 = vpop.f32.mrf.mxu0
      %v1109 = vadd.f32 0.0, %v1108
      %v1110 = vpop.f32.mrf.mxu0
      %v1111 = vpop.f32.mrf.mxu0
      %v1112 = vadd.f32 0.0, %v1111
      %v1113 = vpop.f32.mrf.mxu0
      %1114 = vmatprep.mubr.bf16.mxu0 %v885
      %1115 = vmatmul.mubr.bf16.gmra.mxu0 %v711
      %v1116 = vpop.f32.mrf.mxu0
      %v1117 = vadd.f32 0.0, %v1116
      %v1118 = vpop.f32.mrf.mxu0
      %v1119 = vpop.f32.mrf.mxu0
      %v1120 = vadd.f32 0.0, %v1119
      %v1121 = vpop.f32.mrf.mxu0
      %1122 = vmatprep.mubr.bf16.mxu0 %v888
      %1123 = vmatmul.mubr.bf16.gmra.mxu0 %v713
      %v1124 = vpop.f32.mrf.mxu0
      %v1125 = vadd.f32 0.0, %v1124
      %v1126 = vpop.f32.mrf.mxu0
      %v1127 = vpop.f32.mrf.mxu0
      %v1128 = vadd.f32 0.0, %v1127
      %v1129 = vpop.f32.mrf.mxu0
      %1130 = vmatprep.mubr.bf16.mxu0 %v891
      %1131 = vmatmul.mubr.bf16.gmra.mxu0 %v715
      %v1132 = vpop.f32.mrf.mxu0
      %v1133 = vadd.f32 0.0, %v1132
      %v1134 = vpop.f32.mrf.mxu0
      %v1135 = vpop.f32.mrf.mxu0
      %v1136 = vadd.f32 0.0, %v1135
      %v1137 = vpop.f32.mrf.mxu0
      %1138 = vmatprep.mubr.bf16.mxu0 %v894
      %1139 = vmatmul.mubr.bf16.gmra.mxu0 %v717
      %v1140 = vpop.f32.mrf.mxu0
      %v1141 = vadd.f32 0.0, %v1140
      %v1142 = vpop.f32.mrf.mxu0
      %v1143 = vpop.f32.mrf.mxu0
      %v1144 = vadd.f32 0.0, %v1143
      %v1145 = vpop.f32.mrf.mxu0
      %1146 = vmatprep.mubr.bf16.mxu0 %v897
      %1147 = vmatmul.mubr.bf16.gmra.mxu0 %v719
      %v1148 = vpop.f32.mrf.mxu0
      %v1149 = vadd.f32 0.0, %v1148
      %v1150 = vpop.f32.mrf.mxu0
      %v1151 = vpop.f32.mrf.mxu0
      %v1152 = vadd.f32 0.0, %v1151
      %v1153 = vpop.f32.mrf.mxu0
      %1154 = vmatprep.mubr.bf16.mxu0 %v900
      %1155 = vmatmul.mubr.bf16.gmra.mxu0 %v721
      %v1156 = vpop.f32.mrf.mxu0
      %v1157 = vadd.f32 0.0, %v1156
      %v1158 = vpop.f32.mrf.mxu0
      %v1159 = vpop.f32.mrf.mxu0
      %v1160 = vadd.f32 0.0, %v1159
      %v1161 = vpop.f32.mrf.mxu0
      %1162 = vmatprep.mubr.bf16.mxu0 %v903
      %1163 = vmatmul.mubr.bf16.gmra.mxu0 %v723
      %v1164 = vpop.f32.mrf.mxu0
      %v1165 = vadd.f32 0.0, %v1164
      %v1166 = vpop.f32.mrf.mxu0
      %v1167 = vpop.f32.mrf.mxu0
      %v1168 = vadd.f32 0.0, %v1167
      %v1169 = vpop.f32.mrf.mxu0
      %1170 = vmatprep.mubr.bf16.mxu0 %v906
      %1171 = vmatmul.mubr.bf16.gmra.mxu0 %v725
      %v1172 = vpop.f32.mrf.mxu0
      %v1173 = vadd.f32 0.0, %v1172
      %v1174 = vpop.f32.mrf.mxu0
      %v1175 = vpop.f32.mrf.mxu0
      %v1176 = vadd.f32 0.0, %v1175
      %v1177 = vpop.f32.mrf.mxu0
      %1178 = vmatprep.mubr.bf16.mxu0 %v909
      %1179 = vmatmul.mubr.bf16.gmra.mxu0 %v727
      %v1180 = vpop.f32.mrf.mxu0
      %v1181 = vadd.f32 0.0, %v1180
      %v1182 = vpop.f32.mrf.mxu0
      %v1183 = vpop.f32.mrf.mxu0
      %v1184 = vadd.f32 0.0, %v1183
      %v1185 = vpop.f32.mrf.mxu0
      %1186 = vmatprep.mubr.bf16.mxu0 %v912
      %1187 = vmatmul.mubr.bf16.gmra.mxu0 %v729
      %v1188 = vpop.f32.mrf.mxu0
      %v1189 = vadd.f32 0.0, %v1188
      %v1190 = vpop.f32.mrf.mxu0
      %v1191 = vpop.f32.mrf.mxu0
      %v1192 = vadd.f32 0.0, %v1191
      %v1193 = vpop.f32.mrf.mxu0
      %1194 = vmatprep.mubr.bf16.mxu0 %v915
      %1195 = vmatmul.mubr.bf16.gmra.mxu0 %v731
      %v1196 = vpop.f32.mrf.mxu0
      %v1197 = vadd.f32 0.0, %v1196
      %v1198 = vpop.f32.mrf.mxu0
      %v1199 = vpop.f32.mrf.mxu0
      %v1200 = vadd.f32 0.0, %v1199
      %v1201 = vpop.f32.mrf.mxu0
      %1202 = vmatprep.mubr.bf16.mxu0 %v918
      %1203 = vmatmul.mubr.bf16.gmra.mxu0 %v733
      %v1204 = vpop.f32.mrf.mxu0
      %v1205 = vadd.f32 0.0, %v1204
      %v1206 = vpop.f32.mrf.mxu0
      %v1207 = vpop.f32.mrf.mxu0
      %v1208 = vadd.f32 0.0, %v1207
      %v1209 = vpop.f32.mrf.mxu0
      %1210 = vmatprep.mubr.bf16.mxu0 %v921
      %1211 = vmatmul.mubr.bf16.gmra.mxu0 %v735
      %v1212 = vpop.f32.mrf.mxu0
      %v1213 = vadd.f32 0.0, %v1212
      %v1214 = vpop.f32.mrf.mxu0
      %v1215 = vpop.f32.mrf.mxu0
      %v1216 = vadd.f32 0.0, %v1215
      %v1217 = vpop.f32.mrf.mxu0
      %1218 = vdwg.mxu0
      %v1283 = vunpack.c.l.b16 %v353
      %v1284 = vunpack.c.h.b16 %v353
      %v1285 = vunpack.c.l.b16 %v354
      %v1286 = vunpack.c.h.b16 %v354
      %v1287 = vunpack.c.l.b16 %v355
      %v1288 = vunpack.c.h.b16 %v355
      %v1289 = vunpack.c.l.b16 %v356
      %v1290 = vunpack.c.h.b16 %v356
      %v1291 = vunpack.c.l.b16 %v357
      %v1292 = vunpack.c.h.b16 %v357
      %v1293 = vunpack.c.l.b16 %v358
      %v1294 = vunpack.c.h.b16 %v358
      %v1295 = vunpack.c.l.b16 %v359
      %v1296 = vunpack.c.h.b16 %v359
      %v1297 = vunpack.c.l.b16 %v360
      %v1298 = vunpack.c.h.b16 %v360
      %v1299 = vunpack.c.l.b16 %v361
      %v1300 = vunpack.c.h.b16 %v361
      %v1301 = vunpack.c.l.b16 %v362
      %v1302 = vunpack.c.h.b16 %v362
      %v1303 = vunpack.c.l.b16 %v363
      %v1304 = vunpack.c.h.b16 %v363
      %v1305 = vunpack.c.l.b16 %v364
      %v1306 = vunpack.c.h.b16 %v364
      %v1307 = vunpack.c.l.b16 %v365
      %v1308 = vunpack.c.h.b16 %v365
      %v1309 = vunpack.c.l.b16 %v366
      %v1310 = vunpack.c.h.b16 %v366
      %v1311 = vunpack.c.l.b16 %v367
      %v1312 = vunpack.c.h.b16 %v367
      %v1313 = vunpack.c.l.b16 %v368
      %v1314 = vunpack.c.h.b16 %v368
      %v1315 = vunpack.c.l.b16 %v369
      %v1316 = vunpack.c.h.b16 %v369
      %v1317 = vunpack.c.l.b16 %v370
      %v1318 = vunpack.c.h.b16 %v370
      %v1319 = vunpack.c.l.b16 %v371
      %v1320 = vunpack.c.h.b16 %v371
      %v1321 = vunpack.c.l.b16 %v372
      %v1322 = vunpack.c.h.b16 %v372
      %v1323 = vunpack.c.l.b16 %v373
      %v1324 = vunpack.c.h.b16 %v373
      %v1325 = vunpack.c.l.b16 %v374
      %v1326 = vunpack.c.h.b16 %v374
      %v1327 = vunpack.c.l.b16 %v375
      %v1328 = vunpack.c.h.b16 %v375
      %v1329 = vunpack.c.l.b16 %v376
      %v1330 = vunpack.c.h.b16 %v376
      %v1331 = vunpack.c.l.b16 %v377
      %v1332 = vunpack.c.h.b16 %v377
      %v1333 = vunpack.c.l.b16 %v378
      %v1334 = vunpack.c.h.b16 %v378
      %v1335 = vunpack.c.l.b16 %v379
      %v1336 = vunpack.c.h.b16 %v379
      %v1337 = vunpack.c.l.b16 %v380
      %v1338 = vunpack.c.h.b16 %v380
      %v1339 = vunpack.c.l.b16 %v381
      %v1340 = vunpack.c.h.b16 %v381
      %v1341 = vunpack.c.l.b16 %v382
      %v1342 = vunpack.c.h.b16 %v382
      %v1343 = vunpack.c.l.b16 %v383
      %v1344 = vunpack.c.h.b16 %v383
      %v1345 = vunpack.c.l.b16 %v384
      %v1346 = vunpack.c.h.b16 %v384
      %v1347 = vunpack.c.l.b16 %v385
      %v1348 = vunpack.c.h.b16 %v385
      %v1349 = vunpack.c.l.b16 %v386
      %v1350 = vunpack.c.h.b16 %v386
      %v1351 = vunpack.c.l.b16 %v387
      %v1352 = vunpack.c.h.b16 %v387
      %v1353 = vunpack.c.l.b16 %v388
      %v1354 = vunpack.c.h.b16 %v388
      %v1355 = vunpack.c.l.b16 %v389
      %v1356 = vunpack.c.h.b16 %v389
      %v1357 = vunpack.c.l.b16 %v390
      %v1358 = vunpack.c.h.b16 %v390
      %v1359 = vunpack.c.l.b16 %v391
      %v1360 = vunpack.c.h.b16 %v391
      %v1361 = vunpack.c.l.b16 %v392
      %v1362 = vunpack.c.h.b16 %v392
      %v1363 = vunpack.c.l.b16 %v393
      %v1364 = vunpack.c.h.b16 %v393
      %v1365 = vunpack.c.l.b16 %v394
      %v1366 = vunpack.c.h.b16 %v394
      %v1367 = vunpack.c.l.b16 %v395
      %v1368 = vunpack.c.h.b16 %v395
      %v1369 = vunpack.c.l.b16 %v396
      %v1370 = vunpack.c.h.b16 %v396
      %v1371 = vunpack.c.l.b16 %v397
      %v1372 = vunpack.c.h.b16 %v397
      %v1373 = vunpack.c.l.b16 %v398
      %v1374 = vunpack.c.h.b16 %v398
      %v1375 = vunpack.c.l.b16 %v399
      %v1376 = vunpack.c.h.b16 %v399
      %v1377 = vunpack.c.l.b16 %v400
      %v1378 = vunpack.c.h.b16 %v400
      %v1379 = vunpack.c.l.b16 %v401
      %v1380 = vunpack.c.h.b16 %v401
      %v1381 = vunpack.c.l.b16 %v402
      %v1382 = vunpack.c.h.b16 %v402
      %v1383 = vunpack.c.l.b16 %v403
      %v1384 = vunpack.c.h.b16 %v403
      %v1385 = vunpack.c.l.b16 %v404
      %v1386 = vunpack.c.h.b16 %v404
      %v1387 = vunpack.c.l.b16 %v405
      %v1388 = vunpack.c.h.b16 %v405
      %v1389 = vunpack.c.l.b16 %v406
      %v1390 = vunpack.c.h.b16 %v406
      %v1391 = vunpack.c.l.b16 %v407
      %v1392 = vunpack.c.h.b16 %v407
      %v1393 = vunpack.c.l.b16 %v408
      %v1394 = vunpack.c.h.b16 %v408
      %v1395 = vunpack.c.l.b16 %v409
      %v1396 = vunpack.c.h.b16 %v409
      %v1397 = vunpack.c.l.b16 %v410
      %v1398 = vunpack.c.h.b16 %v410
      %v1399 = vunpack.c.l.b16 %v411
      %v1400 = vunpack.c.h.b16 %v411
      %v1401 = vunpack.c.l.b16 %v412
      %v1402 = vunpack.c.h.b16 %v412
      %v1403 = vunpack.c.l.b16 %v413
      %v1404 = vunpack.c.h.b16 %v413
      %v1405 = vunpack.c.l.b16 %v414
      %v1406 = vunpack.c.h.b16 %v414
      %v1407 = vunpack.c.l.b16 %v415
      %v1408 = vunpack.c.h.b16 %v415
      %v1409 = vunpack.c.l.b16 %v416
      %v1410 = vunpack.c.h.b16 %v416
      %v1411 = vpack.c.b16 %v1285, %v1283
      %v1412 = vpack.c.b16 %v1286, %v1284
      %v1413 = vpack.c.b16 %v1289, %v1287
      %v1414 = vpack.c.b16 %v1290, %v1288
      %v1415 = vpack.c.b16 %v1293, %v1291
      %v1416 = vpack.c.b16 %v1294, %v1292
      %v1417 = vpack.c.b16 %v1297, %v1295
      %v1418 = vpack.c.b16 %v1298, %v1296
      %v1419 = vpack.c.b16 %v1301, %v1299
      %v1420 = vpack.c.b16 %v1302, %v1300
      %v1421 = vpack.c.b16 %v1305, %v1303
      %v1422 = vpack.c.b16 %v1306, %v1304
      %v1423 = vpack.c.b16 %v1309, %v1307
      %v1424 = vpack.c.b16 %v1310, %v1308
      %v1425 = vpack.c.b16 %v1313, %v1311
      %v1426 = vpack.c.b16 %v1314, %v1312
      %v1427 = vpack.c.b16 %v1317, %v1315
      %v1428 = vpack.c.b16 %v1318, %v1316
      %v1429 = vpack.c.b16 %v1321, %v1319
      %v1430 = vpack.c.b16 %v1322, %v1320
      %v1431 = vpack.c.b16 %v1325, %v1323
      %v1432 = vpack.c.b16 %v1326, %v1324
      %v1433 = vpack.c.b16 %v1329, %v1327
      %v1434 = vpack.c.b16 %v1330, %v1328
      %v1435 = vpack.c.b16 %v1333, %v1331
      %v1436 = vpack.c.b16 %v1334, %v1332
      %v1437 = vpack.c.b16 %v1337, %v1335
      %v1438 = vpack.c.b16 %v1338, %v1336
      %v1439 = vpack.c.b16 %v1341, %v1339
      %v1440 = vpack.c.b16 %v1342, %v1340
      %v1441 = vpack.c.b16 %v1345, %v1343
      %v1442 = vpack.c.b16 %v1346, %v1344
      %v1443 = vpack.c.b16 %v1349, %v1347
      %v1444 = vpack.c.b16 %v1350, %v1348
      %v1445 = vpack.c.b16 %v1353, %v1351
      %v1446 = vpack.c.b16 %v1354, %v1352
      %v1447 = vpack.c.b16 %v1357, %v1355
      %v1448 = vpack.c.b16 %v1358, %v1356
      %v1449 = vpack.c.b16 %v1361, %v1359
      %v1450 = vpack.c.b16 %v1362, %v1360
      %v1451 = vpack.c.b16 %v1365, %v1363
      %v1452 = vpack.c.b16 %v1366, %v1364
      %v1453 = vpack.c.b16 %v1369, %v1367
      %v1454 = vpack.c.b16 %v1370, %v1368
      %v1455 = vpack.c.b16 %v1373, %v1371
      %v1456 = vpack.c.b16 %v1374, %v1372
      %v1457 = vpack.c.b16 %v1377, %v1375
      %v1458 = vpack.c.b16 %v1378, %v1376
      %v1459 = vpack.c.b16 %v1381, %v1379
      %v1460 = vpack.c.b16 %v1382, %v1380
      %v1461 = vpack.c.b16 %v1385, %v1383
      %v1462 = vpack.c.b16 %v1386, %v1384
      %v1463 = vpack.c.b16 %v1389, %v1387
      %v1464 = vpack.c.b16 %v1390, %v1388
      %v1465 = vpack.c.b16 %v1393, %v1391
      %v1466 = vpack.c.b16 %v1394, %v1392
      %v1467 = vpack.c.b16 %v1397, %v1395
      %v1468 = vpack.c.b16 %v1398, %v1396
      %v1469 = vpack.c.b16 %v1401, %v1399
      %v1470 = vpack.c.b16 %v1402, %v1400
      %v1471 = vpack.c.b16 %v1405, %v1403
      %v1472 = vpack.c.b16 %v1406, %v1404
      %v1473 = vpack.c.b16 %v1409, %v1407
      %v1474 = vpack.c.b16 %v1410, %v1408
      %v1508 = vsel %vm826, %v1412, 0
      %v1511 = vsel %vm826, %v1414, 0
      %v1514 = vsel %vm826, %v1416, 0
      %v1517 = vsel %vm826, %v1418, 0
      %v1520 = vsel %vm826, %v1420, 0
      %v1523 = vsel %vm826, %v1422, 0
      %v1526 = vsel %vm826, %v1424, 0
      %v1529 = vsel %vm826, %v1426, 0
      %v1532 = vsel %vm826, %v1428, 0
      %v1535 = vsel %vm826, %v1430, 0
      %v1538 = vsel %vm826, %v1432, 0
      %v1541 = vsel %vm826, %v1434, 0
      %v1544 = vsel %vm826, %v1436, 0
      %v1547 = vsel %vm826, %v1438, 0
      %v1550 = vsel %vm826, %v1440, 0
      %v1553 = vsel %vm826, %v1442, 0
      %v1556 = vsel %vm826, %v1444, 0
      %v1559 = vsel %vm826, %v1446, 0
      %v1562 = vsel %vm826, %v1448, 0
      %v1565 = vsel %vm826, %v1450, 0
      %v1568 = vsel %vm826, %v1452, 0
      %v1571 = vsel %vm826, %v1454, 0
      %v1574 = vsel %vm826, %v1456, 0
      %v1577 = vsel %vm826, %v1458, 0
      %v1580 = vsel %vm826, %v1460, 0
      %v1583 = vsel %vm826, %v1462, 0
      %v1586 = vsel %vm826, %v1464, 0
      %v1589 = vsel %vm826, %v1466, 0
      %v1592 = vsel %vm826, %v1468, 0
      %v1595 = vsel %vm826, %v1470, 0
      %v1598 = vsel %vm826, %v1472, 0
      %v1601 = vsel %vm826, %v1474, 0
      %1603 = vmatprep.subr.bf16.mxu0 0
      %1604 = vmatpush1.bf16.msra.mxu0 %v814
      %1605 = vmatprep.subr.bf16.mxu0 0
      %1606 = vmatpush1.bf16.msra.mxu0 %v813
      %1607 = vmatprep.subr.bf16.mxu0 0
      %1608 = vmatpush1.bf16.msra.mxu0 %v812
      %1609 = vmatprep.subr.bf16.mxu0 0
      %1610 = vmatpush1.bf16.msra.mxu0 %v811
      %1611 = vmatprep.subr.bf16.mxu0 0
      %1612 = vmatpush1.bf16.msra.mxu0 %v810
      %1613 = vmatprep.subr.bf16.mxu0 0
      %1614 = vmatpush1.bf16.msra.mxu0 %v809
      %1615 = vmatprep.subr.bf16.mxu0 0
      %1616 = vmatpush1.bf16.msra.mxu0 %v808
      %1617 = vmatprep.subr.bf16.mxu0 0
      %1618 = vmatpush1.bf16.msra.mxu0 %v807
      %1619 = vmatprep.subr.bf16.mxu0 0
      %1620 = vmatpush2.bf16.msra.mxu0 0
      %1621 = vmatprep.subr.bf16.mxu0 0
      %1622 = vmatpush2.bf16.msra.mxu0 0
      %1623 = vmatprep.subr.bf16.mxu0 0
      %1624 = vmatpush2.bf16.msra.mxu0 0
      %1625 = vmatprep.subr.bf16.mxu0 0
      %1626 = vmatpush2.bf16.msra.mxu0 0
      %1627 = vmatprep.subr.bf16.mxu0 0
      %1628 = vmatpush2.bf16.msra.mxu0 0
      %1629 = vmatprep.subr.bf16.mxu0 0
      %1630 = vmatpush2.bf16.msra.mxu0 0
      %1631 = vmatprep.subr.bf16.mxu0 0
      %1632 = vmatpush2.bf16.msra.mxu0 %v928
      %1633 = vmatprep.subr.bf16.mxu0 0
      %1634 = vmatpush2.bf16.msra.mxu0 %v815
      %1635 = vmatprep.mubr.bf16.mxu0 %v1508
      %1636 = vmatmul.mubr.bf16.gmra.mxu0 %v1411
      %v1637 = vpop.f32.mrf.mxu0
      %v1638 = vadd.f32 %v965, %v1637
      %v1639 = vpop.f32.mrf.mxu0
      %v1640 = vpop.f32.mrf.mxu0
      %v1641 = vadd.f32 %v968, %v1640
      %v1642 = vpop.f32.mrf.mxu0
      %1643 = vmatprep.mubr.bf16.mxu0 %v1511
      %1644 = vmatmul.mubr.bf16.gmra.mxu0 %v1413
      %v1645 = vpop.f32.mrf.mxu0
      %v1646 = vadd.f32 %v973, %v1645
      %v1647 = vpop.f32.mrf.mxu0
      %v1648 = vpop.f32.mrf.mxu0
      %v1649 = vadd.f32 %v976, %v1648
      %v1650 = vpop.f32.mrf.mxu0
      %1651 = vmatprep.mubr.bf16.mxu0 %v1514
      %1652 = vmatmul.mubr.bf16.gmra.mxu0 %v1415
      %v1653 = vpop.f32.mrf.mxu0
      %v1654 = vadd.f32 %v981, %v1653
      %v1655 = vpop.f32.mrf.mxu0
      %v1656 = vpop.f32.mrf.mxu0
      %v1657 = vadd.f32 %v984, %v1656
      %v1658 = vpop.f32.mrf.mxu0
      %1659 = vmatprep.mubr.bf16.mxu0 %v1517
      %1660 = vmatmul.mubr.bf16.gmra.mxu0 %v1417
      %v1661 = vpop.f32.mrf.mxu0
      %v1662 = vadd.f32 %v989, %v1661
      %v1663 = vpop.f32.mrf.mxu0
      %v1664 = vpop.f32.mrf.mxu0
      %v1665 = vadd.f32 %v992, %v1664
      %v1666 = vpop.f32.mrf.mxu0
      %1667 = vmatprep.mubr.bf16.mxu0 %v1520
      %1668 = vmatmul.mubr.bf16.gmra.mxu0 %v1419
      %v1669 = vpop.f32.mrf.mxu0
      %v1670 = vadd.f32 %v997, %v1669
      %v1671 = vpop.f32.mrf.mxu0
      %v1672 = vpop.f32.mrf.mxu0
      %v1673 = vadd.f32 %v1000, %v1672
      %v1674 = vpop.f32.mrf.mxu0
      %1675 = vmatprep.mubr.bf16.mxu0 %v1523
      %1676 = vmatmul.mubr.bf16.gmra.mxu0 %v1421
      %v1677 = vpop.f32.mrf.mxu0
      %v1678 = vadd.f32 %v1005, %v1677
      %v1679 = vpop.f32.mrf.mxu0
      %v1680 = vpop.f32.mrf.mxu0
      %v1681 = vadd.f32 %v1008, %v1680
      %v1682 = vpop.f32.mrf.mxu0
      %1683 = vmatprep.mubr.bf16.mxu0 %v1526
      %1684 = vmatmul.mubr.bf16.gmra.mxu0 %v1423
      %v1685 = vpop.f32.mrf.mxu0
      %v1686 = vadd.f32 %v1013, %v1685
      %v1687 = vpop.f32.mrf.mxu0
      %v1688 = vpop.f32.mrf.mxu0
      %v1689 = vadd.f32 %v1016, %v1688
      %v1690 = vpop.f32.mrf.mxu0
      %1691 = vmatprep.mubr.bf16.mxu0 %v1529
      %1692 = vmatmul.mubr.bf16.gmra.mxu0 %v1425
      %v1693 = vpop.f32.mrf.mxu0
      %v1694 = vadd.f32 %v1021, %v1693
      %v1695 = vpop.f32.mrf.mxu0
      %v1696 = vpop.f32.mrf.mxu0
      %v1697 = vadd.f32 %v1024, %v1696
      %v1698 = vpop.f32.mrf.mxu0
      %1699 = vmatprep.mubr.bf16.mxu0 %v1532
      %1700 = vmatmul.mubr.bf16.gmra.mxu0 %v1427
      %v1701 = vpop.f32.mrf.mxu0
      %v1702 = vadd.f32 %v1029, %v1701
      %v1703 = vpop.f32.mrf.mxu0
      %v1704 = vpop.f32.mrf.mxu0
      %v1705 = vadd.f32 %v1032, %v1704
      %v1706 = vpop.f32.mrf.mxu0
      %1707 = vmatprep.mubr.bf16.mxu0 %v1535
      %1708 = vmatmul.mubr.bf16.gmra.mxu0 %v1429
      %v1709 = vpop.f32.mrf.mxu0
      %v1710 = vadd.f32 %v1037, %v1709
      %v1711 = vpop.f32.mrf.mxu0
      %v1712 = vpop.f32.mrf.mxu0
      %v1713 = vadd.f32 %v1040, %v1712
      %v1714 = vpop.f32.mrf.mxu0
      %1715 = vmatprep.mubr.bf16.mxu0 %v1538
      %1716 = vmatmul.mubr.bf16.gmra.mxu0 %v1431
      %v1717 = vpop.f32.mrf.mxu0
      %v1718 = vadd.f32 %v1045, %v1717
      %v1719 = vpop.f32.mrf.mxu0
      %v1720 = vpop.f32.mrf.mxu0
      %v1721 = vadd.f32 %v1048, %v1720
      %v1722 = vpop.f32.mrf.mxu0
      %1723 = vmatprep.mubr.bf16.mxu0 %v1541
      %1724 = vmatmul.mubr.bf16.gmra.mxu0 %v1433
      %v1725 = vpop.f32.mrf.mxu0
      %v1726 = vadd.f32 %v1053, %v1725
      %v1727 = vpop.f32.mrf.mxu0
      %v1728 = vpop.f32.mrf.mxu0
      %v1729 = vadd.f32 %v1056, %v1728
      %v1730 = vpop.f32.mrf.mxu0
      %1731 = vmatprep.mubr.bf16.mxu0 %v1544
      %1732 = vmatmul.mubr.bf16.gmra.mxu0 %v1435
      %v1733 = vpop.f32.mrf.mxu0
      %v1734 = vadd.f32 %v1061, %v1733
      %v1735 = vpop.f32.mrf.mxu0
      %v1736 = vpop.f32.mrf.mxu0
      %v1737 = vadd.f32 %v1064, %v1736
      %v1738 = vpop.f32.mrf.mxu0
      %1739 = vmatprep.mubr.bf16.mxu0 %v1547
      %1740 = vmatmul.mubr.bf16.gmra.mxu0 %v1437
      %v1741 = vpop.f32.mrf.mxu0
      %v1742 = vadd.f32 %v1069, %v1741
      %v1743 = vpop.f32.mrf.mxu0
      %v1744 = vpop.f32.mrf.mxu0
      %v1745 = vadd.f32 %v1072, %v1744
      %v1746 = vpop.f32.mrf.mxu0
      %1747 = vmatprep.mubr.bf16.mxu0 %v1550
      %1748 = vmatmul.mubr.bf16.gmra.mxu0 %v1439
      %v1749 = vpop.f32.mrf.mxu0
      %v1750 = vadd.f32 %v1077, %v1749
      %v1751 = vpop.f32.mrf.mxu0
      %v1752 = vpop.f32.mrf.mxu0
      %v1753 = vadd.f32 %v1080, %v1752
      %v1754 = vpop.f32.mrf.mxu0
      %1755 = vmatprep.mubr.bf16.mxu0 %v1553
      %1756 = vmatmul.mubr.bf16.gmra.mxu0 %v1441
      %v1757 = vpop.f32.mrf.mxu0
      %v1758 = vadd.f32 %v1085, %v1757
      %v1759 = vpop.f32.mrf.mxu0
      %v1760 = vpop.f32.mrf.mxu0
      %v1761 = vadd.f32 %v1088, %v1760
      %v1762 = vpop.f32.mrf.mxu0
      %1763 = vmatprep.mubr.bf16.mxu0 %v1556
      %1764 = vmatmul.mubr.bf16.gmra.mxu0 %v1443
      %v1765 = vpop.f32.mrf.mxu0
      %v1766 = vadd.f32 %v1093, %v1765
      %v1767 = vpop.f32.mrf.mxu0
      %v1768 = vpop.f32.mrf.mxu0
      %v1769 = vadd.f32 %v1096, %v1768
      %v1770 = vpop.f32.mrf.mxu0
      %1771 = vmatprep.mubr.bf16.mxu0 %v1559
      %1772 = vmatmul.mubr.bf16.gmra.mxu0 %v1445
      %v1773 = vpop.f32.mrf.mxu0
      %v1774 = vadd.f32 %v1101, %v1773
      %v1775 = vpop.f32.mrf.mxu0
      %v1776 = vpop.f32.mrf.mxu0
      %v1777 = vadd.f32 %v1104, %v1776
      %v1778 = vpop.f32.mrf.mxu0
      %1779 = vmatprep.mubr.bf16.mxu0 %v1562
      %1780 = vmatmul.mubr.bf16.gmra.mxu0 %v1447
      %v1781 = vpop.f32.mrf.mxu0
      %v1782 = vadd.f32 %v1109, %v1781
      %v1783 = vpop.f32.mrf.mxu0
      %v1784 = vpop.f32.mrf.mxu0
      %v1785 = vadd.f32 %v1112, %v1784
      %v1786 = vpop.f32.mrf.mxu0
      %1787 = vmatprep.mubr.bf16.mxu0 %v1565
      %1788 = vmatmul.mubr.bf16.gmra.mxu0 %v1449
      %v1789 = vpop.f32.mrf.mxu0
      %v1790 = vadd.f32 %v1117, %v1789
      %v1791 = vpop.f32.mrf.mxu0
      %v1792 = vpop.f32.mrf.mxu0
      %v1793 = vadd.f32 %v1120, %v1792
      %v1794 = vpop.f32.mrf.mxu0
      %1795 = vmatprep.mubr.bf16.mxu0 %v1568
      %1796 = vmatmul.mubr.bf16.gmra.mxu0 %v1451
      %v1797 = vpop.f32.mrf.mxu0
      %v1798 = vadd.f32 %v1125, %v1797
      %v1799 = vpop.f32.mrf.mxu0
      %v1800 = vpop.f32.mrf.mxu0
      %v1801 = vadd.f32 %v1128, %v1800
      %v1802 = vpop.f32.mrf.mxu0
      %1803 = vmatprep.mubr.bf16.mxu0 %v1571
      %1804 = vmatmul.mubr.bf16.gmra.mxu0 %v1453
      %v1805 = vpop.f32.mrf.mxu0
      %v1806 = vadd.f32 %v1133, %v1805
      %v1807 = vpop.f32.mrf.mxu0
      %v1808 = vpop.f32.mrf.mxu0
      %v1809 = vadd.f32 %v1136, %v1808
      %v1810 = vpop.f32.mrf.mxu0
      %1811 = vmatprep.mubr.bf16.mxu0 %v1574
      %1812 = vmatmul.mubr.bf16.gmra.mxu0 %v1455
      %v1813 = vpop.f32.mrf.mxu0
      %v1814 = vadd.f32 %v1141, %v1813
      %v1815 = vpop.f32.mrf.mxu0
      %v1816 = vpop.f32.mrf.mxu0
      %v1817 = vadd.f32 %v1144, %v1816
      %v1818 = vpop.f32.mrf.mxu0
      %1819 = vmatprep.mubr.bf16.mxu0 %v1577
      %1820 = vmatmul.mubr.bf16.gmra.mxu0 %v1457
      %v1821 = vpop.f32.mrf.mxu0
      %v1822 = vadd.f32 %v1149, %v1821
      %v1823 = vpop.f32.mrf.mxu0
      %v1824 = vpop.f32.mrf.mxu0
      %v1825 = vadd.f32 %v1152, %v1824
      %v1826 = vpop.f32.mrf.mxu0
      %1827 = vmatprep.mubr.bf16.mxu0 %v1580
      %1828 = vmatmul.mubr.bf16.gmra.mxu0 %v1459
      %v1829 = vpop.f32.mrf.mxu0
      %v1830 = vadd.f32 %v1157, %v1829
      %v1831 = vpop.f32.mrf.mxu0
      %v1832 = vpop.f32.mrf.mxu0
      %v1833 = vadd.f32 %v1160, %v1832
      %v1834 = vpop.f32.mrf.mxu0
      %1835 = vmatprep.mubr.bf16.mxu0 %v1583
      %1836 = vmatmul.mubr.bf16.gmra.mxu0 %v1461
      %v1837 = vpop.f32.mrf.mxu0
      %v1838 = vadd.f32 %v1165, %v1837
      %v1839 = vpop.f32.mrf.mxu0
      %v1840 = vpop.f32.mrf.mxu0
      %v1841 = vadd.f32 %v1168, %v1840
      %v1842 = vpop.f32.mrf.mxu0
      %1843 = vmatprep.mubr.bf16.mxu0 %v1586
      %1844 = vmatmul.mubr.bf16.gmra.mxu0 %v1463
      %v1845 = vpop.f32.mrf.mxu0
      %v1846 = vadd.f32 %v1173, %v1845
      %v1847 = vpop.f32.mrf.mxu0
      %v1848 = vpop.f32.mrf.mxu0
      %v1849 = vadd.f32 %v1176, %v1848
      %v1850 = vpop.f32.mrf.mxu0
      %1851 = vmatprep.mubr.bf16.mxu0 %v1589
      %1852 = vmatmul.mubr.bf16.gmra.mxu0 %v1465
      %v1853 = vpop.f32.mrf.mxu0
      %v1854 = vadd.f32 %v1181, %v1853
      %v1855 = vpop.f32.mrf.mxu0
      %v1856 = vpop.f32.mrf.mxu0
      %v1857 = vadd.f32 %v1184, %v1856
      %v1858 = vpop.f32.mrf.mxu0
      %1859 = vmatprep.mubr.bf16.mxu0 %v1592
      %1860 = vmatmul.mubr.bf16.gmra.mxu0 %v1467
      %v1861 = vpop.f32.mrf.mxu0
      %v1862 = vadd.f32 %v1189, %v1861
      %v1863 = vpop.f32.mrf.mxu0
      %v1864 = vpop.f32.mrf.mxu0
      %v1865 = vadd.f32 %v1192, %v1864
      %v1866 = vpop.f32.mrf.mxu0
      %1867 = vmatprep.mubr.bf16.mxu0 %v1595
      %1868 = vmatmul.mubr.bf16.gmra.mxu0 %v1469
      %v1869 = vpop.f32.mrf.mxu0
      %v1870 = vadd.f32 %v1197, %v1869
      %v1871 = vpop.f32.mrf.mxu0
      %v1872 = vpop.f32.mrf.mxu0
      %v1873 = vadd.f32 %v1200, %v1872
      %v1874 = vpop.f32.mrf.mxu0
      %1875 = vmatprep.mubr.bf16.mxu0 %v1598
      %1876 = vmatmul.mubr.bf16.gmra.mxu0 %v1471
      %v1877 = vpop.f32.mrf.mxu0
      %v1878 = vadd.f32 %v1205, %v1877
      %v1879 = vpop.f32.mrf.mxu0
      %v1880 = vpop.f32.mrf.mxu0
      %v1881 = vadd.f32 %v1208, %v1880
      %v1882 = vpop.f32.mrf.mxu0
      %1883 = vmatprep.mubr.bf16.mxu0 %v1601
      %1884 = vmatmul.mubr.bf16.gmra.mxu0 %v1473
      %v1885 = vpop.f32.mrf.mxu0
      %v1886 = vadd.f32 %v1213, %v1885
      %v1887 = vpop.f32.mrf.mxu0
      %v1888 = vpop.f32.mrf.mxu0
      %v1889 = vadd.f32 %v1216, %v1888
      %v1890 = vpop.f32.mrf.mxu0
      %1891 = vdwg.mxu0
      %v1892 = vld [vmem:[%s318] sm:$0xff]
      %v1893 = vld [vmem:[%s318 + $0x8] sm:$0xff]
      %v1894 = vld [vmem:[%s318 + $0x10] sm:$0xff]
      %v1895 = vld [vmem:[%s318 + $0x18] sm:$0xff]
      %v1896 = vld [vmem:[%s318 + $0x20] sm:$0xff]
      %v1897 = vld [vmem:[%s318 + $0x28] sm:$0xff]
      %v1898 = vld [vmem:[%s318 + $0x30] sm:$0xff]
      %v1899 = vld [vmem:[%s318 + $0x38] sm:$0xff]
      %v1900 = vld [vmem:[%s318 + $0x40] sm:$0xff]
      %v1901 = vld [vmem:[%s318 + $0x48] sm:$0xff]
      %v1902 = vld [vmem:[%s318 + $0x50] sm:$0xff]
      %v1903 = vld [vmem:[%s318 + $0x58] sm:$0xff]
      %v1904 = vld [vmem:[%s318 + $0x60] sm:$0xff]
      %v1905 = vld [vmem:[%s318 + $0x68] sm:$0xff]
      %v1906 = vld [vmem:[%s318 + $0x70] sm:$0xff]
      %v1907 = vld [vmem:[%s318 + $0x78] sm:$0xff]
      %v1908 = vld [vmem:[%s318 + $0x80] sm:$0xff]
      %v1909 = vld [vmem:[%s318 + $0x88] sm:$0xff]
      %v1910 = vld [vmem:[%s318 + $0x90] sm:$0xff]
      %v1911 = vld [vmem:[%s318 + $0x98] sm:$0xff]
      %v1912 = vld [vmem:[%s318 + $0xa0] sm:$0xff]
      %v1913 = vld [vmem:[%s318 + $0xa8] sm:$0xff]
      %v1914 = vld [vmem:[%s318 + $0xb0] sm:$0xff]
      %v1915 = vld [vmem:[%s318 + $0xb8] sm:$0xff]
      %v1916 = vld [vmem:[%s318 + $0xc0] sm:$0xff]
      %v1917 = vld [vmem:[%s318 + $0xc8] sm:$0xff]
      %v1918 = vld [vmem:[%s318 + $0xd0] sm:$0xff]
      %v1919 = vld [vmem:[%s318 + $0xd8] sm:$0xff]
      %v1920 = vld [vmem:[%s318 + $0xe0] sm:$0xff]
      %v1921 = vld [vmem:[%s318 + $0xe8] sm:$0xff]
      %v1922 = vld [vmem:[%s318 + $0xf0] sm:$0xff]
      %v1923 = vld [vmem:[%s318 + $0xf8] sm:$0xff]
      %v1924 = vld [vmem:[%s318 + $0x100] sm:$0xff]
      %v1925 = vld [vmem:[%s318 + $0x108] sm:$0xff]
      %v1926 = vld [vmem:[%s318 + $0x110] sm:$0xff]
      %v1927 = vld [vmem:[%s318 + $0x118] sm:$0xff]
      %v1928 = vld [vmem:[%s318 + $0x120] sm:$0xff]
      %v1929 = vld [vmem:[%s318 + $0x128] sm:$0xff]
      %v1930 = vld [vmem:[%s318 + $0x130] sm:$0xff]
      %v1931 = vld [vmem:[%s318 + $0x138] sm:$0xff]
      %v1932 = vld [vmem:[%s318 + $0x140] sm:$0xff]
      %v1933 = vld [vmem:[%s318 + $0x148] sm:$0xff]
      %v1934 = vld [vmem:[%s318 + $0x150] sm:$0xff]
      %v1935 = vld [vmem:[%s318 + $0x158] sm:$0xff]
      %v1936 = vld [vmem:[%s318 + $0x160] sm:$0xff]
      %v1937 = vld [vmem:[%s318 + $0x168] sm:$0xff]
      %v1938 = vld [vmem:[%s318 + $0x170] sm:$0xff]
      %v1939 = vld [vmem:[%s318 + $0x178] sm:$0xff]
      %v1940 = vld [vmem:[%s318 + $0x180] sm:$0xff]
      %v1941 = vld [vmem:[%s318 + $0x188] sm:$0xff]
      %v1942 = vld [vmem:[%s318 + $0x190] sm:$0xff]
      %v1943 = vld [vmem:[%s318 + $0x198] sm:$0xff]
      %v1944 = vld [vmem:[%s318 + $0x1a0] sm:$0xff]
      %v1945 = vld [vmem:[%s318 + $0x1a8] sm:$0xff]
      %v1946 = vld [vmem:[%s318 + $0x1b0] sm:$0xff]
      %v1947 = vld [vmem:[%s318 + $0x1b8] sm:$0xff]
      %v1948 = vld [vmem:[%s318 + $0x1c0] sm:$0xff]
      %v1949 = vld [vmem:[%s318 + $0x1c8] sm:$0xff]
      %v1950 = vld [vmem:[%s318 + $0x1d0] sm:$0xff]
      %v1951 = vld [vmem:[%s318 + $0x1d8] sm:$0xff]
      %v1952 = vld [vmem:[%s318 + $0x1e0] sm:$0xff]
      %v1953 = vld [vmem:[%s318 + $0x1e8] sm:$0xff]
      %v1954 = vld [vmem:[%s318 + $0x1f0] sm:$0xff]
      %v1955 = vld [vmem:[%s318 + $0x1f8] sm:$0xff]
      %v2020 = vunpack.c.l.b16 %v1892
      %v2021 = vunpack.c.h.b16 %v1892
      %v2022 = vunpack.c.l.b16 %v1893
      %v2023 = vunpack.c.h.b16 %v1893
      %v2024 = vunpack.c.l.b16 %v1894
      %v2025 = vunpack.c.h.b16 %v1894
      %v2026 = vunpack.c.l.b16 %v1895
      %v2027 = vunpack.c.h.b16 %v1895
      %v2028 = vunpack.c.l.b16 %v1896
      %v2029 = vunpack.c.h.b16 %v1896
      %v2030 = vunpack.c.l.b16 %v1897
      %v2031 = vunpack.c.h.b16 %v1897
      %v2032 = vunpack.c.l.b16 %v1898
      %v2033 = vunpack.c.h.b16 %v1898
      %v2034 = vunpack.c.l.b16 %v1899
      %v2035 = vunpack.c.h.b16 %v1899
      %v2036 = vunpack.c.l.b16 %v1900
      %v2037 = vunpack.c.h.b16 %v1900
      %v2038 = vunpack.c.l.b16 %v1901
      %v2039 = vunpack.c.h.b16 %v1901
      %v2040 = vunpack.c.l.b16 %v1902
      %v2041 = vunpack.c.h.b16 %v1902
      %v2042 = vunpack.c.l.b16 %v1903
      %v2043 = vunpack.c.h.b16 %v1903
      %v2044 = vunpack.c.l.b16 %v1904
      %v2045 = vunpack.c.h.b16 %v1904
      %v2046 = vunpack.c.l.b16 %v1905
      %v2047 = vunpack.c.h.b16 %v1905
      %v2048 = vunpack.c.l.b16 %v1906
      %v2049 = vunpack.c.h.b16 %v1906
      %v2050 = vunpack.c.l.b16 %v1907
      %v2051 = vunpack.c.h.b16 %v1907
      %v2052 = vunpack.c.l.b16 %v1908
      %v2053 = vunpack.c.h.b16 %v1908
      %v2054 = vunpack.c.l.b16 %v1909
      %v2055 = vunpack.c.h.b16 %v1909
      %v2056 = vunpack.c.l.b16 %v1910
      %v2057 = vunpack.c.h.b16 %v1910
      %v2058 = vunpack.c.l.b16 %v1911
      %v2059 = vunpack.c.h.b16 %v1911
      %v2060 = vunpack.c.l.b16 %v1912
      %v2061 = vunpack.c.h.b16 %v1912
      %v2062 = vunpack.c.l.b16 %v1913
      %v2063 = vunpack.c.h.b16 %v1913
      %v2064 = vunpack.c.l.b16 %v1914
      %v2065 = vunpack.c.h.b16 %v1914
      %v2066 = vunpack.c.l.b16 %v1915
      %v2067 = vunpack.c.h.b16 %v1915
      %v2068 = vunpack.c.l.b16 %v1916
      %v2069 = vunpack.c.h.b16 %v1916
      %v2070 = vunpack.c.l.b16 %v1917
      %v2071 = vunpack.c.h.b16 %v1917
      %v2072 = vunpack.c.l.b16 %v1918
      %v2073 = vunpack.c.h.b16 %v1918
      %v2074 = vunpack.c.l.b16 %v1919
      %v2075 = vunpack.c.h.b16 %v1919
      %v2076 = vunpack.c.l.b16 %v1920
      %v2077 = vunpack.c.h.b16 %v1920
      %v2078 = vunpack.c.l.b16 %v1921
      %v2079 = vunpack.c.h.b16 %v1921
      %v2080 = vunpack.c.l.b16 %v1922
      %v2081 = vunpack.c.h.b16 %v1922
      %v2082 = vunpack.c.l.b16 %v1923
      %v2083 = vunpack.c.h.b16 %v1923
      %v2084 = vunpack.c.l.b16 %v1924
      %v2085 = vunpack.c.h.b16 %v1924
      %v2086 = vunpack.c.l.b16 %v1925
      %v2087 = vunpack.c.h.b16 %v1925
      %v2088 = vunpack.c.l.b16 %v1926
      %v2089 = vunpack.c.h.b16 %v1926
      %v2090 = vunpack.c.l.b16 %v1927
      %v2091 = vunpack.c.h.b16 %v1927
      %v2092 = vunpack.c.l.b16 %v1928
      %v2093 = vunpack.c.h.b16 %v1928
      %v2094 = vunpack.c.l.b16 %v1929
      %v2095 = vunpack.c.h.b16 %v1929
      %v2096 = vunpack.c.l.b16 %v1930
      %v2097 = vunpack.c.h.b16 %v1930
      %v2098 = vunpack.c.l.b16 %v1931
      %v2099 = vunpack.c.h.b16 %v1931
      %v2100 = vunpack.c.l.b16 %v1932
      %v2101 = vunpack.c.h.b16 %v1932
      %v2102 = vunpack.c.l.b16 %v1933
      %v2103 = vunpack.c.h.b16 %v1933
      %v2104 = vunpack.c.l.b16 %v1934
      %v2105 = vunpack.c.h.b16 %v1934
      %v2106 = vunpack.c.l.b16 %v1935
      %v2107 = vunpack.c.h.b16 %v1935
      %v2108 = vunpack.c.l.b16 %v1936
      %v2109 = vunpack.c.h.b16 %v1936
      %v2110 = vunpack.c.l.b16 %v1937
      %v2111 = vunpack.c.h.b16 %v1937
      %v2112 = vunpack.c.l.b16 %v1938
      %v2113 = vunpack.c.h.b16 %v1938
      %v2114 = vunpack.c.l.b16 %v1939
      %v2115 = vunpack.c.h.b16 %v1939
      %v2116 = vunpack.c.l.b16 %v1940
      %v2117 = vunpack.c.h.b16 %v1940
      %v2118 = vunpack.c.l.b16 %v1941
      %v2119 = vunpack.c.h.b16 %v1941
      %v2120 = vunpack.c.l.b16 %v1942
      %v2121 = vunpack.c.h.b16 %v1942
      %v2122 = vunpack.c.l.b16 %v1943
      %v2123 = vunpack.c.h.b16 %v1943
      %v2124 = vunpack.c.l.b16 %v1944
      %v2125 = vunpack.c.h.b16 %v1944
      %v2126 = vunpack.c.l.b16 %v1945
      %v2127 = vunpack.c.h.b16 %v1945
      %v2128 = vunpack.c.l.b16 %v1946
      %v2129 = vunpack.c.h.b16 %v1946
      %v2130 = vunpack.c.l.b16 %v1947
      %v2131 = vunpack.c.h.b16 %v1947
      %v2132 = vunpack.c.l.b16 %v1948
      %v2133 = vunpack.c.h.b16 %v1948
      %v2134 = vunpack.c.l.b16 %v1949
      %v2135 = vunpack.c.h.b16 %v1949
      %v2136 = vunpack.c.l.b16 %v1950
      %v2137 = vunpack.c.h.b16 %v1950
      %v2138 = vunpack.c.l.b16 %v1951
      %v2139 = vunpack.c.h.b16 %v1951
      %v2140 = vunpack.c.l.b16 %v1952
      %v2141 = vunpack.c.h.b16 %v1952
      %v2142 = vunpack.c.l.b16 %v1953
      %v2143 = vunpack.c.h.b16 %v1953
      %v2144 = vunpack.c.l.b16 %v1954
      %v2145 = vunpack.c.h.b16 %v1954
      %v2146 = vunpack.c.l.b16 %v1955
      %v2147 = vunpack.c.h.b16 %v1955
      %v2148 = vpack.c.b16 %v2022, %v2020
      %v2149 = vpack.c.b16 %v2023, %v2021
      %v2150 = vpack.c.b16 %v2026, %v2024
      %v2151 = vpack.c.b16 %v2027, %v2025
      %v2152 = vpack.c.b16 %v2030, %v2028
      %v2153 = vpack.c.b16 %v2031, %v2029
      %v2154 = vpack.c.b16 %v2034, %v2032
      %v2155 = vpack.c.b16 %v2035, %v2033
      %v2156 = vpack.c.b16 %v2038, %v2036
      %v2157 = vpack.c.b16 %v2039, %v2037
      %v2158 = vpack.c.b16 %v2042, %v2040
      %v2159 = vpack.c.b16 %v2043, %v2041
      %v2160 = vpack.c.b16 %v2046, %v2044
      %v2161 = vpack.c.b16 %v2047, %v2045
      %v2162 = vpack.c.b16 %v2050, %v2048
      %v2163 = vpack.c.b16 %v2051, %v2049
      %v2164 = vpack.c.b16 %v2054, %v2052
      %v2165 = vpack.c.b16 %v2055, %v2053
      %v2166 = vpack.c.b16 %v2058, %v2056
      %v2167 = vpack.c.b16 %v2059, %v2057
      %v2168 = vpack.c.b16 %v2062, %v2060
      %v2169 = vpack.c.b16 %v2063, %v2061
      %v2170 = vpack.c.b16 %v2066, %v2064
      %v2171 = vpack.c.b16 %v2067, %v2065
      %v2172 = vpack.c.b16 %v2070, %v2068
      %v2173 = vpack.c.b16 %v2071, %v2069
      %v2174 = vpack.c.b16 %v2074, %v2072
      %v2175 = vpack.c.b16 %v2075, %v2073
      %v2176 = vpack.c.b16 %v2078, %v2076
      %v2177 = vpack.c.b16 %v2079, %v2077
      %v2178 = vpack.c.b16 %v2082, %v2080
      %v2179 = vpack.c.b16 %v2083, %v2081
      %v2180 = vpack.c.b16 %v2086, %v2084
      %v2181 = vpack.c.b16 %v2087, %v2085
      %v2182 = vpack.c.b16 %v2090, %v2088
      %v2183 = vpack.c.b16 %v2091, %v2089
      %v2184 = vpack.c.b16 %v2094, %v2092
      %v2185 = vpack.c.b16 %v2095, %v2093
      %v2186 = vpack.c.b16 %v2098, %v2096
      %v2187 = vpack.c.b16 %v2099, %v2097
      %v2188 = vpack.c.b16 %v2102, %v2100
      %v2189 = vpack.c.b16 %v2103, %v2101
      %v2190 = vpack.c.b16 %v2106, %v2104
      %v2191 = vpack.c.b16 %v2107, %v2105
      %v2192 = vpack.c.b16 %v2110, %v2108
      %v2193 = vpack.c.b16 %v2111, %v2109
      %v2194 = vpack.c.b16 %v2114, %v2112
      %v2195 = vpack.c.b16 %v2115, %v2113
      %v2196 = vpack.c.b16 %v2118, %v2116
      %v2197 = vpack.c.b16 %v2119, %v2117
      %v2198 = vpack.c.b16 %v2122, %v2120
      %v2199 = vpack.c.b16 %v2123, %v2121
      %v2200 = vpack.c.b16 %v2126, %v2124
      %v2201 = vpack.c.b16 %v2127, %v2125
      %v2202 = vpack.c.b16 %v2130, %v2128
      %v2203 = vpack.c.b16 %v2131, %v2129
      %v2204 = vpack.c.b16 %v2134, %v2132
      %v2205 = vpack.c.b16 %v2135, %v2133
      %v2206 = vpack.c.b16 %v2138, %v2136
      %v2207 = vpack.c.b16 %v2139, %v2137
      %v2208 = vpack.c.b16 %v2142, %v2140
      %v2209 = vpack.c.b16 %v2143, %v2141
      %v2210 = vpack.c.b16 %v2146, %v2144
      %v2211 = vpack.c.b16 %v2147, %v2145
      %v2245 = vsel %vm826, %v2149, 0
      %v2248 = vsel %vm826, %v2151, 0
      %v2251 = vsel %vm826, %v2153, 0
      %v2254 = vsel %vm826, %v2155, 0
      %v2257 = vsel %vm826, %v2157, 0
      %v2260 = vsel %vm826, %v2159, 0
      %v2263 = vsel %vm826, %v2161, 0
      %v2266 = vsel %vm826, %v2163, 0
      %v2269 = vsel %vm826, %v2165, 0
      %v2272 = vsel %vm826, %v2167, 0
      %v2275 = vsel %vm826, %v2169, 0
      %v2278 = vsel %vm826, %v2171, 0
      %v2281 = vsel %vm826, %v2173, 0
      %v2284 = vsel %vm826, %v2175, 0
      %v2287 = vsel %vm826, %v2177, 0
      %v2290 = vsel %vm826, %v2179, 0
      %v2293 = vsel %vm826, %v2181, 0
      %v2296 = vsel %vm826, %v2183, 0
      %v2299 = vsel %vm826, %v2185, 0
      %v2302 = vsel %vm826, %v2187, 0
      %v2305 = vsel %vm826, %v2189, 0
      %v2308 = vsel %vm826, %v2191, 0
      %v2311 = vsel %vm826, %v2193, 0
      %v2314 = vsel %vm826, %v2195, 0
      %v2317 = vsel %vm826, %v2197, 0
      %v2320 = vsel %vm826, %v2199, 0
      %v2323 = vsel %vm826, %v2201, 0
      %v2326 = vsel %vm826, %v2203, 0
      %v2329 = vsel %vm826, %v2205, 0
      %v2332 = vsel %vm826, %v2207, 0
      %v2335 = vsel %vm826, %v2209, 0
      %v2338 = vsel %vm826, %v2211, 0
      %2340 = vmatprep.subr.bf16.mxu0 0
      %2341 = vmatpush1.bf16.msra.mxu0 %v814
      %2342 = vmatprep.subr.bf16.mxu0 0
      %2343 = vmatpush1.bf16.msra.mxu0 %v813
      %2344 = vmatprep.subr.bf16.mxu0 0
      %2345 = vmatpush1.bf16.msra.mxu0 %v812
      %2346 = vmatprep.subr.bf16.mxu0 0
      %2347 = vmatpush1.bf16.msra.mxu0 %v811
      %2348 = vmatprep.subr.bf16.mxu0 0
      %2349 = vmatpush1.bf16.msra.mxu0 %v810
      %2350 = vmatprep.subr.bf16.mxu0 0
      %2351 = vmatpush1.bf16.msra.mxu0 %v809
      %2352 = vmatprep.subr.bf16.mxu0 0
      %2353 = vmatpush1.bf16.msra.mxu0 %v808
      %2354 = vmatprep.subr.bf16.mxu0 0
      %2355 = vmatpush1.bf16.msra.mxu0 %v807
      %2356 = vmatprep.subr.bf16.mxu0 0
      %2357 = vmatpush2.bf16.msra.mxu0 0
      %2358 = vmatprep.subr.bf16.mxu0 0
      %2359 = vmatpush2.bf16.msra.mxu0 0
      %2360 = vmatprep.subr.bf16.mxu0 0
      %2361 = vmatpush2.bf16.msra.mxu0 0
      %2362 = vmatprep.subr.bf16.mxu0 0
      %2363 = vmatpush2.bf16.msra.mxu0 0
      %2364 = vmatprep.subr.bf16.mxu0 0
      %2365 = vmatpush2.bf16.msra.mxu0 0
      %2366 = vmatprep.subr.bf16.mxu0 0
      %2367 = vmatpush2.bf16.msra.mxu0 0
      %2368 = vmatprep.subr.bf16.mxu0 0
      %2369 = vmatpush2.bf16.msra.mxu0 %v928
      %2370 = vmatprep.subr.bf16.mxu0 0
      %2371 = vmatpush2.bf16.msra.mxu0 %v815
      %2372 = vmatprep.mubr.bf16.mxu0 %v2245
      %2373 = vmatmul.mubr.bf16.gmra.mxu0 %v2148
      %v2374 = vpop.f32.mrf.mxu0
      %v2375 = vadd.f32 0.0, %v2374
      %v2376 = vpop.f32.mrf.mxu0
      %v2377 = vpop.f32.mrf.mxu0
      %v2378 = vadd.f32 0.0, %v2377
      %v2379 = vpop.f32.mrf.mxu0
      %2380 = vmatprep.mubr.bf16.mxu0 %v2248
      %2381 = vmatmul.mubr.bf16.gmra.mxu0 %v2150
      %v2382 = vpop.f32.mrf.mxu0
      %v2383 = vadd.f32 0.0, %v2382
      %v2384 = vpop.f32.mrf.mxu0
      %v2385 = vpop.f32.mrf.mxu0
      %v2386 = vadd.f32 0.0, %v2385
      %v2387 = vpop.f32.mrf.mxu0
      %2388 = vmatprep.mubr.bf16.mxu0 %v2251
      %2389 = vmatmul.mubr.bf16.gmra.mxu0 %v2152
      %v2390 = vpop.f32.mrf.mxu0
      %v2391 = vadd.f32 0.0, %v2390
      %v2392 = vpop.f32.mrf.mxu0
      %v2393 = vpop.f32.mrf.mxu0
      %v2394 = vadd.f32 0.0, %v2393
      %v2395 = vpop.f32.mrf.mxu0
      %2396 = vmatprep.mubr.bf16.mxu0 %v2254
      %2397 = vmatmul.mubr.bf16.gmra.mxu0 %v2154
      %v2398 = vpop.f32.mrf.mxu0
      %v2399 = vadd.f32 0.0, %v2398
      %v2400 = vpop.f32.mrf.mxu0
      %v2401 = vpop.f32.mrf.mxu0
      %v2402 = vadd.f32 0.0, %v2401
      %v2403 = vpop.f32.mrf.mxu0
      %2404 = vmatprep.mubr.bf16.mxu0 %v2257
      %2405 = vmatmul.mubr.bf16.gmra.mxu0 %v2156
      %v2406 = vpop.f32.mrf.mxu0
      %v2407 = vadd.f32 0.0, %v2406
      %v2408 = vpop.f32.mrf.mxu0
      %v2409 = vpop.f32.mrf.mxu0
      %v2410 = vadd.f32 0.0, %v2409
      %v2411 = vpop.f32.mrf.mxu0
      %2412 = vmatprep.mubr.bf16.mxu0 %v2260
      %2413 = vmatmul.mubr.bf16.gmra.mxu0 %v2158
      %v2414 = vpop.f32.mrf.mxu0
      %v2415 = vadd.f32 0.0, %v2414
      %v2416 = vpop.f32.mrf.mxu0
      %v2417 = vpop.f32.mrf.mxu0
      %v2418 = vadd.f32 0.0, %v2417
      %v2419 = vpop.f32.mrf.mxu0
      %2420 = vmatprep.mubr.bf16.mxu0 %v2263
      %2421 = vmatmul.mubr.bf16.gmra.mxu0 %v2160
      %v2422 = vpop.f32.mrf.mxu0
      %v2423 = vadd.f32 0.0, %v2422
      %v2424 = vpop.f32.mrf.mxu0
      %v2425 = vpop.f32.mrf.mxu0
      %v2426 = vadd.f32 0.0, %v2425
      %v2427 = vpop.f32.mrf.mxu0
      %2428 = vmatprep.mubr.bf16.mxu0 %v2266
      %2429 = vmatmul.mubr.bf16.gmra.mxu0 %v2162
      %v2430 = vpop.f32.mrf.mxu0
      %v2431 = vadd.f32 0.0, %v2430
      %v2432 = vpop.f32.mrf.mxu0
      %v2433 = vpop.f32.mrf.mxu0
      %v2434 = vadd.f32 0.0, %v2433
      %v2435 = vpop.f32.mrf.mxu0
      %2436 = vmatprep.mubr.bf16.mxu0 %v2269
      %2437 = vmatmul.mubr.bf16.gmra.mxu0 %v2164
      %v2438 = vpop.f32.mrf.mxu0
      %v2439 = vadd.f32 0.0, %v2438
      %v2440 = vpop.f32.mrf.mxu0
      %v2441 = vpop.f32.mrf.mxu0
      %v2442 = vadd.f32 0.0, %v2441
      %v2443 = vpop.f32.mrf.mxu0
      %2444 = vmatprep.mubr.bf16.mxu0 %v2272
      %2445 = vmatmul.mubr.bf16.gmra.mxu0 %v2166
      %v2446 = vpop.f32.mrf.mxu0
      %v2447 = vadd.f32 0.0, %v2446
      %v2448 = vpop.f32.mrf.mxu0
      %v2449 = vpop.f32.mrf.mxu0
      %v2450 = vadd.f32 0.0, %v2449
      %v2451 = vpop.f32.mrf.mxu0
      %2452 = vmatprep.mubr.bf16.mxu0 %v2275
      %2453 = vmatmul.mubr.bf16.gmra.mxu0 %v2168
      %v2454 = vpop.f32.mrf.mxu0
      %v2455 = vadd.f32 0.0, %v2454
      %v2456 = vpop.f32.mrf.mxu0
      %v2457 = vpop.f32.mrf.mxu0
      %v2458 = vadd.f32 0.0, %v2457
      %v2459 = vpop.f32.mrf.mxu0
      %2460 = vmatprep.mubr.bf16.mxu0 %v2278
      %2461 = vmatmul.mubr.bf16.gmra.mxu0 %v2170
      %v2462 = vpop.f32.mrf.mxu0
      %v2463 = vadd.f32 0.0, %v2462
      %v2464 = vpop.f32.mrf.mxu0
      %v2465 = vpop.f32.mrf.mxu0
      %v2466 = vadd.f32 0.0, %v2465
      %v2467 = vpop.f32.mrf.mxu0
      %2468 = vmatprep.mubr.bf16.mxu0 %v2281
      %2469 = vmatmul.mubr.bf16.gmra.mxu0 %v2172
      %v2470 = vpop.f32.mrf.mxu0
      %v2471 = vadd.f32 0.0, %v2470
      %v2472 = vpop.f32.mrf.mxu0
      %v2473 = vpop.f32.mrf.mxu0
      %v2474 = vadd.f32 0.0, %v2473
      %v2475 = vpop.f32.mrf.mxu0
      %2476 = vmatprep.mubr.bf16.mxu0 %v2284
      %2477 = vmatmul.mubr.bf16.gmra.mxu0 %v2174
      %v2478 = vpop.f32.mrf.mxu0
      %v2479 = vadd.f32 0.0, %v2478
      %v2480 = vpop.f32.mrf.mxu0
      %v2481 = vpop.f32.mrf.mxu0
      %v2482 = vadd.f32 0.0, %v2481
      %v2483 = vpop.f32.mrf.mxu0
      %2484 = vmatprep.mubr.bf16.mxu0 %v2287
      %2485 = vmatmul.mubr.bf16.gmra.mxu0 %v2176
      %v2486 = vpop.f32.mrf.mxu0
      %v2487 = vadd.f32 0.0, %v2486
      %v2488 = vpop.f32.mrf.mxu0
      %v2489 = vpop.f32.mrf.mxu0
      %v2490 = vadd.f32 0.0, %v2489
      %v2491 = vpop.f32.mrf.mxu0
      %2492 = vmatprep.mubr.bf16.mxu0 %v2290
      %2493 = vmatmul.mubr.bf16.gmra.mxu0 %v2178
      %v2494 = vpop.f32.mrf.mxu0
      %v2495 = vadd.f32 0.0, %v2494
      %v2496 = vpop.f32.mrf.mxu0
      %v2497 = vpop.f32.mrf.mxu0
      %v2498 = vadd.f32 0.0, %v2497
      %v2499 = vpop.f32.mrf.mxu0
      %2500 = vmatprep.mubr.bf16.mxu0 %v2293
      %2501 = vmatmul.mubr.bf16.gmra.mxu0 %v2180
      %v2502 = vpop.f32.mrf.mxu0
      %v2503 = vadd.f32 0.0, %v2502
      %v2504 = vpop.f32.mrf.mxu0
      %v2505 = vpop.f32.mrf.mxu0
      %v2506 = vadd.f32 0.0, %v2505
      %v2507 = vpop.f32.mrf.mxu0
      %2508 = vmatprep.mubr.bf16.mxu0 %v2296
      %2509 = vmatmul.mubr.bf16.gmra.mxu0 %v2182
      %v2510 = vpop.f32.mrf.mxu0
      %v2511 = vadd.f32 0.0, %v2510
      %v2512 = vpop.f32.mrf.mxu0
      %v2513 = vpop.f32.mrf.mxu0
      %v2514 = vadd.f32 0.0, %v2513
      %v2515 = vpop.f32.mrf.mxu0
      %2516 = vmatprep.mubr.bf16.mxu0 %v2299
      %2517 = vmatmul.mubr.bf16.gmra.mxu0 %v2184
      %v2518 = vpop.f32.mrf.mxu0
      %v2519 = vadd.f32 0.0, %v2518
      %v2520 = vpop.f32.mrf.mxu0
      %v2521 = vpop.f32.mrf.mxu0
      %v2522 = vadd.f32 0.0, %v2521
      %v2523 = vpop.f32.mrf.mxu0
      %2524 = vmatprep.mubr.bf16.mxu0 %v2302
      %2525 = vmatmul.mubr.bf16.gmra.mxu0 %v2186
      %v2526 = vpop.f32.mrf.mxu0
      %v2527 = vadd.f32 0.0, %v2526
      %v2528 = vpop.f32.mrf.mxu0
      %v2529 = vpop.f32.mrf.mxu0
      %v2530 = vadd.f32 0.0, %v2529
      %v2531 = vpop.f32.mrf.mxu0
      %2532 = vmatprep.mubr.bf16.mxu0 %v2305
      %2533 = vmatmul.mubr.bf16.gmra.mxu0 %v2188
      %v2534 = vpop.f32.mrf.mxu0
      %v2535 = vadd.f32 0.0, %v2534
      %v2536 = vpop.f32.mrf.mxu0
      %v2537 = vpop.f32.mrf.mxu0
      %v2538 = vadd.f32 0.0, %v2537
      %v2539 = vpop.f32.mrf.mxu0
      %2540 = vmatprep.mubr.bf16.mxu0 %v2308
      %2541 = vmatmul.mubr.bf16.gmra.mxu0 %v2190
      %v2542 = vpop.f32.mrf.mxu0
      %v2543 = vadd.f32 0.0, %v2542
      %v2544 = vpop.f32.mrf.mxu0
      %v2545 = vpop.f32.mrf.mxu0
      %v2546 = vadd.f32 0.0, %v2545
      %v2547 = vpop.f32.mrf.mxu0
      %2548 = vmatprep.mubr.bf16.mxu0 %v2311
      %2549 = vmatmul.mubr.bf16.gmra.mxu0 %v2192
      %v2550 = vpop.f32.mrf.mxu0
      %v2551 = vadd.f32 0.0, %v2550
      %v2552 = vpop.f32.mrf.mxu0
      %v2553 = vpop.f32.mrf.mxu0
      %v2554 = vadd.f32 0.0, %v2553
      %v2555 = vpop.f32.mrf.mxu0
      %2556 = vmatprep.mubr.bf16.mxu0 %v2314
      %2557 = vmatmul.mubr.bf16.gmra.mxu0 %v2194
      %v2558 = vpop.f32.mrf.mxu0
      %v2559 = vadd.f32 0.0, %v2558
      %v2560 = vpop.f32.mrf.mxu0
      %v2561 = vpop.f32.mrf.mxu0
      %v2562 = vadd.f32 0.0, %v2561
      %v2563 = vpop.f32.mrf.mxu0
      %2564 = vmatprep.mubr.bf16.mxu0 %v2317
      %2565 = vmatmul.mubr.bf16.gmra.mxu0 %v2196
      %v2566 = vpop.f32.mrf.mxu0
      %v2567 = vadd.f32 0.0, %v2566
      %v2568 = vpop.f32.mrf.mxu0
      %v2569 = vpop.f32.mrf.mxu0
      %v2570 = vadd.f32 0.0, %v2569
      %v2571 = vpop.f32.mrf.mxu0
      %2572 = vmatprep.mubr.bf16.mxu0 %v2320
      %2573 = vmatmul.mubr.bf16.gmra.mxu0 %v2198
      %v2574 = vpop.f32.mrf.mxu0
      %v2575 = vadd.f32 0.0, %v2574
      %v2576 = vpop.f32.mrf.mxu0
      %v2577 = vpop.f32.mrf.mxu0
      %v2578 = vadd.f32 0.0, %v2577
      %v2579 = vpop.f32.mrf.mxu0
      %2580 = vmatprep.mubr.bf16.mxu0 %v2323
      %2581 = vmatmul.mubr.bf16.gmra.mxu0 %v2200
      %v2582 = vpop.f32.mrf.mxu0
      %v2583 = vadd.f32 0.0, %v2582
      %v2584 = vpop.f32.mrf.mxu0
      %v2585 = vpop.f32.mrf.mxu0
      %v2586 = vadd.f32 0.0, %v2585
      %v2587 = vpop.f32.mrf.mxu0
      %2588 = vmatprep.mubr.bf16.mxu0 %v2326
      %2589 = vmatmul.mubr.bf16.gmra.mxu0 %v2202
      %v2590 = vpop.f32.mrf.mxu0
      %v2591 = vadd.f32 0.0, %v2590
      %v2592 = vpop.f32.mrf.mxu0
      %v2593 = vpop.f32.mrf.mxu0
      %v2594 = vadd.f32 0.0, %v2593
      %v2595 = vpop.f32.mrf.mxu0
      %2596 = vmatprep.mubr.bf16.mxu0 %v2329
      %2597 = vmatmul.mubr.bf16.gmra.mxu0 %v2204
      %v2598 = vpop.f32.mrf.mxu0
      %v2599 = vadd.f32 0.0, %v2598
      %v2600 = vpop.f32.mrf.mxu0
      %v2601 = vpop.f32.mrf.mxu0
      %v2602 = vadd.f32 0.0, %v2601
      %v2603 = vpop.f32.mrf.mxu0
      %2604 = vmatprep.mubr.bf16.mxu0 %v2332
      %2605 = vmatmul.mubr.bf16.gmra.mxu0 %v2206
      %v2606 = vpop.f32.mrf.mxu0
      %v2607 = vadd.f32 0.0, %v2606
      %v2608 = vpop.f32.mrf.mxu0
      %v2609 = vpop.f32.mrf.mxu0
      %v2610 = vadd.f32 0.0, %v2609
      %v2611 = vpop.f32.mrf.mxu0
      %2612 = vmatprep.mubr.bf16.mxu0 %v2335
      %2613 = vmatmul.mubr.bf16.gmra.mxu0 %v2208
      %v2614 = vpop.f32.mrf.mxu0
      %v2615 = vadd.f32 0.0, %v2614
      %v2616 = vpop.f32.mrf.mxu0
      %v2617 = vpop.f32.mrf.mxu0
      %v2618 = vadd.f32 0.0, %v2617
      %v2619 = vpop.f32.mrf.mxu0
      %2620 = vmatprep.mubr.bf16.mxu0 %v2338
      %2621 = vmatmul.mubr.bf16.gmra.mxu0 %v2210
      %v2622 = vpop.f32.mrf.mxu0
      %v2623 = vadd.f32 0.0, %v2622
      %v2624 = vpop.f32.mrf.mxu0
      %v2625 = vpop.f32.mrf.mxu0
      %v2626 = vadd.f32 0.0, %v2625
      %v2627 = vpop.f32.mrf.mxu0
      %2628 = vdwg.mxu0
      %v2629 = vadd.f32 %v1638, %v2375
      %v2630 = vadd.f32 %v1641, %v2378
      %v2631 = vadd.f32 %v1646, %v2383
      %v2632 = vadd.f32 %v1649, %v2386
      %v2633 = vadd.f32 %v1654, %v2391
      %v2634 = vadd.f32 %v1657, %v2394
      %v2635 = vadd.f32 %v1662, %v2399
      %v2636 = vadd.f32 %v1665, %v2402
      %v2637 = vadd.f32 %v1670, %v2407
      %v2638 = vadd.f32 %v1673, %v2410
      %v2639 = vadd.f32 %v1678, %v2415
      %v2640 = vadd.f32 %v1681, %v2418
      %v2641 = vadd.f32 %v1686, %v2423
      %v2642 = vadd.f32 %v1689, %v2426
      %v2643 = vadd.f32 %v1694, %v2431
      %v2644 = vadd.f32 %v1697, %v2434
      %v2645 = vadd.f32 %v1702, %v2439
      %v2646 = vadd.f32 %v1705, %v2442
      %v2647 = vadd.f32 %v1710, %v2447
      %v2648 = vadd.f32 %v1713, %v2450
      %v2649 = vadd.f32 %v1718, %v2455
      %v2650 = vadd.f32 %v1721, %v2458
      %v2651 = vadd.f32 %v1726, %v2463
      %v2652 = vadd.f32 %v1729, %v2466
      %v2653 = vadd.f32 %v1734, %v2471
      %v2654 = vadd.f32 %v1737, %v2474
      %v2655 = vadd.f32 %v1742, %v2479
      %v2656 = vadd.f32 %v1745, %v2482
      %v2657 = vadd.f32 %v1750, %v2487
      %v2658 = vadd.f32 %v1753, %v2490
      %v2659 = vadd.f32 %v1758, %v2495
      %v2660 = vadd.f32 %v1761, %v2498
      %v2661 = vadd.f32 %v1766, %v2503
      %v2662 = vadd.f32 %v1769, %v2506
      %v2663 = vadd.f32 %v1774, %v2511
      %v2664 = vadd.f32 %v1777, %v2514
      %v2665 = vadd.f32 %v1782, %v2519
      %v2666 = vadd.f32 %v1785, %v2522
      %v2667 = vadd.f32 %v1790, %v2527
      %v2668 = vadd.f32 %v1793, %v2530
      %v2669 = vadd.f32 %v1798, %v2535
      %v2670 = vadd.f32 %v1801, %v2538
      %v2671 = vadd.f32 %v1806, %v2543
      %v2672 = vadd.f32 %v1809, %v2546
      %v2673 = vadd.f32 %v1814, %v2551
      %v2674 = vadd.f32 %v1817, %v2554
      %v2675 = vadd.f32 %v1822, %v2559
      %v2676 = vadd.f32 %v1825, %v2562
      %v2677 = vadd.f32 %v1830, %v2567
      %v2678 = vadd.f32 %v1833, %v2570
      %v2679 = vadd.f32 %v1838, %v2575
      %v2680 = vadd.f32 %v1841, %v2578
      %v2681 = vadd.f32 %v1846, %v2583
      %v2682 = vadd.f32 %v1849, %v2586
      %v2683 = vadd.f32 %v1854, %v2591
      %v2684 = vadd.f32 %v1857, %v2594
      %v2685 = vadd.f32 %v1862, %v2599
      %v2686 = vadd.f32 %v1865, %v2602
      %v2687 = vadd.f32 %v1870, %v2607
      %v2688 = vadd.f32 %v1873, %v2610
      %v2689 = vadd.f32 %v1878, %v2615
      %v2690 = vadd.f32 %v1881, %v2618
      %v2691 = vadd.f32 %v1886, %v2623
      %v2692 = vadd.f32 %v1889, %v2626
      %v2693 = vld [vmem:[%s325] sm:$0xff]
      %v2694 = vld [vmem:[%s325 + $0x8] sm:$0xff]
      %v2695 = vld [vmem:[%s325 + $0x10] sm:$0xff]
      %v2696 = vld [vmem:[%s325 + $0x18] sm:$0xff]
      %v2697 = vld [vmem:[%s325 + $0x20] sm:$0xff]
      %v2698 = vld [vmem:[%s325 + $0x28] sm:$0xff]
      %v2699 = vld [vmem:[%s325 + $0x30] sm:$0xff]
      %v2700 = vld [vmem:[%s325 + $0x38] sm:$0xff]
      %v2701 = vld [vmem:[%s325 + $0x40] sm:$0xff]
      %v2702 = vld [vmem:[%s325 + $0x48] sm:$0xff]
      %v2703 = vld [vmem:[%s325 + $0x50] sm:$0xff]
      %v2704 = vld [vmem:[%s325 + $0x58] sm:$0xff]
      %v2705 = vld [vmem:[%s325 + $0x60] sm:$0xff]
      %v2706 = vld [vmem:[%s325 + $0x68] sm:$0xff]
      %v2707 = vld [vmem:[%s325 + $0x70] sm:$0xff]
      %v2708 = vld [vmem:[%s325 + $0x78] sm:$0xff]
      %v2709 = vld [vmem:[%s325 + $0x80] sm:$0xff]
      %v2710 = vld [vmem:[%s325 + $0x88] sm:$0xff]
      %v2711 = vld [vmem:[%s325 + $0x90] sm:$0xff]
      %v2712 = vld [vmem:[%s325 + $0x98] sm:$0xff]
      %v2713 = vld [vmem:[%s325 + $0xa0] sm:$0xff]
      %v2714 = vld [vmem:[%s325 + $0xa8] sm:$0xff]
      %v2715 = vld [vmem:[%s325 + $0xb0] sm:$0xff]
      %v2716 = vld [vmem:[%s325 + $0xb8] sm:$0xff]
      %v2717 = vld [vmem:[%s325 + $0xc0] sm:$0xff]
      %v2718 = vld [vmem:[%s325 + $0xc8] sm:$0xff]
      %v2719 = vld [vmem:[%s325 + $0xd0] sm:$0xff]
      %v2720 = vld [vmem:[%s325 + $0xd8] sm:$0xff]
      %v2721 = vld [vmem:[%s325 + $0xe0] sm:$0xff]
      %v2722 = vld [vmem:[%s325 + $0xe8] sm:$0xff]
      %v2723 = vld [vmem:[%s325 + $0xf0] sm:$0xff]
      %v2724 = vld [vmem:[%s325 + $0xf8] sm:$0xff]
      %v2725 = vld [vmem:[%s325 + $0x100] sm:$0xff]
      %v2726 = vld [vmem:[%s325 + $0x108] sm:$0xff]
      %v2727 = vld [vmem:[%s325 + $0x110] sm:$0xff]
      %v2728 = vld [vmem:[%s325 + $0x118] sm:$0xff]
      %v2729 = vld [vmem:[%s325 + $0x120] sm:$0xff]
      %v2730 = vld [vmem:[%s325 + $0x128] sm:$0xff]
      %v2731 = vld [vmem:[%s325 + $0x130] sm:$0xff]
      %v2732 = vld [vmem:[%s325 + $0x138] sm:$0xff]
      %v2733 = vld [vmem:[%s325 + $0x140] sm:$0xff]
      %v2734 = vld [vmem:[%s325 + $0x148] sm:$0xff]
      %v2735 = vld [vmem:[%s325 + $0x150] sm:$0xff]
      %v2736 = vld [vmem:[%s325 + $0x158] sm:$0xff]
      %v2737 = vld [vmem:[%s325 + $0x160] sm:$0xff]
      %v2738 = vld [vmem:[%s325 + $0x168] sm:$0xff]
      %v2739 = vld [vmem:[%s325 + $0x170] sm:$0xff]
      %v2740 = vld [vmem:[%s325 + $0x178] sm:$0xff]
      %v2741 = vld [vmem:[%s325 + $0x180] sm:$0xff]
      %v2742 = vld [vmem:[%s325 + $0x188] sm:$0xff]
      %v2743 = vld [vmem:[%s325 + $0x190] sm:$0xff]
      %v2744 = vld [vmem:[%s325 + $0x198] sm:$0xff]
      %v2745 = vld [vmem:[%s325 + $0x1a0] sm:$0xff]
      %v2746 = vld [vmem:[%s325 + $0x1a8] sm:$0xff]
      %v2747 = vld [vmem:[%s325 + $0x1b0] sm:$0xff]
      %v2748 = vld [vmem:[%s325 + $0x1b8] sm:$0xff]
      %v2749 = vld [vmem:[%s325 + $0x1c0] sm:$0xff]
      %v2750 = vld [vmem:[%s325 + $0x1c8] sm:$0xff]
      %v2751 = vld [vmem:[%s325 + $0x1d0] sm:$0xff]
      %v2752 = vld [vmem:[%s325 + $0x1d8] sm:$0xff]
      %v2753 = vld [vmem:[%s325 + $0x1e0] sm:$0xff]
      %v2754 = vld [vmem:[%s325 + $0x1e8] sm:$0xff]
      %v2755 = vld [vmem:[%s325 + $0x1f0] sm:$0xff]
      %v2756 = vld [vmem:[%s325 + $0x1f8] sm:$0xff]
      %v2821 = vunpack.c.l.b16 %v2693
      %v2822 = vunpack.c.h.b16 %v2693
      %v2823 = vunpack.c.l.b16 %v2694
      %v2824 = vunpack.c.h.b16 %v2694
      %v2825 = vunpack.c.l.b16 %v2695
      %v2826 = vunpack.c.h.b16 %v2695
      %v2827 = vunpack.c.l.b16 %v2696
      %v2828 = vunpack.c.h.b16 %v2696
      %v2829 = vunpack.c.l.b16 %v2697
      %v2830 = vunpack.c.h.b16 %v2697
      %v2831 = vunpack.c.l.b16 %v2698
      %v2832 = vunpack.c.h.b16 %v2698
      %v2833 = vunpack.c.l.b16 %v2699
      %v2834 = vunpack.c.h.b16 %v2699
      %v2835 = vunpack.c.l.b16 %v2700
      %v2836 = vunpack.c.h.b16 %v2700
      %v2837 = vunpack.c.l.b16 %v2701
      %v2838 = vunpack.c.h.b16 %v2701
      %v2839 = vunpack.c.l.b16 %v2702
      %v2840 = vunpack.c.h.b16 %v2702
      %v2841 = vunpack.c.l.b16 %v2703
      %v2842 = vunpack.c.h.b16 %v2703
      %v2843 = vunpack.c.l.b16 %v2704
      %v2844 = vunpack.c.h.b16 %v2704
      %v2845 = vunpack.c.l.b16 %v2705
      %v2846 = vunpack.c.h.b16 %v2705
      %v2847 = vunpack.c.l.b16 %v2706
      %v2848 = vunpack.c.h.b16 %v2706
      %v2849 = vunpack.c.l.b16 %v2707
      %v2850 = vunpack.c.h.b16 %v2707
      %v2851 = vunpack.c.l.b16 %v2708
      %v2852 = vunpack.c.h.b16 %v2708
      %v2853 = vunpack.c.l.b16 %v2709
      %v2854 = vunpack.c.h.b16 %v2709
      %v2855 = vunpack.c.l.b16 %v2710
      %v2856 = vunpack.c.h.b16 %v2710
      %v2857 = vunpack.c.l.b16 %v2711
      %v2858 = vunpack.c.h.b16 %v2711
      %v2859 = vunpack.c.l.b16 %v2712
      %v2860 = vunpack.c.h.b16 %v2712
      %v2861 = vunpack.c.l.b16 %v2713
      %v2862 = vunpack.c.h.b16 %v2713
      %v2863 = vunpack.c.l.b16 %v2714
      %v2864 = vunpack.c.h.b16 %v2714
      %v2865 = vunpack.c.l.b16 %v2715
      %v2866 = vunpack.c.h.b16 %v2715
      %v2867 = vunpack.c.l.b16 %v2716
      %v2868 = vunpack.c.h.b16 %v2716
      %v2869 = vunpack.c.l.b16 %v2717
      %v2870 = vunpack.c.h.b16 %v2717
      %v2871 = vunpack.c.l.b16 %v2718
      %v2872 = vunpack.c.h.b16 %v2718
      %v2873 = vunpack.c.l.b16 %v2719
      %v2874 = vunpack.c.h.b16 %v2719
      %v2875 = vunpack.c.l.b16 %v2720
      %v2876 = vunpack.c.h.b16 %v2720
      %v2877 = vunpack.c.l.b16 %v2721
      %v2878 = vunpack.c.h.b16 %v2721
      %v2879 = vunpack.c.l.b16 %v2722
      %v2880 = vunpack.c.h.b16 %v2722
      %v2881 = vunpack.c.l.b16 %v2723
      %v2882 = vunpack.c.h.b16 %v2723
      %v2883 = vunpack.c.l.b16 %v2724
      %v2884 = vunpack.c.h.b16 %v2724
      %v2885 = vunpack.c.l.b16 %v2725
      %v2886 = vunpack.c.h.b16 %v2725
      %v2887 = vunpack.c.l.b16 %v2726
      %v2888 = vunpack.c.h.b16 %v2726
      %v2889 = vunpack.c.l.b16 %v2727
      %v2890 = vunpack.c.h.b16 %v2727
      %v2891 = vunpack.c.l.b16 %v2728
      %v2892 = vunpack.c.h.b16 %v2728
      %v2893 = vunpack.c.l.b16 %v2729
      %v2894 = vunpack.c.h.b16 %v2729
      %v2895 = vunpack.c.l.b16 %v2730
      %v2896 = vunpack.c.h.b16 %v2730
      %v2897 = vunpack.c.l.b16 %v2731
      %v2898 = vunpack.c.h.b16 %v2731
      %v2899 = vunpack.c.l.b16 %v2732
      %v2900 = vunpack.c.h.b16 %v2732
      %v2901 = vunpack.c.l.b16 %v2733
      %v2902 = vunpack.c.h.b16 %v2733
      %v2903 = vunpack.c.l.b16 %v2734
      %v2904 = vunpack.c.h.b16 %v2734
      %v2905 = vunpack.c.l.b16 %v2735
      %v2906 = vunpack.c.h.b16 %v2735
      %v2907 = vunpack.c.l.b16 %v2736
      %v2908 = vunpack.c.h.b16 %v2736
      %v2909 = vunpack.c.l.b16 %v2737
      %v2910 = vunpack.c.h.b16 %v2737
      %v2911 = vunpack.c.l.b16 %v2738
      %v2912 = vunpack.c.h.b16 %v2738
      %v2913 = vunpack.c.l.b16 %v2739
      %v2914 = vunpack.c.h.b16 %v2739
      %v2915 = vunpack.c.l.b16 %v2740
      %v2916 = vunpack.c.h.b16 %v2740
      %v2917 = vunpack.c.l.b16 %v2741
      %v2918 = vunpack.c.h.b16 %v2741
      %v2919 = vunpack.c.l.b16 %v2742
      %v2920 = vunpack.c.h.b16 %v2742
      %v2921 = vunpack.c.l.b16 %v2743
      %v2922 = vunpack.c.h.b16 %v2743
      %v2923 = vunpack.c.l.b16 %v2744
      %v2924 = vunpack.c.h.b16 %v2744
      %v2925 = vunpack.c.l.b16 %v2745
      %v2926 = vunpack.c.h.b16 %v2745
      %v2927 = vunpack.c.l.b16 %v2746
      %v2928 = vunpack.c.h.b16 %v2746
      %v2929 = vunpack.c.l.b16 %v2747
      %v2930 = vunpack.c.h.b16 %v2747
      %v2931 = vunpack.c.l.b16 %v2748
      %v2932 = vunpack.c.h.b16 %v2748
      %v2933 = vunpack.c.l.b16 %v2749
      %v2934 = vunpack.c.h.b16 %v2749
      %v2935 = vunpack.c.l.b16 %v2750
      %v2936 = vunpack.c.h.b16 %v2750
      %v2937 = vunpack.c.l.b16 %v2751
      %v2938 = vunpack.c.h.b16 %v2751
      %v2939 = vunpack.c.l.b16 %v2752
      %v2940 = vunpack.c.h.b16 %v2752
      %v2941 = vunpack.c.l.b16 %v2753
      %v2942 = vunpack.c.h.b16 %v2753
      %v2943 = vunpack.c.l.b16 %v2754
      %v2944 = vunpack.c.h.b16 %v2754
      %v2945 = vunpack.c.l.b16 %v2755
      %v2946 = vunpack.c.h.b16 %v2755
      %v2947 = vunpack.c.l.b16 %v2756
      %v2948 = vunpack.c.h.b16 %v2756
      %v2949 = vpack.c.b16 %v2823, %v2821
      %v2950 = vpack.c.b16 %v2824, %v2822
      %v2951 = vpack.c.b16 %v2827, %v2825
      %v2952 = vpack.c.b16 %v2828, %v2826
      %v2953 = vpack.c.b16 %v2831, %v2829
      %v2954 = vpack.c.b16 %v2832, %v2830
      %v2955 = vpack.c.b16 %v2835, %v2833
      %v2956 = vpack.c.b16 %v2836, %v2834
      %v2957 = vpack.c.b16 %v2839, %v2837
      %v2958 = vpack.c.b16 %v2840, %v2838
      %v2959 = vpack.c.b16 %v2843, %v2841
      %v2960 = vpack.c.b16 %v2844, %v2842
      %v2961 = vpack.c.b16 %v2847, %v2845
      %v2962 = vpack.c.b16 %v2848, %v2846
      %v2963 = vpack.c.b16 %v2851, %v2849
      %v2964 = vpack.c.b16 %v2852, %v2850
      %v2965 = vpack.c.b16 %v2855, %v2853
      %v2966 = vpack.c.b16 %v2856, %v2854
      %v2967 = vpack.c.b16 %v2859, %v2857
      %v2968 = vpack.c.b16 %v2860, %v2858
      %v2969 = vpack.c.b16 %v2863, %v2861
      %v2970 = vpack.c.b16 %v2864, %v2862
      %v2971 = vpack.c.b16 %v2867, %v2865
      %v2972 = vpack.c.b16 %v2868, %v2866
      %v2973 = vpack.c.b16 %v2871, %v2869
      %v2974 = vpack.c.b16 %v2872, %v2870
      %v2975 = vpack.c.b16 %v2875, %v2873
      %v2976 = vpack.c.b16 %v2876, %v2874
      %v2977 = vpack.c.b16 %v2879, %v2877
      %v2978 = vpack.c.b16 %v2880, %v2878
      %v2979 = vpack.c.b16 %v2883, %v2881
      %v2980 = vpack.c.b16 %v2884, %v2882
      %v2981 = vpack.c.b16 %v2887, %v2885
      %v2982 = vpack.c.b16 %v2888, %v2886
      %v2983 = vpack.c.b16 %v2891, %v2889
      %v2984 = vpack.c.b16 %v2892, %v2890
      %v2985 = vpack.c.b16 %v2895, %v2893
      %v2986 = vpack.c.b16 %v2896, %v2894
      %v2987 = vpack.c.b16 %v2899, %v2897
      %v2988 = vpack.c.b16 %v2900, %v2898
      %v2989 = vpack.c.b16 %v2903, %v2901
      %v2990 = vpack.c.b16 %v2904, %v2902
      %v2991 = vpack.c.b16 %v2907, %v2905
      %v2992 = vpack.c.b16 %v2908, %v2906
      %v2993 = vpack.c.b16 %v2911, %v2909
      %v2994 = vpack.c.b16 %v2912, %v2910
      %v2995 = vpack.c.b16 %v2915, %v2913
      %v2996 = vpack.c.b16 %v2916, %v2914
      %v2997 = vpack.c.b16 %v2919, %v2917
      %v2998 = vpack.c.b16 %v2920, %v2918
      %v2999 = vpack.c.b16 %v2923, %v2921
      %v3000 = vpack.c.b16 %v2924, %v2922
      %v3001 = vpack.c.b16 %v2927, %v2925
      %v3002 = vpack.c.b16 %v2928, %v2926
      %v3003 = vpack.c.b16 %v2931, %v2929
      %v3004 = vpack.c.b16 %v2932, %v2930
      %v3005 = vpack.c.b16 %v2935, %v2933
      %v3006 = vpack.c.b16 %v2936, %v2934
      %v3007 = vpack.c.b16 %v2939, %v2937
      %v3008 = vpack.c.b16 %v2940, %v2938
      %v3009 = vpack.c.b16 %v2943, %v2941
      %v3010 = vpack.c.b16 %v2944, %v2942
      %v3011 = vpack.c.b16 %v2947, %v2945
      %v3012 = vpack.c.b16 %v2948, %v2946
      %v3046 = vsel %vm826, %v2950, 0
      %v3049 = vsel %vm826, %v2952, 0
      %v3052 = vsel %vm826, %v2954, 0
      %v3055 = vsel %vm826, %v2956, 0
      %v3058 = vsel %vm826, %v2958, 0
      %v3061 = vsel %vm826, %v2960, 0
      %v3064 = vsel %vm826, %v2962, 0
      %v3067 = vsel %vm826, %v2964, 0
      %v3070 = vsel %vm826, %v2966, 0
      %v3073 = vsel %vm826, %v2968, 0
      %v3076 = vsel %vm826, %v2970, 0
      %v3079 = vsel %vm826, %v2972, 0
      %v3082 = vsel %vm826, %v2974, 0
      %v3085 = vsel %vm826, %v2976, 0
      %v3088 = vsel %vm826, %v2978, 0
      %v3091 = vsel %vm826, %v2980, 0
      %v3094 = vsel %vm826, %v2982, 0
      %v3097 = vsel %vm826, %v2984, 0
      %v3100 = vsel %vm826, %v2986, 0
      %v3103 = vsel %vm826, %v2988, 0
      %v3106 = vsel %vm826, %v2990, 0
      %v3109 = vsel %vm826, %v2992, 0
      %v3112 = vsel %vm826, %v2994, 0
      %v3115 = vsel %vm826, %v2996, 0
      %v3118 = vsel %vm826, %v2998, 0
      %v3121 = vsel %vm826, %v3000, 0
      %v3124 = vsel %vm826, %v3002, 0
      %v3127 = vsel %vm826, %v3004, 0
      %v3130 = vsel %vm826, %v3006, 0
      %v3133 = vsel %vm826, %v3008, 0
      %v3136 = vsel %vm826, %v3010, 0
      %v3139 = vsel %vm826, %v3012, 0
      %3141 = vmatprep.subr.bf16.mxu0 0
      %3142 = vmatpush1.bf16.msra.mxu0 %v814
      %3143 = vmatprep.subr.bf16.mxu0 0
      %3144 = vmatpush1.bf16.msra.mxu0 %v813
      %3145 = vmatprep.subr.bf16.mxu0 0
      %3146 = vmatpush1.bf16.msra.mxu0 %v812
      %3147 = vmatprep.subr.bf16.mxu0 0
      %3148 = vmatpush1.bf16.msra.mxu0 %v811
      %3149 = vmatprep.subr.bf16.mxu0 0
      %3150 = vmatpush1.bf16.msra.mxu0 %v810
      %3151 = vmatprep.subr.bf16.mxu0 0
      %3152 = vmatpush1.bf16.msra.mxu0 %v809
      %3153 = vmatprep.subr.bf16.mxu0 0
      %3154 = vmatpush1.bf16.msra.mxu0 %v808
      %3155 = vmatprep.subr.bf16.mxu0 0
      %3156 = vmatpush1.bf16.msra.mxu0 %v807
      %3157 = vmatprep.subr.bf16.mxu0 0
      %3158 = vmatpush2.bf16.msra.mxu0 0
      %3159 = vmatprep.subr.bf16.mxu0 0
      %3160 = vmatpush2.bf16.msra.mxu0 0
      %3161 = vmatprep.subr.bf16.mxu0 0
      %3162 = vmatpush2.bf16.msra.mxu0 0
      %3163 = vmatprep.subr.bf16.mxu0 0
      %3164 = vmatpush2.bf16.msra.mxu0 0
      %3165 = vmatprep.subr.bf16.mxu0 0
      %3166 = vmatpush2.bf16.msra.mxu0 0
      %3167 = vmatprep.subr.bf16.mxu0 0
      %3168 = vmatpush2.bf16.msra.mxu0 0
      %3169 = vmatprep.subr.bf16.mxu0 0
      %3170 = vmatpush2.bf16.msra.mxu0 %v928
      %3171 = vmatprep.subr.bf16.mxu0 0
      %3172 = vmatpush2.bf16.msra.mxu0 %v815
      %3173 = vmatprep.mubr.bf16.mxu0 %v3046
      %3174 = vmatmul.mubr.bf16.gmra.mxu0 %v2949
      %v3175 = vpop.f32.mrf.mxu0
      %v3176 = vadd.f32 0.0, %v3175
      %v3177 = vpop.f32.mrf.mxu0
      %v3178 = vpop.f32.mrf.mxu0
      %v3179 = vadd.f32 0.0, %v3178
      %v3180 = vpop.f32.mrf.mxu0
      %3181 = vmatprep.mubr.bf16.mxu0 %v3049
      %3182 = vmatmul.mubr.bf16.gmra.mxu0 %v2951
      %v3183 = vpop.f32.mrf.mxu0
      %v3184 = vadd.f32 0.0, %v3183
      %v3185 = vpop.f32.mrf.mxu0
      %v3186 = vpop.f32.mrf.mxu0
      %v3187 = vadd.f32 0.0, %v3186
      %v3188 = vpop.f32.mrf.mxu0
      %3189 = vmatprep.mubr.bf16.mxu0 %v3052
      %3190 = vmatmul.mubr.bf16.gmra.mxu0 %v2953
      %v3191 = vpop.f32.mrf.mxu0
      %v3192 = vadd.f32 0.0, %v3191
      %v3193 = vpop.f32.mrf.mxu0
      %v3194 = vpop.f32.mrf.mxu0
      %v3195 = vadd.f32 0.0, %v3194
      %v3196 = vpop.f32.mrf.mxu0
      %3197 = vmatprep.mubr.bf16.mxu0 %v3055
      %3198 = vmatmul.mubr.bf16.gmra.mxu0 %v2955
      %v3199 = vpop.f32.mrf.mxu0
      %v3200 = vadd.f32 0.0, %v3199
      %v3201 = vpop.f32.mrf.mxu0
      %v3202 = vpop.f32.mrf.mxu0
      %v3203 = vadd.f32 0.0, %v3202
      %v3204 = vpop.f32.mrf.mxu0
      %3205 = vmatprep.mubr.bf16.mxu0 %v3058
      %3206 = vmatmul.mubr.bf16.gmra.mxu0 %v2957
      %v3207 = vpop.f32.mrf.mxu0
      %v3208 = vadd.f32 0.0, %v3207
      %v3209 = vpop.f32.mrf.mxu0
      %v3210 = vpop.f32.mrf.mxu0
      %v3211 = vadd.f32 0.0, %v3210
      %v3212 = vpop.f32.mrf.mxu0
      %3213 = vmatprep.mubr.bf16.mxu0 %v3061
      %3214 = vmatmul.mubr.bf16.gmra.mxu0 %v2959
      %v3215 = vpop.f32.mrf.mxu0
      %v3216 = vadd.f32 0.0, %v3215
      %v3217 = vpop.f32.mrf.mxu0
      %v3218 = vpop.f32.mrf.mxu0
      %v3219 = vadd.f32 0.0, %v3218
      %v3220 = vpop.f32.mrf.mxu0
      %3221 = vmatprep.mubr.bf16.mxu0 %v3064
      %3222 = vmatmul.mubr.bf16.gmra.mxu0 %v2961
      %v3223 = vpop.f32.mrf.mxu0
      %v3224 = vadd.f32 0.0, %v3223
      %v3225 = vpop.f32.mrf.mxu0
      %v3226 = vpop.f32.mrf.mxu0
      %v3227 = vadd.f32 0.0, %v3226
      %v3228 = vpop.f32.mrf.mxu0
      %3229 = vmatprep.mubr.bf16.mxu0 %v3067
      %3230 = vmatmul.mubr.bf16.gmra.mxu0 %v2963
      %v3231 = vpop.f32.mrf.mxu0
      %v3232 = vadd.f32 0.0, %v3231
      %v3233 = vpop.f32.mrf.mxu0
      %v3234 = vpop.f32.mrf.mxu0
      %v3235 = vadd.f32 0.0, %v3234
      %v3236 = vpop.f32.mrf.mxu0
      %3237 = vmatprep.mubr.bf16.mxu0 %v3070
      %3238 = vmatmul.mubr.bf16.gmra.mxu0 %v2965
      %v3239 = vpop.f32.mrf.mxu0
      %v3240 = vadd.f32 0.0, %v3239
      %v3241 = vpop.f32.mrf.mxu0
      %v3242 = vpop.f32.mrf.mxu0
      %v3243 = vadd.f32 0.0, %v3242
      %v3244 = vpop.f32.mrf.mxu0
      %3245 = vmatprep.mubr.bf16.mxu0 %v3073
      %3246 = vmatmul.mubr.bf16.gmra.mxu0 %v2967
      %v3247 = vpop.f32.mrf.mxu0
      %v3248 = vadd.f32 0.0, %v3247
      %v3249 = vpop.f32.mrf.mxu0
      %v3250 = vpop.f32.mrf.mxu0
      %v3251 = vadd.f32 0.0, %v3250
      %v3252 = vpop.f32.mrf.mxu0
      %3253 = vmatprep.mubr.bf16.mxu0 %v3076
      %3254 = vmatmul.mubr.bf16.gmra.mxu0 %v2969
      %v3255 = vpop.f32.mrf.mxu0
      %v3256 = vadd.f32 0.0, %v3255
      %v3257 = vpop.f32.mrf.mxu0
      %v3258 = vpop.f32.mrf.mxu0
      %v3259 = vadd.f32 0.0, %v3258
      %v3260 = vpop.f32.mrf.mxu0
      %3261 = vmatprep.mubr.bf16.mxu0 %v3079
      %3262 = vmatmul.mubr.bf16.gmra.mxu0 %v2971
      %v3263 = vpop.f32.mrf.mxu0
      %v3264 = vadd.f32 0.0, %v3263
      %v3265 = vpop.f32.mrf.mxu0
      %v3266 = vpop.f32.mrf.mxu0
      %v3267 = vadd.f32 0.0, %v3266
      %v3268 = vpop.f32.mrf.mxu0
      %3269 = vmatprep.mubr.bf16.mxu0 %v3082
      %3270 = vmatmul.mubr.bf16.gmra.mxu0 %v2973
      %v3271 = vpop.f32.mrf.mxu0
      %v3272 = vadd.f32 0.0, %v3271
      %v3273 = vpop.f32.mrf.mxu0
      %v3274 = vpop.f32.mrf.mxu0
      %v3275 = vadd.f32 0.0, %v3274
      %v3276 = vpop.f32.mrf.mxu0
      %3277 = vmatprep.mubr.bf16.mxu0 %v3085
      %3278 = vmatmul.mubr.bf16.gmra.mxu0 %v2975
      %v3279 = vpop.f32.mrf.mxu0
      %v3280 = vadd.f32 0.0, %v3279
      %v3281 = vpop.f32.mrf.mxu0
      %v3282 = vpop.f32.mrf.mxu0
      %v3283 = vadd.f32 0.0, %v3282
      %v3284 = vpop.f32.mrf.mxu0
      %3285 = vmatprep.mubr.bf16.mxu0 %v3088
      %3286 = vmatmul.mubr.bf16.gmra.mxu0 %v2977
      %v3287 = vpop.f32.mrf.mxu0
      %v3288 = vadd.f32 0.0, %v3287
      %v3289 = vpop.f32.mrf.mxu0
      %v3290 = vpop.f32.mrf.mxu0
      %v3291 = vadd.f32 0.0, %v3290
      %v3292 = vpop.f32.mrf.mxu0
      %3293 = vmatprep.mubr.bf16.mxu0 %v3091
      %3294 = vmatmul.mubr.bf16.gmra.mxu0 %v2979
      %v3295 = vpop.f32.mrf.mxu0
      %v3296 = vadd.f32 0.0, %v3295
      %v3297 = vpop.f32.mrf.mxu0
      %v3298 = vpop.f32.mrf.mxu0
      %v3299 = vadd.f32 0.0, %v3298
      %v3300 = vpop.f32.mrf.mxu0
      %3301 = vmatprep.mubr.bf16.mxu0 %v3094
      %3302 = vmatmul.mubr.bf16.gmra.mxu0 %v2981
      %v3303 = vpop.f32.mrf.mxu0
      %v3304 = vadd.f32 0.0, %v3303
      %v3305 = vpop.f32.mrf.mxu0
      %v3306 = vpop.f32.mrf.mxu0
      %v3307 = vadd.f32 0.0, %v3306
      %v3308 = vpop.f32.mrf.mxu0
      %3309 = vmatprep.mubr.bf16.mxu0 %v3097
      %3310 = vmatmul.mubr.bf16.gmra.mxu0 %v2983
      %v3311 = vpop.f32.mrf.mxu0
      %v3312 = vadd.f32 0.0, %v3311
      %v3313 = vpop.f32.mrf.mxu0
      %v3314 = vpop.f32.mrf.mxu0
      %v3315 = vadd.f32 0.0, %v3314
      %v3316 = vpop.f32.mrf.mxu0
      %3317 = vmatprep.mubr.bf16.mxu0 %v3100
      %3318 = vmatmul.mubr.bf16.gmra.mxu0 %v2985
      %v3319 = vpop.f32.mrf.mxu0
      %v3320 = vadd.f32 0.0, %v3319
      %v3321 = vpop.f32.mrf.mxu0
      %v3322 = vpop.f32.mrf.mxu0
      %v3323 = vadd.f32 0.0, %v3322
      %v3324 = vpop.f32.mrf.mxu0
      %3325 = vmatprep.mubr.bf16.mxu0 %v3103
      %3326 = vmatmul.mubr.bf16.gmra.mxu0 %v2987
      %v3327 = vpop.f32.mrf.mxu0
      %v3328 = vadd.f32 0.0, %v3327
      %v3329 = vpop.f32.mrf.mxu0
      %v3330 = vpop.f32.mrf.mxu0
      %v3331 = vadd.f32 0.0, %v3330
      %v3332 = vpop.f32.mrf.mxu0
      %3333 = vmatprep.mubr.bf16.mxu0 %v3106
      %3334 = vmatmul.mubr.bf16.gmra.mxu0 %v2989
      %v3335 = vpop.f32.mrf.mxu0
      %v3336 = vadd.f32 0.0, %v3335
      %v3337 = vpop.f32.mrf.mxu0
      %v3338 = vpop.f32.mrf.mxu0
      %v3339 = vadd.f32 0.0, %v3338
      %v3340 = vpop.f32.mrf.mxu0
      %3341 = vmatprep.mubr.bf16.mxu0 %v3109
      %3342 = vmatmul.mubr.bf16.gmra.mxu0 %v2991
      %v3343 = vpop.f32.mrf.mxu0
      %v3344 = vadd.f32 0.0, %v3343
      %v3345 = vpop.f32.mrf.mxu0
      %v3346 = vpop.f32.mrf.mxu0
      %v3347 = vadd.f32 0.0, %v3346
      %v3348 = vpop.f32.mrf.mxu0
      %3349 = vmatprep.mubr.bf16.mxu0 %v3112
      %3350 = vmatmul.mubr.bf16.gmra.mxu0 %v2993
      %v3351 = vpop.f32.mrf.mxu0
      %v3352 = vadd.f32 0.0, %v3351
      %v3353 = vpop.f32.mrf.mxu0
      %v3354 = vpop.f32.mrf.mxu0
      %v3355 = vadd.f32 0.0, %v3354
      %v3356 = vpop.f32.mrf.mxu0
      %3357 = vmatprep.mubr.bf16.mxu0 %v3115
      %3358 = vmatmul.mubr.bf16.gmra.mxu0 %v2995
      %v3359 = vpop.f32.mrf.mxu0
      %v3360 = vadd.f32 0.0, %v3359
      %v3361 = vpop.f32.mrf.mxu0
      %v3362 = vpop.f32.mrf.mxu0
      %v3363 = vadd.f32 0.0, %v3362
      %v3364 = vpop.f32.mrf.mxu0
      %3365 = vmatprep.mubr.bf16.mxu0 %v3118
      %3366 = vmatmul.mubr.bf16.gmra.mxu0 %v2997
      %v3367 = vpop.f32.mrf.mxu0
      %v3368 = vadd.f32 0.0, %v3367
      %v3369 = vpop.f32.mrf.mxu0
      %v3370 = vpop.f32.mrf.mxu0
      %v3371 = vadd.f32 0.0, %v3370
      %v3372 = vpop.f32.mrf.mxu0
      %3373 = vmatprep.mubr.bf16.mxu0 %v3121
      %3374 = vmatmul.mubr.bf16.gmra.mxu0 %v2999
      %v3375 = vpop.f32.mrf.mxu0
      %v3376 = vadd.f32 0.0, %v3375
      %v3377 = vpop.f32.mrf.mxu0
      %v3378 = vpop.f32.mrf.mxu0
      %v3379 = vadd.f32 0.0, %v3378
      %v3380 = vpop.f32.mrf.mxu0
      %3381 = vmatprep.mubr.bf16.mxu0 %v3124
      %3382 = vmatmul.mubr.bf16.gmra.mxu0 %v3001
      %v3383 = vpop.f32.mrf.mxu0
      %v3384 = vadd.f32 0.0, %v3383
      %v3385 = vpop.f32.mrf.mxu0
      %v3386 = vpop.f32.mrf.mxu0
      %v3387 = vadd.f32 0.0, %v3386
      %v3388 = vpop.f32.mrf.mxu0
      %3389 = vmatprep.mubr.bf16.mxu0 %v3127
      %3390 = vmatmul.mubr.bf16.gmra.mxu0 %v3003
      %v3391 = vpop.f32.mrf.mxu0
      %v3392 = vadd.f32 0.0, %v3391
      %v3393 = vpop.f32.mrf.mxu0
      %v3394 = vpop.f32.mrf.mxu0
      %v3395 = vadd.f32 0.0, %v3394
      %v3396 = vpop.f32.mrf.mxu0
      %3397 = vmatprep.mubr.bf16.mxu0 %v3130
      %3398 = vmatmul.mubr.bf16.gmra.mxu0 %v3005
      %v3399 = vpop.f32.mrf.mxu0
      %v3400 = vadd.f32 0.0, %v3399
      %v3401 = vpop.f32.mrf.mxu0
      %v3402 = vpop.f32.mrf.mxu0
      %v3403 = vadd.f32 0.0, %v3402
      %v3404 = vpop.f32.mrf.mxu0
      %3405 = vmatprep.mubr.bf16.mxu0 %v3133
      %3406 = vmatmul.mubr.bf16.gmra.mxu0 %v3007
      %v3407 = vpop.f32.mrf.mxu0
      %v3408 = vadd.f32 0.0, %v3407
      %v3409 = vpop.f32.mrf.mxu0
      %v3410 = vpop.f32.mrf.mxu0
      %v3411 = vadd.f32 0.0, %v3410
      %v3412 = vpop.f32.mrf.mxu0
      %3413 = vmatprep.mubr.bf16.mxu0 %v3136
      %3414 = vmatmul.mubr.bf16.gmra.mxu0 %v3009
      %v3415 = vpop.f32.mrf.mxu0
      %v3416 = vadd.f32 0.0, %v3415
      %v3417 = vpop.f32.mrf.mxu0
      %v3418 = vpop.f32.mrf.mxu0
      %v3419 = vadd.f32 0.0, %v3418
      %v3420 = vpop.f32.mrf.mxu0
      %3421 = vmatprep.mubr.bf16.mxu0 %v3139
      %3422 = vmatmul.mubr.bf16.gmra.mxu0 %v3011
      %v3423 = vpop.f32.mrf.mxu0
      %v3424 = vadd.f32 0.0, %v3423
      %v3425 = vpop.f32.mrf.mxu0
      %v3426 = vpop.f32.mrf.mxu0
      %v3427 = vadd.f32 0.0, %v3426
      %v3428 = vpop.f32.mrf.mxu0
      %3429 = vdwg.mxu0
      %v3430 = vadd.f32 %v2629, %v3176
      %v3431 = vadd.f32 %v2630, %v3179
      %v3432 = vadd.f32 %v2631, %v3184
      %v3433 = vadd.f32 %v2632, %v3187
      %v3434 = vadd.f32 %v2633, %v3192
      %v3435 = vadd.f32 %v2634, %v3195
      %v3436 = vadd.f32 %v2635, %v3200
      %v3437 = vadd.f32 %v2636, %v3203
      %v3438 = vadd.f32 %v2637, %v3208
      %v3439 = vadd.f32 %v2638, %v3211
      %v3440 = vadd.f32 %v2639, %v3216
      %v3441 = vadd.f32 %v2640, %v3219
      %v3442 = vadd.f32 %v2641, %v3224
      %v3443 = vadd.f32 %v2642, %v3227
      %v3444 = vadd.f32 %v2643, %v3232
      %v3445 = vadd.f32 %v2644, %v3235
      %v3446 = vadd.f32 %v2645, %v3240
      %v3447 = vadd.f32 %v2646, %v3243
      %v3448 = vadd.f32 %v2647, %v3248
      %v3449 = vadd.f32 %v2648, %v3251
      %v3450 = vadd.f32 %v2649, %v3256
      %v3451 = vadd.f32 %v2650, %v3259
      %v3452 = vadd.f32 %v2651, %v3264
      %v3453 = vadd.f32 %v2652, %v3267
      %v3454 = vadd.f32 %v2653, %v3272
      %v3455 = vadd.f32 %v2654, %v3275
      %v3456 = vadd.f32 %v2655, %v3280
      %v3457 = vadd.f32 %v2656, %v3283
      %v3458 = vadd.f32 %v2657, %v3288
      %v3459 = vadd.f32 %v2658, %v3291
      %v3460 = vadd.f32 %v2659, %v3296
      %v3461 = vadd.f32 %v2660, %v3299
      %v3462 = vadd.f32 %v2661, %v3304
      %v3463 = vadd.f32 %v2662, %v3307
      %v3464 = vadd.f32 %v2663, %v3312
      %v3465 = vadd.f32 %v2664, %v3315
      %v3466 = vadd.f32 %v2665, %v3320
      %v3467 = vadd.f32 %v2666, %v3323
      %v3468 = vadd.f32 %v2667, %v3328
      %v3469 = vadd.f32 %v2668, %v3331
      %v3470 = vadd.f32 %v2669, %v3336
      %v3471 = vadd.f32 %v2670, %v3339
      %v3472 = vadd.f32 %v2671, %v3344
      %v3473 = vadd.f32 %v2672, %v3347
      %v3474 = vadd.f32 %v2673, %v3352
      %v3475 = vadd.f32 %v2674, %v3355
      %v3476 = vadd.f32 %v2675, %v3360
      %v3477 = vadd.f32 %v2676, %v3363
      %v3478 = vadd.f32 %v2677, %v3368
      %v3479 = vadd.f32 %v2678, %v3371
      %v3480 = vadd.f32 %v2679, %v3376
      %v3481 = vadd.f32 %v2680, %v3379
      %v3482 = vadd.f32 %v2681, %v3384
      %v3483 = vadd.f32 %v2682, %v3387
      %v3484 = vadd.f32 %v2683, %v3392
      %v3485 = vadd.f32 %v2684, %v3395
      %v3486 = vadd.f32 %v2685, %v3400
      %v3487 = vadd.f32 %v2686, %v3403
      %v3488 = vadd.f32 %v2687, %v3408
      %v3489 = vadd.f32 %v2688, %v3411
      %v3490 = vadd.f32 %v2689, %v3416
      %v3491 = vadd.f32 %v2690, %v3419
      %v3492 = vadd.f32 %v2691, %v3424
      %v3493 = vadd.f32 %v2692, %v3427
      %v3494 = vmul.f32 %v3430, 0.25
      %v3495 = vmul.f32 %v3431, 0.25
      %v3496 = vmul.f32 %v3432, 0.25
      %v3497 = vmul.f32 %v3433, 0.25
      %v3498 = vmul.f32 %v3434, 0.25
      %v3499 = vmul.f32 %v3435, 0.25
      %v3500 = vmul.f32 %v3436, 0.25
      %v3501 = vmul.f32 %v3437, 0.25
      %v3502 = vmul.f32 %v3438, 0.25
      %v3503 = vmul.f32 %v3439, 0.25
      %v3504 = vmul.f32 %v3440, 0.25
      %v3505 = vmul.f32 %v3441, 0.25
      %v3506 = vmul.f32 %v3442, 0.25
      %v3507 = vmul.f32 %v3443, 0.25
      %v3508 = vmul.f32 %v3444, 0.25
      %v3509 = vmul.f32 %v3445, 0.25
      %v3510 = vmul.f32 %v3446, 0.25
      %v3511 = vmul.f32 %v3447, 0.25
      %v3512 = vmul.f32 %v3448, 0.25
      %v3513 = vmul.f32 %v3449, 0.25
      %v3514 = vmul.f32 %v3450, 0.25
      %v3515 = vmul.f32 %v3451, 0.25
      %v3516 = vmul.f32 %v3452, 0.25
      %v3517 = vmul.f32 %v3453, 0.25
      %v3518 = vmul.f32 %v3454, 0.25
      %v3519 = vmul.f32 %v3455, 0.25
      %v3520 = vmul.f32 %v3456, 0.25
      %v3521 = vmul.f32 %v3457, 0.25
      %v3522 = vmul.f32 %v3458, 0.25
      %v3523 = vmul.f32 %v3459, 0.25
      %v3524 = vmul.f32 %v3460, 0.25
      %v3525 = vmul.f32 %v3461, 0.25
      %v3526 = vmul.f32 %v3462, 0.25
      %v3527 = vmul.f32 %v3463, 0.25
      %v3528 = vmul.f32 %v3464, 0.25
      %v3529 = vmul.f32 %v3465, 0.25
      %v3530 = vmul.f32 %v3466, 0.25
      %v3531 = vmul.f32 %v3467, 0.25
      %v3532 = vmul.f32 %v3468, 0.25
      %v3533 = vmul.f32 %v3469, 0.25
      %v3534 = vmul.f32 %v3470, 0.25
      %v3535 = vmul.f32 %v3471, 0.25
      %v3536 = vmul.f32 %v3472, 0.25
      %v3537 = vmul.f32 %v3473, 0.25
      %v3538 = vmul.f32 %v3474, 0.25
      %v3539 = vmul.f32 %v3475, 0.25
      %v3540 = vmul.f32 %v3476, 0.25
      %v3541 = vmul.f32 %v3477, 0.25
      %v3542 = vmul.f32 %v3478, 0.25
      %v3543 = vmul.f32 %v3479, 0.25
      %v3544 = vmul.f32 %v3480, 0.25
      %v3545 = vmul.f32 %v3481, 0.25
      %v3546 = vmul.f32 %v3482, 0.25
      %v3547 = vmul.f32 %v3483, 0.25
      %v3548 = vmul.f32 %v3484, 0.25
      %v3549 = vmul.f32 %v3485, 0.25
      %v3550 = vmul.f32 %v3486, 0.25
      %v3551 = vmul.f32 %v3487, 0.25
      %v3552 = vmul.f32 %v3488, 0.25
      %v3553 = vmul.f32 %v3489, 0.25
      %v3554 = vmul.f32 %v3490, 0.25
      %v3555 = vmul.f32 %v3491, 0.25
      %v3556 = vmul.f32 %v3492, 0.25
      %v3557 = vmul.f32 %v3493, 0.25
      %v3558 = vld [vmem:[%s5] sm:$0x1]
      %v3560 = vlaneseq
      %v3561 = vshrl.u32 %v3560, 7
      %v3562 = vsub.s32 0, %v3561
      %v3563 = vrot.slane %v3558, %v3562
      %v3565 = vadd.f32 %v3494, %v3563
      %v3566 = vadd.f32 %v3495, %v3563
      %v3567 = vadd.f32 %v3496, %v3563
      %v3568 = vadd.f32 %v3497, %v3563
      %v3569 = vadd.f32 %v3498, %v3563
      %v3570 = vadd.f32 %v3499, %v3563
      %v3571 = vadd.f32 %v3500, %v3563
      %v3572 = vadd.f32 %v3501, %v3563
      %v3573 = vadd.f32 %v3502, %v3563
      %v3574 = vadd.f32 %v3503, %v3563
      %v3575 = vadd.f32 %v3504, %v3563
      %v3576 = vadd.f32 %v3505, %v3563
      %v3577 = vadd.f32 %v3506, %v3563
      %v3578 = vadd.f32 %v3507, %v3563
      %v3579 = vadd.f32 %v3508, %v3563
      %v3580 = vadd.f32 %v3509, %v3563
      %v3581 = vadd.f32 %v3510, %v3563
      %v3582 = vadd.f32 %v3511, %v3563
      %v3583 = vadd.f32 %v3512, %v3563
      %v3584 = vadd.f32 %v3513, %v3563
      %v3585 = vadd.f32 %v3514, %v3563
      %v3586 = vadd.f32 %v3515, %v3563
      %v3587 = vadd.f32 %v3516, %v3563
      %v3588 = vadd.f32 %v3517, %v3563
      %v3589 = vadd.f32 %v3518, %v3563
      %v3590 = vadd.f32 %v3519, %v3563
      %v3591 = vadd.f32 %v3520, %v3563
      %v3592 = vadd.f32 %v3521, %v3563
      %v3593 = vadd.f32 %v3522, %v3563
      %v3594 = vadd.f32 %v3523, %v3563
      %v3595 = vadd.f32 %v3524, %v3563
      %v3596 = vadd.f32 %v3525, %v3563
      %v3597 = vadd.f32 %v3526, %v3563
      %v3598 = vadd.f32 %v3527, %v3563
      %v3599 = vadd.f32 %v3528, %v3563
      %v3600 = vadd.f32 %v3529, %v3563
      %v3601 = vadd.f32 %v3530, %v3563
      %v3602 = vadd.f32 %v3531, %v3563
      %v3603 = vadd.f32 %v3532, %v3563
      %v3604 = vadd.f32 %v3533, %v3563
      %v3605 = vadd.f32 %v3534, %v3563
      %v3606 = vadd.f32 %v3535, %v3563
      %v3607 = vadd.f32 %v3536, %v3563
      %v3608 = vadd.f32 %v3537, %v3563
      %v3609 = vadd.f32 %v3538, %v3563
      %v3610 = vadd.f32 %v3539, %v3563
      %v3611 = vadd.f32 %v3540, %v3563
      %v3612 = vadd.f32 %v3541, %v3563
      %v3613 = vadd.f32 %v3542, %v3563
      %v3614 = vadd.f32 %v3543, %v3563
      %v3615 = vadd.f32 %v3544, %v3563
      %v3616 = vadd.f32 %v3545, %v3563
      %v3617 = vadd.f32 %v3546, %v3563
      %v3618 = vadd.f32 %v3547, %v3563
      %v3619 = vadd.f32 %v3548, %v3563
      %v3620 = vadd.f32 %v3549, %v3563
      %v3621 = vadd.f32 %v3550, %v3563
      %v3622 = vadd.f32 %v3551, %v3563
      %v3623 = vadd.f32 %v3552, %v3563
      %v3624 = vadd.f32 %v3553, %v3563
      %v3625 = vadd.f32 %v3554, %v3563
      %v3626 = vadd.f32 %v3555, %v3563
      %v3627 = vadd.f32 %v3556, %v3563
      %v3628 = vadd.f32 %v3557, %v3563
      %v3629 = vmax.f32 %v3565, 0.0
      %v3630 = vmax.f32 %v3566, 0.0
      %v3631 = vmax.f32 %v3567, 0.0
      %v3632 = vmax.f32 %v3568, 0.0
      %v3633 = vmax.f32 %v3569, 0.0
      %v3634 = vmax.f32 %v3570, 0.0
      %v3635 = vmax.f32 %v3571, 0.0
      %v3636 = vmax.f32 %v3572, 0.0
      %v3637 = vmax.f32 %v3573, 0.0
      %v3638 = vmax.f32 %v3574, 0.0
      %v3639 = vmax.f32 %v3575, 0.0
      %v3640 = vmax.f32 %v3576, 0.0
      %v3641 = vmax.f32 %v3577, 0.0
      %v3642 = vmax.f32 %v3578, 0.0
      %v3643 = vmax.f32 %v3579, 0.0
      %v3644 = vmax.f32 %v3580, 0.0
      %v3645 = vmax.f32 %v3581, 0.0
      %v3646 = vmax.f32 %v3582, 0.0
      %v3647 = vmax.f32 %v3583, 0.0
      %v3648 = vmax.f32 %v3584, 0.0
      %v3649 = vmax.f32 %v3585, 0.0
      %v3650 = vmax.f32 %v3586, 0.0
      %v3651 = vmax.f32 %v3587, 0.0
      %v3652 = vmax.f32 %v3588, 0.0
      %v3653 = vmax.f32 %v3589, 0.0
      %v3654 = vmax.f32 %v3590, 0.0
      %v3655 = vmax.f32 %v3591, 0.0
      %v3656 = vmax.f32 %v3592, 0.0
      %v3657 = vmax.f32 %v3593, 0.0
      %v3658 = vmax.f32 %v3594, 0.0
      %v3659 = vmax.f32 %v3595, 0.0
      %v3660 = vmax.f32 %v3596, 0.0
      %v3661 = vmax.f32 %v3597, 0.0
      %v3662 = vmax.f32 %v3598, 0.0
      %v3663 = vmax.f32 %v3599, 0.0
      %v3664 = vmax.f32 %v3600, 0.0
      %v3665 = vmax.f32 %v3601, 0.0
      %v3666 = vmax.f32 %v3602, 0.0
      %v3667 = vmax.f32 %v3603, 0.0
      %v3668 = vmax.f32 %v3604, 0.0
      %v3669 = vmax.f32 %v3605, 0.0
      %v3670 = vmax.f32 %v3606, 0.0
      %v3671 = vmax.f32 %v3607, 0.0
      %v3672 = vmax.f32 %v3608, 0.0
      %v3673 = vmax.f32 %v3609, 0.0
      %v3674 = vmax.f32 %v3610, 0.0
      %v3675 = vmax.f32 %v3611, 0.0
      %v3676 = vmax.f32 %v3612, 0.0
      %v3677 = vmax.f32 %v3613, 0.0
      %v3678 = vmax.f32 %v3614, 0.0
      %v3679 = vmax.f32 %v3615, 0.0
      %v3680 = vmax.f32 %v3616, 0.0
      %v3681 = vmax.f32 %v3617, 0.0
      %v3682 = vmax.f32 %v3618, 0.0
      %v3683 = vmax.f32 %v3619, 0.0
      %v3684 = vmax.f32 %v3620, 0.0
      %v3685 = vmax.f32 %v3621, 0.0
      %v3686 = vmax.f32 %v3622, 0.0
      %v3687 = vmax.f32 %v3623, 0.0
      %v3688 = vmax.f32 %v3624, 0.0
      %v3689 = vmax.f32 %v3625, 0.0
      %v3690 = vmax.f32 %v3626, 0.0
      %v3691 = vmax.f32 %v3627, 0.0
      %v3692 = vmax.f32 %v3628, 0.0
      %vm3693 = vcmask 261120
      %3694 = vst.msk [vmem:[%s331] sm:$0xff] %vm3693, %v3629
      %3695 = vst.msk [vmem:[%s331 + $0x8] sm:$0xff] %vm3693, %v3630
      %3696 = vst.msk [vmem:[%s331 + $0x10] sm:$0xff] %vm3693, %v3631
      %3697 = vst.msk [vmem:[%s331 + $0x18] sm:$0xff] %vm3693, %v3632
      %3698 = vst.msk [vmem:[%s331 + $0x20] sm:$0xff] %vm3693, %v3633
      %3699 = vst.msk [vmem:[%s331 + $0x28] sm:$0xff] %vm3693, %v3634
      %3700 = vst.msk [vmem:[%s331 + $0x30] sm:$0xff] %vm3693, %v3635
      %3701 = vst.msk [vmem:[%s331 + $0x38] sm:$0xff] %vm3693, %v3636
      %3702 = vst.msk [vmem:[%s331 + $0x40] sm:$0xff] %vm3693, %v3637
      %3703 = vst.msk [vmem:[%s331 + $0x48] sm:$0xff] %vm3693, %v3638
      %3704 = vst.msk [vmem:[%s331 + $0x50] sm:$0xff] %vm3693, %v3639
      %3705 = vst.msk [vmem:[%s331 + $0x58] sm:$0xff] %vm3693, %v3640
      %3706 = vst.msk [vmem:[%s331 + $0x60] sm:$0xff] %vm3693, %v3641
      %3707 = vst.msk [vmem:[%s331 + $0x68] sm:$0xff] %vm3693, %v3642
      %3708 = vst.msk [vmem:[%s331 + $0x70] sm:$0xff] %vm3693, %v3643
      %3709 = vst.msk [vmem:[%s331 + $0x78] sm:$0xff] %vm3693, %v3644
      %3710 = vst.msk [vmem:[%s331 + $0x80] sm:$0xff] %vm3693, %v3645
      %3711 = vst.msk [vmem:[%s331 + $0x88] sm:$0xff] %vm3693, %v3646
      %3712 = vst.msk [vmem:[%s331 + $0x90] sm:$0xff] %vm3693, %v3647
      %3713 = vst.msk [vmem:[%s331 + $0x98] sm:$0xff] %vm3693, %v3648
      %3714 = vst.msk [vmem:[%s331 + $0xa0] sm:$0xff] %vm3693, %v3649
      %3715 = vst.msk [vmem:[%s331 + $0xa8] sm:$0xff] %vm3693, %v3650
      %3716 = vst.msk [vmem:[%s331 + $0xb0] sm:$0xff] %vm3693, %v3651
      %3717 = vst.msk [vmem:[%s331 + $0xb8] sm:$0xff] %vm3693, %v3652
      %3718 = vst.msk [vmem:[%s331 + $0xc0] sm:$0xff] %vm3693, %v3653
      %3719 = vst.msk [vmem:[%s331 + $0xc8] sm:$0xff] %vm3693, %v3654
      %3720 = vst.msk [vmem:[%s331 + $0xd0] sm:$0xff] %vm3693, %v3655
      %3721 = vst.msk [vmem:[%s331 + $0xd8] sm:$0xff] %vm3693, %v3656
      %3722 = vst.msk [vmem:[%s331 + $0xe0] sm:$0xff] %vm3693, %v3657
      %3723 = vst.msk [vmem:[%s331 + $0xe8] sm:$0xff] %vm3693, %v3658
      %3724 = vst.msk [vmem:[%s331 + $0xf0] sm:$0xff] %vm3693, %v3659
      %3725 = vst.msk [vmem:[%s331 + $0xf8] sm:$0xff] %vm3693, %v3660
      %3726 = vst.msk [vmem:[%s331 + $0x100] sm:$0xff] %vm3693, %v3661
      %3727 = vst.msk [vmem:[%s331 + $0x108] sm:$0xff] %vm3693, %v3662
      %3728 = vst.msk [vmem:[%s331 + $0x110] sm:$0xff] %vm3693, %v3663
      %3729 = vst.msk [vmem:[%s331 + $0x118] sm:$0xff] %vm3693, %v3664
      %3730 = vst.msk [vmem:[%s331 + $0x120] sm:$0xff] %vm3693, %v3665
      %3731 = vst.msk [vmem:[%s331 + $0x128] sm:$0xff] %vm3693, %v3666
      %3732 = vst.msk [vmem:[%s331 + $0x130] sm:$0xff] %vm3693, %v3667
      %3733 = vst.msk [vmem:[%s331 + $0x138] sm:$0xff] %vm3693, %v3668
      %3734 = vst.msk [vmem:[%s331 + $0x140] sm:$0xff] %vm3693, %v3669
      %3735 = vst.msk [vmem:[%s331 + $0x148] sm:$0xff] %vm3693, %v3670
      %3736 = vst.msk [vmem:[%s331 + $0x150] sm:$0xff] %vm3693, %v3671
      %3737 = vst.msk [vmem:[%s331 + $0x158] sm:$0xff] %vm3693, %v3672
      %3738 = vst.msk [vmem:[%s331 + $0x160] sm:$0xff] %vm3693, %v3673
      %3739 = vst.msk [vmem:[%s331 + $0x168] sm:$0xff] %vm3693, %v3674
      %3740 = vst.msk [vmem:[%s331 + $0x170] sm:$0xff] %vm3693, %v3675
      %3741 = vst.msk [vmem:[%s331 + $0x178] sm:$0xff] %vm3693, %v3676
      %3742 = vst.msk [vmem:[%s331 + $0x180] sm:$0xff] %vm3693, %v3677
      %3743 = vst.msk [vmem:[%s331 + $0x188] sm:$0xff] %vm3693, %v3678
      %3744 = vst.msk [vmem:[%s331 + $0x190] sm:$0xff] %vm3693, %v3679
      %3745 = vst.msk [vmem:[%s331 + $0x198] sm:$0xff] %vm3693, %v3680
      %3746 = vst.msk [vmem:[%s331 + $0x1a0] sm:$0xff] %vm3693, %v3681
      %3747 = vst.msk [vmem:[%s331 + $0x1a8] sm:$0xff] %vm3693, %v3682
      %3748 = vst.msk [vmem:[%s331 + $0x1b0] sm:$0xff] %vm3693, %v3683
      %3749 = vst.msk [vmem:[%s331 + $0x1b8] sm:$0xff] %vm3693, %v3684
      %3750 = vst.msk [vmem:[%s331 + $0x1c0] sm:$0xff] %vm3693, %v3685
      %3751 = vst.msk [vmem:[%s331 + $0x1c8] sm:$0xff] %vm3693, %v3686
      %3752 = vst.msk [vmem:[%s331 + $0x1d0] sm:$0xff] %vm3693, %v3687
      %3753 = vst.msk [vmem:[%s331 + $0x1d8] sm:$0xff] %vm3693, %v3688
      %3754 = vst.msk [vmem:[%s331 + $0x1e0] sm:$0xff] %vm3693, %v3689
      %3755 = vst.msk [vmem:[%s331 + $0x1e8] sm:$0xff] %vm3693, %v3690
      %3756 = vst.msk [vmem:[%s331 + $0x1f0] sm:$0xff] %vm3693, %v3691
      %3757 = vst.msk [vmem:[%s331 + $0x1f8] sm:$0xff] %vm3693, %v3692
      %s3758 = smul.u32 64, %s17
      %p3759 = scmp.lt.s32.totalorder %s3758, 127
      %s3760 = scalar_select %p3759, %s3758, 127
      %s3761 = smul.addr %s3760, 8
      %s3762 = scalar_lea.vmem %s6, %s3761
      // Predicated region
      $region45: #{tpu_custom_call.1} parent=43 // pred_check
        %p3763 = pneg %p181
      $region46: #{tpu_custom_call.1} parent=43 // pred_check_branch
        %3765 = sbr.rel (%p3763) target = $region48
      $region47: #{tpu_custom_call.1} parent=43 // pred_region
        %s3766 = smul.u32 64, %s17
      $region48: #{tpu_custom_call.1} parent=43 // pred_fallthru
        _
    $region44: #{tpu_custom_call.1} parent=5 // pred_fallthru
      _
    %p3767 = scmp.le.s32.totalorder 2, %s12
    // Predicated region
    $region49: #{tpu_custom_call.1} parent=5 // pred_check
      %p3768 = pneg %p3767
    $region50: #{tpu_custom_call.1} parent=5 // pred_check_branch
      %3770 = sbr.rel (%p3768) target = $region52
    $region51: #{tpu_custom_call.1} parent=5 // pred_region
      %s3771 = ssub.s32 %s12, 2
      // Predicated region
      $region53: #{tpu_custom_call.1} parent=51 // pred_check
        %p3772 = pneg %p187
      $region54: #{tpu_custom_call.1} parent=51 // pred_check_branch
        %3774 = sbr.rel (%p3772) target = $region56
      $region55: #{tpu_custom_call.1} parent=51 // pred_region
        %s3775 = smul.u32 64, %s18
        %p3776 = scmp.lt.s32.totalorder %s3775, 127
        %s3777 = scalar_select %p3776, %s3775, 127
        %s3778 = smul.addr %s3777, 8
        %s3779 = scalar_lea.vmem %s6, %s3778
      $region56: #{tpu_custom_call.1} parent=51 // pred_fallthru
        _
    $region52: #{tpu_custom_call.1} parent=5 // pred_fallthru
      _
  $region6: #{tpu_custom_call.1} parent=0 // loop_footer
    %s16 = sadd.s32 1, %s12
  $region7: #{tpu_custom_call.1} parent=0 // loop_footer_branch
    %11 = sbr.rel target = $region3
  $region8: #{tpu_custom_call.1} parent=0 // loop_exit
    _

</llo_original>
